<compile_context>
chip_gen: v7x
topology: tpu7x:2x2x1
jax: 0.10.0
libtpu: 0.0.40
codegen_flags: <defaults>
</compile_context>

<pallas_src>
import functools
import math

import numpy as np
import jax
import jax.numpy as jnp
from jax.experimental import pallas as pl
from jax.experimental.pallas import tpu as pltpu


# ----------------------------------------------------------------------------
# Static 3x3 tap table (shifts + boundary masks) for a flattened (H*W,) plane
# ----------------------------------------------------------------------------
def _tap_table(H, W):
    """Returns (shifts, masks) for the 9 conv taps on a row-major H*W plane.

    shifts: tuple of (flat_offset d, lane-roll amount (-d) % (H*W)) per tap.
    masks : (9, 1, H*W) float32; 1.0 where the shifted read stays inside the
            image, 0.0 where the 3x3 window would fall into the zero halo.
    """
    HW = H * W
    r = np.arange(HW) // W
    c = np.arange(HW) % W
    shifts, masks = [], []
    for dh in (-1, 0, 1):
        for dw in (-1, 0, 1):
            d = dh * W + dw
            shifts.append((d, (-d) % HW))
            valid = (r + dh >= 0) & (r + dh < H) & (c + dw >= 0) & (c + dw < W)
            masks.append(valid.astype(np.float32))
    return tuple(shifts), np.stack(masks).reshape(9, 1, HW)


# ----------------------------------------------------------------------------
# Kernel
# ----------------------------------------------------------------------------
def _double_conv_kernel(x_ref, w1_ref, b1_ref, w2_ref, b2_ref, masks_ref,
                        o_ref, *, shifts):
    # x_ref    : (nb, C_in,  HW)  VMEM block (nb images, lane-dense spatial)
    # w*_ref   : (9, C_out, C_in) VMEM per-tap folded conv weights
    # b*_ref   : (C_out, 1)       VMEM folded biases
    # masks_ref: (9, 1, HW)       VMEM 0/1 halo-validity masks
    # o_ref    : (nb, C_out, HW)  VMEM output block
    nb = x_ref.shape[0]
    hw = x_ref.shape[2]

    masks = masks_ref[...]            # (9, 1, HW) f32, hoisted once per step
    w1 = w1_ref[...]                  # (9, C_mid, C_in)
    w2 = w2_ref[...]                  # (9, C_out, C_mid)
    b1 = b1_ref[...]                  # (C_mid, 1)
    b2 = b2_ref[...]                  # (C_out, 1)

    def stage(h, w_taps, bias):
        # h: (n_in, HW) f32 activations; returns ReLU(conv3x3(h) + bias).
        n_out, n_in = w_taps.shape[1], w_taps.shape[2]
        use_mxu = min(n_in, n_out) >= 16   # MXU tier for real UNet widths
        acc = jnp.zeros((n_out, hw), jnp.float32)
        for k, (d, shift) in enumerate(shifts):
            if d == 0:
                win = h                                   # center tap: no halo
            else:
                # XLU lane rotation + mask instead of concat-pad + slice.
                win = pltpu.roll(h, shift, axis=1) * masks[k]   # (n_in, HW)
            wk = w_taps[k]                                # (n_out, n_in)
            if use_mxu:
                acc = acc + jnp.dot(wk, win, preferred_element_type=jnp.float32)
            else:
                # Tiny channel counts: VPU broadcast-FMAs, lane-dense.
                for ic in range(n_in):
                    acc = acc + wk[:, ic:ic + 1] * win[ic:ic + 1, :]
        return jnp.maximum(acc + bias, 0.0)               # folded BN + ReLU

    for b in range(nb):
        h0 = x_ref[b].astype(jnp.float32)                 # (C_in, HW)
        h1 = stage(h0, w1, b1)                            # conv1+BN1+ReLU (values)
        h2 = stage(h1, w2, b2)                            # conv2+BN2+ReLU
        o_ref[b] = h2.astype(o_ref.dtype)                 # unmasked lane-dense vst


# ----------------------------------------------------------------------------
# Wrapper
# ----------------------------------------------------------------------------
def _fold_bn(w, b, gamma, beta, mean, var, eps):
    """Fold inference-mode BatchNorm into the preceding conv."""
    scale = gamma / jnp.sqrt(var + eps)
    w_f = w * scale[:, None, None, None]
    b_f = (b - mean) * scale + beta
    return w_f, b_f


def _pack_taps(w):
    """(C_out, C_in, 3, 3) -> (9, C_out, C_in), tap order matching _tap_table."""
    return jnp.transpose(w, (2, 3, 0, 1)).reshape(9, w.shape[0], w.shape[1])


def _pick_images_per_step(N):
    # Keep >= 2 grid steps when possible (megacore parallelism on v7x) while
    # amortizing the ~0.35 us per-step overhead for larger batches.
    for nb in (4, 2, 1):
        if N % nb == 0 and N // nb >= 2:
            return nb
    return 1


def inconv_pallas(x, params, *, eps=1e-5):
    """Forward pass of `inconv` (NCHW), matching the PyTorch module in eval mode.

    x      : (N, C_in, H, W)
    params : dict with conv1/bn1/conv2/bn2 parameters in PyTorch layouts.
    """
    N, C_in, H, W = x.shape
    HW = H * W

    w1, b1 = _fold_bn(params["w1"], params["b1"], params["g1"], params["beta1"],
                      params["m1"], params["v1"], eps)
    w2, b2 = _fold_bn(params["w2"], params["b2"], params["g2"], params["beta2"],
                      params["m2"], params["v2"], eps)
    C_mid = w1.shape[0]
    C_out = w2.shape[0]

    w1t = _pack_taps(w1).astype(jnp.float32)          # (9, C_mid, C_in)
    w2t = _pack_taps(w2).astype(jnp.float32)          # (9, C_out, C_mid)
    b1c = b1.astype(jnp.float32).reshape(C_mid, 1)
    b2c = b2.astype(jnp.float32).reshape(C_out, 1)

    shifts, masks_np = _tap_table(H, W)
    masks = jnp.asarray(masks_np)                     # (9, 1, HW)

    nb = _pick_images_per_step(N)
    grid = (N // nb,)

    # Lane-dense spatial view: merge (H, W) -> H*W (multiple of 128 for 16x16+).
    x_flat = x.reshape(N, C_in, HW)

    kernel = functools.partial(_double_conv_kernel, shifts=shifts)

    itemsize = jnp.dtype(x.dtype).itemsize
    param_bytes = 4 * (w1t.size + w2t.size + b1c.size + b2c.size + masks.size)
    block_bytes = (2 * nb * (C_in + C_out) * HW * itemsize      # dbl-buffered I/O
                   + 2 * param_bytes                             # resident params
                   + (C_in + 2 * C_mid + 2 * C_out) * HW * 4)    # f32 working set
    vmem_limit = int(min(48 * 1024 * 1024, max(16 * 1024 * 1024, 8 * block_bytes)))

    flops = 2 * N * HW * 9 * (C_in * C_mid + C_mid * C_out)
    bytes_accessed = int((x_flat.size + N * C_out * HW) * itemsize + param_bytes)

    out = pl.pallas_call(
        kernel,
        out_shape=jax.ShapeDtypeStruct((N, C_out, HW), x.dtype),
        grid_spec=pltpu.PrefetchScalarGridSpec(
            num_scalar_prefetch=0,
            grid=grid,
            in_specs=[
                pl.BlockSpec((nb, C_in, HW), lambda n: (n, 0, 0)),
                pl.BlockSpec(w1t.shape, lambda n: (0, 0, 0)),   # VMEM weights
                pl.BlockSpec(b1c.shape, lambda n: (0, 0)),
                pl.BlockSpec(w2t.shape, lambda n: (0, 0, 0)),
                pl.BlockSpec(b2c.shape, lambda n: (0, 0)),
                pl.BlockSpec(masks.shape, lambda n: (0, 0, 0)),
            ],
            out_specs=pl.BlockSpec((nb, C_out, HW), lambda n: (n, 0, 0)),
        ),
        compiler_params=pltpu.CompilerParams(
            dimension_semantics=("parallel",),        # batch steps over v7x TCs
            vmem_limit_bytes=vmem_limit,              # <= 48 MiB: v7x-safe
        ),
        cost_estimate=pl.CostEstimate(
            flops=flops, transcendentals=0, bytes_accessed=bytes_accessed),
    )(x_flat, w1t, b1c, w2t, b2c, masks)

    return out.reshape(N, C_out, H, W)


# ----------------------------------------------------------------------------
# Deterministic init (matches nn.Conv2d / nn.BatchNorm2d style) + reference
# ----------------------------------------------------------------------------
def init_inconv_params(key, in_ch, out_ch, dtype=jnp.float32):
    ks = jax.random.split(key, 12)

    def conv_init(kw, kb, cin, cout):
        fan_in = cin * 3 * 3
        wb = math.sqrt(6.0 / ((1 + 5.0) * fan_in))    # kaiming_uniform(a=sqrt(5))
        w = jax.random.uniform(kw, (cout, cin, 3, 3), minval=-wb, maxval=wb, dtype=dtype)
        bb = 1.0 / math.sqrt(fan_in)
        b = jax.random.uniform(kb, (cout,), minval=-bb, maxval=bb, dtype=dtype)
        return w, b

    def bn_init(kg, kb, km, kv, c):
        g = 1.0 + 0.1 * jax.random.normal(kg, (c,), dtype=dtype)
        beta = 0.1 * jax.random.normal(kb, (c,), dtype=dtype)
        m = 0.1 * jax.random.normal(km, (c,), dtype=dtype)
        v = 0.5 + jax.random.uniform(kv, (c,), dtype=dtype)   # strictly positive
        return g, beta, m, v

    w1, b1 = conv_init(ks[0], ks[1], in_ch, out_ch)
    g1, beta1, m1, v1 = bn_init(ks[2], ks[3], ks[4], ks[5], out_ch)
    w2, b2 = conv_init(ks[6], ks[7], out_ch, out_ch)
    g2, beta2, m2, v2 = bn_init(ks[8], ks[9], ks[10], ks[11], out_ch)
    return dict(w1=w1, b1=b1, g1=g1, beta1=beta1, m1=m1, v1=v1,
                w2=w2, b2=b2, g2=g2, beta2=beta2, m2=m2, v2=v2)


def inconv_ref(x, params, eps=1e-5):
    """Pure-JAX reference: Conv3x3 -> BN(eval) -> ReLU, twice."""
    def conv_bn_relu(h, w, b, g, beta, m, v):
        y = jax.lax.conv_general_dilated(
            h, w, window_strides=(1, 1), padding=((1, 1), (1, 1)),
            dimension_numbers=("NCHW", "OIHW", "NCHW"))
        y = y + b.reshape(1, -1, 1, 1)
        y = (y - m.reshape(1, -1, 1, 1)) / jnp.sqrt(v.reshape(1, -1, 1, 1) + eps)
        y = y * g.reshape(1, -1, 1, 1) + beta.reshape(1, -1, 1, 1)
        return jnp.maximum(y, 0.0)

    h = conv_bn_relu(x, params["w1"], params["b1"], params["g1"],
                     params["beta1"], params["m1"], params["v1"])
    return conv_bn_relu(h, params["w2"], params["b2"], params["g2"],
                        params["beta2"], params["m2"], params["v2"])


if __name__ == "__main__":
    key = jax.random.PRNGKey(0)
    k_x, k_p = jax.random.split(key)

    N, in_ch, out_ch, H, W = 2, 4, 8, 16, 16
    x = jax.random.normal(k_x, (N, in_ch, H, W), dtype=jnp.float32)
    params = init_inconv_params(k_p, in_ch, out_ch)

    y = inconv_pallas(x, params)
    y = jax.block_until_ready(y)

    y_ref = inconv_ref(x, params)
    assert y.shape == (N, out_ch, H, W)
    err = float(jnp.max(jnp.abs(y - y_ref)))
    assert jnp.allclose(y, y_ref, atol=2e-4, rtol=2e-4), err

    print("KERNEL_OK")
</pallas_src>

<mosaic_0001>
module attributes {stable_mosaic.version = 11 : i64} {
  func.func @_double_conv_kernel(%arg0: i32, %arg1: memref<1x4x256xf32, #tpu.memory_space<vmem>>, %arg2: memref<9x8x4xf32, #tpu.memory_space<vmem>>, %arg3: memref<8x1xf32, #tpu.memory_space<vmem>>, %arg4: memref<9x8x8xf32, #tpu.memory_space<vmem>>, %arg5: memref<8x1xf32, #tpu.memory_space<vmem>>, %arg6: memref<9x1x256xf32, #tpu.memory_space<vmem>>, %arg7: memref<1x8x256xf32, #tpu.memory_space<vmem>>) attributes {dimension_semantics = [#tpu.dimension_semantics<parallel>], iteration_bounds = array<i64: 2>, scalar_prefetch = 0 : i64, scratch_operands = 0 : i64, tpu.core_type = #tpu.core_type<tc>, window_params = [{transform_indices = @transform_0, window_bounds = array<i64: 1, 4, 256>}, {pipeline_mode = #tpu.pipeline_mode<synchronous>, transform_indices = @transform_1, window_bounds = array<i64: 9, 8, 4>}, {pipeline_mode = #tpu.pipeline_mode<synchronous>, transform_indices = @transform_2, window_bounds = array<i64: 8, 1>}, {pipeline_mode = #tpu.pipeline_mode<synchronous>, transform_indices = @transform_3, window_bounds = array<i64: 9, 8, 8>}, {pipeline_mode = #tpu.pipeline_mode<synchronous>, transform_indices = @transform_4, window_bounds = array<i64: 8, 1>}, {pipeline_mode = #tpu.pipeline_mode<synchronous>, transform_indices = @transform_5, window_bounds = array<i64: 9, 1, 256>}, {transform_indices = @transform_6, window_bounds = array<i64: 1, 8, 256>}]} {
    %c0 = arith.constant 0 : index
    %c0_0 = arith.constant 0 : index
    %c0_1 = arith.constant 0 : index
    %0 = vector.load %arg6[%c0, %c0_0, %c0_1] : memref<9x1x256xf32, #tpu.memory_space<vmem>>, vector<9x1x256xf32>
    %c0_2 = arith.constant 0 : index
    %c0_3 = arith.constant 0 : index
    %c0_4 = arith.constant 0 : index
    %1 = vector.load %arg2[%c0_2, %c0_3, %c0_4] : memref<9x8x4xf32, #tpu.memory_space<vmem>>, vector<9x8x4xf32>
    %c0_5 = arith.constant 0 : index
    %c0_6 = arith.constant 0 : index
    %c0_7 = arith.constant 0 : index
    %2 = vector.load %arg4[%c0_5, %c0_6, %c0_7] : memref<9x8x8xf32, #tpu.memory_space<vmem>>, vector<9x8x8xf32>
    %c0_8 = arith.constant 0 : index
    %c0_9 = arith.constant 0 : index
    %3 = vector.load %arg3[%c0_8, %c0_9] : memref<8x1xf32, #tpu.memory_space<vmem>>, vector<8x1xf32>
    %c0_10 = arith.constant 0 : index
    %c0_11 = arith.constant 0 : index
    %4 = vector.load %arg5[%c0_10, %c0_11] : memref<8x1xf32, #tpu.memory_space<vmem>>, vector<8x1xf32>
    %c0_12 = arith.constant 0 : index
    %c0_13 = arith.constant 0 : index
    %c0_14 = arith.constant 0 : index
    %5 = vector.load %arg1[%c0_12, %c0_13, %c0_14] : memref<1x4x256xf32, #tpu.memory_space<vmem>>, vector<1x4x256xf32>
    %6 = vector.shape_cast %5 : vector<1x4x256xf32> to vector<4x256xf32>
    %cst = arith.constant 0.000000e+00 : f32
    %7 = vector.broadcast %cst : f32 to vector<8x256xf32>
    %c17_i32 = arith.constant 17 : i32
    %8 = tpu.dynamic_rotate %6 by %c17_i32 dim 1 : vector<4x256xf32>, i32 -> vector<4x256xf32>
    %9 = vector.extract_strided_slice %0 {offsets = [0, 0, 0], sizes = [1, 1, 256], strides = [1, 1, 1]} : vector<9x1x256xf32> to vector<1x1x256xf32>
    %10 = vector.shape_cast %9 : vector<1x1x256xf32> to vector<1x256xf32>
    %11 = vector.broadcast %10 : vector<1x256xf32> to vector<4x256xf32>
    %12 = arith.mulf %8, %11 : vector<4x256xf32>
    %13 = vector.extract_strided_slice %1 {offsets = [0, 0, 0], sizes = [1, 8, 4], strides = [1, 1, 1]} : vector<9x8x4xf32> to vector<1x8x4xf32>
    %14 = vector.shape_cast %13 : vector<1x8x4xf32> to vector<8x4xf32>
    %15 = vector.extract_strided_slice %14 {offsets = [0, 0], sizes = [8, 1], strides = [1, 1]} : vector<8x4xf32> to vector<8x1xf32>
    %16 = vector.extract_strided_slice %12 {offsets = [0, 0], sizes = [1, 256], strides = [1, 1]} : vector<4x256xf32> to vector<1x256xf32>
    %17 = vector.broadcast %15 : vector<8x1xf32> to vector<8x256xf32>
    %18 = vector.broadcast %16 : vector<1x256xf32> to vector<8x256xf32>
    %19 = arith.mulf %17, %18 : vector<8x256xf32>
    %20 = arith.addf %7, %19 : vector<8x256xf32>
    %21 = vector.extract_strided_slice %14 {offsets = [0, 1], sizes = [8, 1], strides = [1, 1]} : vector<8x4xf32> to vector<8x1xf32>
    %22 = vector.extract_strided_slice %12 {offsets = [1, 0], sizes = [1, 256], strides = [1, 1]} : vector<4x256xf32> to vector<1x256xf32>
    %23 = vector.broadcast %21 : vector<8x1xf32> to vector<8x256xf32>
    %24 = vector.broadcast %22 : vector<1x256xf32> to vector<8x256xf32>
    %25 = arith.mulf %23, %24 : vector<8x256xf32>
    %26 = arith.addf %20, %25 : vector<8x256xf32>
    %27 = vector.extract_strided_slice %14 {offsets = [0, 2], sizes = [8, 1], strides = [1, 1]} : vector<8x4xf32> to vector<8x1xf32>
    %28 = vector.extract_strided_slice %12 {offsets = [2, 0], sizes = [1, 256], strides = [1, 1]} : vector<4x256xf32> to vector<1x256xf32>
    %29 = vector.broadcast %27 : vector<8x1xf32> to vector<8x256xf32>
    %30 = vector.broadcast %28 : vector<1x256xf32> to vector<8x256xf32>
    %31 = arith.mulf %29, %30 : vector<8x256xf32>
    %32 = arith.addf %26, %31 : vector<8x256xf32>
    %33 = vector.extract_strided_slice %14 {offsets = [0, 3], sizes = [8, 1], strides = [1, 1]} : vector<8x4xf32> to vector<8x1xf32>
    %34 = vector.extract_strided_slice %12 {offsets = [3, 0], sizes = [1, 256], strides = [1, 1]} : vector<4x256xf32> to vector<1x256xf32>
    %35 = vector.broadcast %33 : vector<8x1xf32> to vector<8x256xf32>
    %36 = vector.broadcast %34 : vector<1x256xf32> to vector<8x256xf32>
    %37 = arith.mulf %35, %36 : vector<8x256xf32>
    %38 = arith.addf %32, %37 : vector<8x256xf32>
    %c16_i32 = arith.constant 16 : i32
    %39 = tpu.dynamic_rotate %6 by %c16_i32 dim 1 : vector<4x256xf32>, i32 -> vector<4x256xf32>
    %40 = vector.extract_strided_slice %0 {offsets = [1, 0, 0], sizes = [1, 1, 256], strides = [1, 1, 1]} : vector<9x1x256xf32> to vector<1x1x256xf32>
    %41 = vector.shape_cast %40 : vector<1x1x256xf32> to vector<1x256xf32>
    %42 = vector.broadcast %41 : vector<1x256xf32> to vector<4x256xf32>
    %43 = arith.mulf %39, %42 : vector<4x256xf32>
    %44 = vector.extract_strided_slice %1 {offsets = [1, 0, 0], sizes = [1, 8, 4], strides = [1, 1, 1]} : vector<9x8x4xf32> to vector<1x8x4xf32>
    %45 = vector.shape_cast %44 : vector<1x8x4xf32> to vector<8x4xf32>
    %46 = vector.extract_strided_slice %45 {offsets = [0, 0], sizes = [8, 1], strides = [1, 1]} : vector<8x4xf32> to vector<8x1xf32>
    %47 = vector.extract_strided_slice %43 {offsets = [0, 0], sizes = [1, 256], strides = [1, 1]} : vector<4x256xf32> to vector<1x256xf32>
    %48 = vector.broadcast %46 : vector<8x1xf32> to vector<8x256xf32>
    %49 = vector.broadcast %47 : vector<1x256xf32> to vector<8x256xf32>
    %50 = arith.mulf %48, %49 : vector<8x256xf32>
    %51 = arith.addf %38, %50 : vector<8x256xf32>
    %52 = vector.extract_strided_slice %45 {offsets = [0, 1], sizes = [8, 1], strides = [1, 1]} : vector<8x4xf32> to vector<8x1xf32>
    %53 = vector.extract_strided_slice %43 {offsets = [1, 0], sizes = [1, 256], strides = [1, 1]} : vector<4x256xf32> to vector<1x256xf32>
    %54 = vector.broadcast %52 : vector<8x1xf32> to vector<8x256xf32>
    %55 = vector.broadcast %53 : vector<1x256xf32> to vector<8x256xf32>
    %56 = arith.mulf %54, %55 : vector<8x256xf32>
    %57 = arith.addf %51, %56 : vector<8x256xf32>
    %58 = vector.extract_strided_slice %45 {offsets = [0, 2], sizes = [8, 1], strides = [1, 1]} : vector<8x4xf32> to vector<8x1xf32>
    %59 = vector.extract_strided_slice %43 {offsets = [2, 0], sizes = [1, 256], strides = [1, 1]} : vector<4x256xf32> to vector<1x256xf32>
    %60 = vector.broadcast %58 : vector<8x1xf32> to vector<8x256xf32>
    %61 = vector.broadcast %59 : vector<1x256xf32> to vector<8x256xf32>
    %62 = arith.mulf %60, %61 : vector<8x256xf32>
    %63 = arith.addf %57, %62 : vector<8x256xf32>
    %64 = vector.extract_strided_slice %45 {offsets = [0, 3], sizes = [8, 1], strides = [1, 1]} : vector<8x4xf32> to vector<8x1xf32>
    %65 = vector.extract_strided_slice %43 {offsets = [3, 0], sizes = [1, 256], strides = [1, 1]} : vector<4x256xf32> to vector<1x256xf32>
    %66 = vector.broadcast %64 : vector<8x1xf32> to vector<8x256xf32>
    %67 = vector.broadcast %65 : vector<1x256xf32> to vector<8x256xf32>
    %68 = arith.mulf %66, %67 : vector<8x256xf32>
    %69 = arith.addf %63, %68 : vector<8x256xf32>
    %c15_i32 = arith.constant 15 : i32
    %70 = tpu.dynamic_rotate %6 by %c15_i32 dim 1 : vector<4x256xf32>, i32 -> vector<4x256xf32>
    %71 = vector.extract_strided_slice %0 {offsets = [2, 0, 0], sizes = [1, 1, 256], strides = [1, 1, 1]} : vector<9x1x256xf32> to vector<1x1x256xf32>
    %72 = vector.shape_cast %71 : vector<1x1x256xf32> to vector<1x256xf32>
    %73 = vector.broadcast %72 : vector<1x256xf32> to vector<4x256xf32>
    %74 = arith.mulf %70, %73 : vector<4x256xf32>
    %75 = vector.extract_strided_slice %1 {offsets = [2, 0, 0], sizes = [1, 8, 4], strides = [1, 1, 1]} : vector<9x8x4xf32> to vector<1x8x4xf32>
    %76 = vector.shape_cast %75 : vector<1x8x4xf32> to vector<8x4xf32>
    %77 = vector.extract_strided_slice %76 {offsets = [0, 0], sizes = [8, 1], strides = [1, 1]} : vector<8x4xf32> to vector<8x1xf32>
    %78 = vector.extract_strided_slice %74 {offsets = [0, 0], sizes = [1, 256], strides = [1, 1]} : vector<4x256xf32> to vector<1x256xf32>
    %79 = vector.broadcast %77 : vector<8x1xf32> to vector<8x256xf32>
    %80 = vector.broadcast %78 : vector<1x256xf32> to vector<8x256xf32>
    %81 = arith.mulf %79, %80 : vector<8x256xf32>
    %82 = arith.addf %69, %81 : vector<8x256xf32>
    %83 = vector.extract_strided_slice %76 {offsets = [0, 1], sizes = [8, 1], strides = [1, 1]} : vector<8x4xf32> to vector<8x1xf32>
    %84 = vector.extract_strided_slice %74 {offsets = [1, 0], sizes = [1, 256], strides = [1, 1]} : vector<4x256xf32> to vector<1x256xf32>
    %85 = vector.broadcast %83 : vector<8x1xf32> to vector<8x256xf32>
    %86 = vector.broadcast %84 : vector<1x256xf32> to vector<8x256xf32>
    %87 = arith.mulf %85, %86 : vector<8x256xf32>
    %88 = arith.addf %82, %87 : vector<8x256xf32>
    %89 = vector.extract_strided_slice %76 {offsets = [0, 2], sizes = [8, 1], strides = [1, 1]} : vector<8x4xf32> to vector<8x1xf32>
    %90 = vector.extract_strided_slice %74 {offsets = [2, 0], sizes = [1, 256], strides = [1, 1]} : vector<4x256xf32> to vector<1x256xf32>
    %91 = vector.broadcast %89 : vector<8x1xf32> to vector<8x256xf32>
    %92 = vector.broadcast %90 : vector<1x256xf32> to vector<8x256xf32>
    %93 = arith.mulf %91, %92 : vector<8x256xf32>
    %94 = arith.addf %88, %93 : vector<8x256xf32>
    %95 = vector.extract_strided_slice %76 {offsets = [0, 3], sizes = [8, 1], strides = [1, 1]} : vector<8x4xf32> to vector<8x1xf32>
    %96 = vector.extract_strided_slice %74 {offsets = [3, 0], sizes = [1, 256], strides = [1, 1]} : vector<4x256xf32> to vector<1x256xf32>
    %97 = vector.broadcast %95 : vector<8x1xf32> to vector<8x256xf32>
    %98 = vector.broadcast %96 : vector<1x256xf32> to vector<8x256xf32>
    %99 = arith.mulf %97, %98 : vector<8x256xf32>
    %100 = arith.addf %94, %99 : vector<8x256xf32>
    %c1_i32 = arith.constant 1 : i32
    %101 = tpu.dynamic_rotate %6 by %c1_i32 dim 1 : vector<4x256xf32>, i32 -> vector<4x256xf32>
    %102 = vector.extract_strided_slice %0 {offsets = [3, 0, 0], sizes = [1, 1, 256], strides = [1, 1, 1]} : vector<9x1x256xf32> to vector<1x1x256xf32>
    %103 = vector.shape_cast %102 : vector<1x1x256xf32> to vector<1x256xf32>
    %104 = vector.broadcast %103 : vector<1x256xf32> to vector<4x256xf32>
    %105 = arith.mulf %101, %104 : vector<4x256xf32>
    %106 = vector.extract_strided_slice %1 {offsets = [3, 0, 0], sizes = [1, 8, 4], strides = [1, 1, 1]} : vector<9x8x4xf32> to vector<1x8x4xf32>
    %107 = vector.shape_cast %106 : vector<1x8x4xf32> to vector<8x4xf32>
    %108 = vector.extract_strided_slice %107 {offsets = [0, 0], sizes = [8, 1], strides = [1, 1]} : vector<8x4xf32> to vector<8x1xf32>
    %109 = vector.extract_strided_slice %105 {offsets = [0, 0], sizes = [1, 256], strides = [1, 1]} : vector<4x256xf32> to vector<1x256xf32>
    %110 = vector.broadcast %108 : vector<8x1xf32> to vector<8x256xf32>
    %111 = vector.broadcast %109 : vector<1x256xf32> to vector<8x256xf32>
    %112 = arith.mulf %110, %111 : vector<8x256xf32>
    %113 = arith.addf %100, %112 : vector<8x256xf32>
    %114 = vector.extract_strided_slice %107 {offsets = [0, 1], sizes = [8, 1], strides = [1, 1]} : vector<8x4xf32> to vector<8x1xf32>
    %115 = vector.extract_strided_slice %105 {offsets = [1, 0], sizes = [1, 256], strides = [1, 1]} : vector<4x256xf32> to vector<1x256xf32>
    %116 = vector.broadcast %114 : vector<8x1xf32> to vector<8x256xf32>
    %117 = vector.broadcast %115 : vector<1x256xf32> to vector<8x256xf32>
    %118 = arith.mulf %116, %117 : vector<8x256xf32>
    %119 = arith.addf %113, %118 : vector<8x256xf32>
    %120 = vector.extract_strided_slice %107 {offsets = [0, 2], sizes = [8, 1], strides = [1, 1]} : vector<8x4xf32> to vector<8x1xf32>
    %121 = vector.extract_strided_slice %105 {offsets = [2, 0], sizes = [1, 256], strides = [1, 1]} : vector<4x256xf32> to vector<1x256xf32>
    %122 = vector.broadcast %120 : vector<8x1xf32> to vector<8x256xf32>
    %123 = vector.broadcast %121 : vector<1x256xf32> to vector<8x256xf32>
    %124 = arith.mulf %122, %123 : vector<8x256xf32>
    %125 = arith.addf %119, %124 : vector<8x256xf32>
    %126 = vector.extract_strided_slice %107 {offsets = [0, 3], sizes = [8, 1], strides = [1, 1]} : vector<8x4xf32> to vector<8x1xf32>
    %127 = vector.extract_strided_slice %105 {offsets = [3, 0], sizes = [1, 256], strides = [1, 1]} : vector<4x256xf32> to vector<1x256xf32>
    %128 = vector.broadcast %126 : vector<8x1xf32> to vector<8x256xf32>
    %129 = vector.broadcast %127 : vector<1x256xf32> to vector<8x256xf32>
    %130 = arith.mulf %128, %129 : vector<8x256xf32>
    %131 = arith.addf %125, %130 : vector<8x256xf32>
    %132 = vector.extract_strided_slice %1 {offsets = [4, 0, 0], sizes = [1, 8, 4], strides = [1, 1, 1]} : vector<9x8x4xf32> to vector<1x8x4xf32>
    %133 = vector.shape_cast %132 : vector<1x8x4xf32> to vector<8x4xf32>
    %134 = vector.extract_strided_slice %133 {offsets = [0, 0], sizes = [8, 1], strides = [1, 1]} : vector<8x4xf32> to vector<8x1xf32>
    %135 = vector.extract_strided_slice %6 {offsets = [0, 0], sizes = [1, 256], strides = [1, 1]} : vector<4x256xf32> to vector<1x256xf32>
    %136 = vector.broadcast %134 : vector<8x1xf32> to vector<8x256xf32>
    %137 = vector.broadcast %135 : vector<1x256xf32> to vector<8x256xf32>
    %138 = arith.mulf %136, %137 : vector<8x256xf32>
    %139 = arith.addf %131, %138 : vector<8x256xf32>
    %140 = vector.extract_strided_slice %133 {offsets = [0, 1], sizes = [8, 1], strides = [1, 1]} : vector<8x4xf32> to vector<8x1xf32>
    %141 = vector.extract_strided_slice %6 {offsets = [1, 0], sizes = [1, 256], strides = [1, 1]} : vector<4x256xf32> to vector<1x256xf32>
    %142 = vector.broadcast %140 : vector<8x1xf32> to vector<8x256xf32>
    %143 = vector.broadcast %141 : vector<1x256xf32> to vector<8x256xf32>
    %144 = arith.mulf %142, %143 : vector<8x256xf32>
    %145 = arith.addf %139, %144 : vector<8x256xf32>
    %146 = vector.extract_strided_slice %133 {offsets = [0, 2], sizes = [8, 1], strides = [1, 1]} : vector<8x4xf32> to vector<8x1xf32>
    %147 = vector.extract_strided_slice %6 {offsets = [2, 0], sizes = [1, 256], strides = [1, 1]} : vector<4x256xf32> to vector<1x256xf32>
    %148 = vector.broadcast %146 : vector<8x1xf32> to vector<8x256xf32>
    %149 = vector.broadcast %147 : vector<1x256xf32> to vector<8x256xf32>
    %150 = arith.mulf %148, %149 : vector<8x256xf32>
    %151 = arith.addf %145, %150 : vector<8x256xf32>
    %152 = vector.extract_strided_slice %133 {offsets = [0, 3], sizes = [8, 1], strides = [1, 1]} : vector<8x4xf32> to vector<8x1xf32>
    %153 = vector.extract_strided_slice %6 {offsets = [3, 0], sizes = [1, 256], strides = [1, 1]} : vector<4x256xf32> to vector<1x256xf32>
    %154 = vector.broadcast %152 : vector<8x1xf32> to vector<8x256xf32>
    %155 = vector.broadcast %153 : vector<1x256xf32> to vector<8x256xf32>
    %156 = arith.mulf %154, %155 : vector<8x256xf32>
    %157 = arith.addf %151, %156 : vector<8x256xf32>
    %c255_i32 = arith.constant 255 : i32
    %158 = tpu.dynamic_rotate %6 by %c255_i32 dim 1 : vector<4x256xf32>, i32 -> vector<4x256xf32>
    %159 = vector.extract_strided_slice %0 {offsets = [5, 0, 0], sizes = [1, 1, 256], strides = [1, 1, 1]} : vector<9x1x256xf32> to vector<1x1x256xf32>
    %160 = vector.shape_cast %159 : vector<1x1x256xf32> to vector<1x256xf32>
    %161 = vector.broadcast %160 : vector<1x256xf32> to vector<4x256xf32>
    %162 = arith.mulf %158, %161 : vector<4x256xf32>
    %163 = vector.extract_strided_slice %1 {offsets = [5, 0, 0], sizes = [1, 8, 4], strides = [1, 1, 1]} : vector<9x8x4xf32> to vector<1x8x4xf32>
    %164 = vector.shape_cast %163 : vector<1x8x4xf32> to vector<8x4xf32>
    %165 = vector.extract_strided_slice %164 {offsets = [0, 0], sizes = [8, 1], strides = [1, 1]} : vector<8x4xf32> to vector<8x1xf32>
    %166 = vector.extract_strided_slice %162 {offsets = [0, 0], sizes = [1, 256], strides = [1, 1]} : vector<4x256xf32> to vector<1x256xf32>
    %167 = vector.broadcast %165 : vector<8x1xf32> to vector<8x256xf32>
    %168 = vector.broadcast %166 : vector<1x256xf32> to vector<8x256xf32>
    %169 = arith.mulf %167, %168 : vector<8x256xf32>
    %170 = arith.addf %157, %169 : vector<8x256xf32>
    %171 = vector.extract_strided_slice %164 {offsets = [0, 1], sizes = [8, 1], strides = [1, 1]} : vector<8x4xf32> to vector<8x1xf32>
    %172 = vector.extract_strided_slice %162 {offsets = [1, 0], sizes = [1, 256], strides = [1, 1]} : vector<4x256xf32> to vector<1x256xf32>
    %173 = vector.broadcast %171 : vector<8x1xf32> to vector<8x256xf32>
    %174 = vector.broadcast %172 : vector<1x256xf32> to vector<8x256xf32>
    %175 = arith.mulf %173, %174 : vector<8x256xf32>
    %176 = arith.addf %170, %175 : vector<8x256xf32>
    %177 = vector.extract_strided_slice %164 {offsets = [0, 2], sizes = [8, 1], strides = [1, 1]} : vector<8x4xf32> to vector<8x1xf32>
    %178 = vector.extract_strided_slice %162 {offsets = [2, 0], sizes = [1, 256], strides = [1, 1]} : vector<4x256xf32> to vector<1x256xf32>
    %179 = vector.broadcast %177 : vector<8x1xf32> to vector<8x256xf32>
    %180 = vector.broadcast %178 : vector<1x256xf32> to vector<8x256xf32>
    %181 = arith.mulf %179, %180 : vector<8x256xf32>
    %182 = arith.addf %176, %181 : vector<8x256xf32>
    %183 = vector.extract_strided_slice %164 {offsets = [0, 3], sizes = [8, 1], strides = [1, 1]} : vector<8x4xf32> to vector<8x1xf32>
    %184 = vector.extract_strided_slice %162 {offsets = [3, 0], sizes = [1, 256], strides = [1, 1]} : vector<4x256xf32> to vector<1x256xf32>
    %185 = vector.broadcast %183 : vector<8x1xf32> to vector<8x256xf32>
    %186 = vector.broadcast %184 : vector<1x256xf32> to vector<8x256xf32>
    %187 = arith.mulf %185, %186 : vector<8x256xf32>
    %188 = arith.addf %182, %187 : vector<8x256xf32>
    %c241_i32 = arith.constant 241 : i32
    %189 = tpu.dynamic_rotate %6 by %c241_i32 dim 1 : vector<4x256xf32>, i32 -> vector<4x256xf32>
    %190 = vector.extract_strided_slice %0 {offsets = [6, 0, 0], sizes = [1, 1, 256], strides = [1, 1, 1]} : vector<9x1x256xf32> to vector<1x1x256xf32>
    %191 = vector.shape_cast %190 : vector<1x1x256xf32> to vector<1x256xf32>
    %192 = vector.broadcast %191 : vector<1x256xf32> to vector<4x256xf32>
    %193 = arith.mulf %189, %192 : vector<4x256xf32>
    %194 = vector.extract_strided_slice %1 {offsets = [6, 0, 0], sizes = [1, 8, 4], strides = [1, 1, 1]} : vector<9x8x4xf32> to vector<1x8x4xf32>
    %195 = vector.shape_cast %194 : vector<1x8x4xf32> to vector<8x4xf32>
    %196 = vector.extract_strided_slice %195 {offsets = [0, 0], sizes = [8, 1], strides = [1, 1]} : vector<8x4xf32> to vector<8x1xf32>
    %197 = vector.extract_strided_slice %193 {offsets = [0, 0], sizes = [1, 256], strides = [1, 1]} : vector<4x256xf32> to vector<1x256xf32>
    %198 = vector.broadcast %196 : vector<8x1xf32> to vector<8x256xf32>
    %199 = vector.broadcast %197 : vector<1x256xf32> to vector<8x256xf32>
    %200 = arith.mulf %198, %199 : vector<8x256xf32>
    %201 = arith.addf %188, %200 : vector<8x256xf32>
    %202 = vector.extract_strided_slice %195 {offsets = [0, 1], sizes = [8, 1], strides = [1, 1]} : vector<8x4xf32> to vector<8x1xf32>
    %203 = vector.extract_strided_slice %193 {offsets = [1, 0], sizes = [1, 256], strides = [1, 1]} : vector<4x256xf32> to vector<1x256xf32>
    %204 = vector.broadcast %202 : vector<8x1xf32> to vector<8x256xf32>
    %205 = vector.broadcast %203 : vector<1x256xf32> to vector<8x256xf32>
    %206 = arith.mulf %204, %205 : vector<8x256xf32>
    %207 = arith.addf %201, %206 : vector<8x256xf32>
    %208 = vector.extract_strided_slice %195 {offsets = [0, 2], sizes = [8, 1], strides = [1, 1]} : vector<8x4xf32> to vector<8x1xf32>
    %209 = vector.extract_strided_slice %193 {offsets = [2, 0], sizes = [1, 256], strides = [1, 1]} : vector<4x256xf32> to vector<1x256xf32>
    %210 = vector.broadcast %208 : vector<8x1xf32> to vector<8x256xf32>
    %211 = vector.broadcast %209 : vector<1x256xf32> to vector<8x256xf32>
    %212 = arith.mulf %210, %211 : vector<8x256xf32>
    %213 = arith.addf %207, %212 : vector<8x256xf32>
    %214 = vector.extract_strided_slice %195 {offsets = [0, 3], sizes = [8, 1], strides = [1, 1]} : vector<8x4xf32> to vector<8x1xf32>
    %215 = vector.extract_strided_slice %193 {offsets = [3, 0], sizes = [1, 256], strides = [1, 1]} : vector<4x256xf32> to vector<1x256xf32>
    %216 = vector.broadcast %214 : vector<8x1xf32> to vector<8x256xf32>
    %217 = vector.broadcast %215 : vector<1x256xf32> to vector<8x256xf32>
    %218 = arith.mulf %216, %217 : vector<8x256xf32>
    %219 = arith.addf %213, %218 : vector<8x256xf32>
    %c240_i32 = arith.constant 240 : i32
    %220 = tpu.dynamic_rotate %6 by %c240_i32 dim 1 : vector<4x256xf32>, i32 -> vector<4x256xf32>
    %221 = vector.extract_strided_slice %0 {offsets = [7, 0, 0], sizes = [1, 1, 256], strides = [1, 1, 1]} : vector<9x1x256xf32> to vector<1x1x256xf32>
    %222 = vector.shape_cast %221 : vector<1x1x256xf32> to vector<1x256xf32>
    %223 = vector.broadcast %222 : vector<1x256xf32> to vector<4x256xf32>
    %224 = arith.mulf %220, %223 : vector<4x256xf32>
    %225 = vector.extract_strided_slice %1 {offsets = [7, 0, 0], sizes = [1, 8, 4], strides = [1, 1, 1]} : vector<9x8x4xf32> to vector<1x8x4xf32>
    %226 = vector.shape_cast %225 : vector<1x8x4xf32> to vector<8x4xf32>
    %227 = vector.extract_strided_slice %226 {offsets = [0, 0], sizes = [8, 1], strides = [1, 1]} : vector<8x4xf32> to vector<8x1xf32>
    %228 = vector.extract_strided_slice %224 {offsets = [0, 0], sizes = [1, 256], strides = [1, 1]} : vector<4x256xf32> to vector<1x256xf32>
    %229 = vector.broadcast %227 : vector<8x1xf32> to vector<8x256xf32>
    %230 = vector.broadcast %228 : vector<1x256xf32> to vector<8x256xf32>
    %231 = arith.mulf %229, %230 : vector<8x256xf32>
    %232 = arith.addf %219, %231 : vector<8x256xf32>
    %233 = vector.extract_strided_slice %226 {offsets = [0, 1], sizes = [8, 1], strides = [1, 1]} : vector<8x4xf32> to vector<8x1xf32>
    %234 = vector.extract_strided_slice %224 {offsets = [1, 0], sizes = [1, 256], strides = [1, 1]} : vector<4x256xf32> to vector<1x256xf32>
    %235 = vector.broadcast %233 : vector<8x1xf32> to vector<8x256xf32>
    %236 = vector.broadcast %234 : vector<1x256xf32> to vector<8x256xf32>
    %237 = arith.mulf %235, %236 : vector<8x256xf32>
    %238 = arith.addf %232, %237 : vector<8x256xf32>
    %239 = vector.extract_strided_slice %226 {offsets = [0, 2], sizes = [8, 1], strides = [1, 1]} : vector<8x4xf32> to vector<8x1xf32>
    %240 = vector.extract_strided_slice %224 {offsets = [2, 0], sizes = [1, 256], strides = [1, 1]} : vector<4x256xf32> to vector<1x256xf32>
    %241 = vector.broadcast %239 : vector<8x1xf32> to vector<8x256xf32>
    %242 = vector.broadcast %240 : vector<1x256xf32> to vector<8x256xf32>
    %243 = arith.mulf %241, %242 : vector<8x256xf32>
    %244 = arith.addf %238, %243 : vector<8x256xf32>
    %245 = vector.extract_strided_slice %226 {offsets = [0, 3], sizes = [8, 1], strides = [1, 1]} : vector<8x4xf32> to vector<8x1xf32>
    %246 = vector.extract_strided_slice %224 {offsets = [3, 0], sizes = [1, 256], strides = [1, 1]} : vector<4x256xf32> to vector<1x256xf32>
    %247 = vector.broadcast %245 : vector<8x1xf32> to vector<8x256xf32>
    %248 = vector.broadcast %246 : vector<1x256xf32> to vector<8x256xf32>
    %249 = arith.mulf %247, %248 : vector<8x256xf32>
    %250 = arith.addf %244, %249 : vector<8x256xf32>
    %c239_i32 = arith.constant 239 : i32
    %251 = tpu.dynamic_rotate %6 by %c239_i32 dim 1 : vector<4x256xf32>, i32 -> vector<4x256xf32>
    %252 = vector.extract_strided_slice %0 {offsets = [8, 0, 0], sizes = [1, 1, 256], strides = [1, 1, 1]} : vector<9x1x256xf32> to vector<1x1x256xf32>
    %253 = vector.shape_cast %252 : vector<1x1x256xf32> to vector<1x256xf32>
    %254 = vector.broadcast %253 : vector<1x256xf32> to vector<4x256xf32>
    %255 = arith.mulf %251, %254 : vector<4x256xf32>
    %256 = vector.extract_strided_slice %1 {offsets = [8, 0, 0], sizes = [1, 8, 4], strides = [1, 1, 1]} : vector<9x8x4xf32> to vector<1x8x4xf32>
    %257 = vector.shape_cast %256 : vector<1x8x4xf32> to vector<8x4xf32>
    %258 = vector.extract_strided_slice %257 {offsets = [0, 0], sizes = [8, 1], strides = [1, 1]} : vector<8x4xf32> to vector<8x1xf32>
    %259 = vector.extract_strided_slice %255 {offsets = [0, 0], sizes = [1, 256], strides = [1, 1]} : vector<4x256xf32> to vector<1x256xf32>
    %260 = vector.broadcast %258 : vector<8x1xf32> to vector<8x256xf32>
    %261 = vector.broadcast %259 : vector<1x256xf32> to vector<8x256xf32>
    %262 = arith.mulf %260, %261 : vector<8x256xf32>
    %263 = arith.addf %250, %262 : vector<8x256xf32>
    %264 = vector.extract_strided_slice %257 {offsets = [0, 1], sizes = [8, 1], strides = [1, 1]} : vector<8x4xf32> to vector<8x1xf32>
    %265 = vector.extract_strided_slice %255 {offsets = [1, 0], sizes = [1, 256], strides = [1, 1]} : vector<4x256xf32> to vector<1x256xf32>
    %266 = vector.broadcast %264 : vector<8x1xf32> to vector<8x256xf32>
    %267 = vector.broadcast %265 : vector<1x256xf32> to vector<8x256xf32>
    %268 = arith.mulf %266, %267 : vector<8x256xf32>
    %269 = arith.addf %263, %268 : vector<8x256xf32>
    %270 = vector.extract_strided_slice %257 {offsets = [0, 2], sizes = [8, 1], strides = [1, 1]} : vector<8x4xf32> to vector<8x1xf32>
    %271 = vector.extract_strided_slice %255 {offsets = [2, 0], sizes = [1, 256], strides = [1, 1]} : vector<4x256xf32> to vector<1x256xf32>
    %272 = vector.broadcast %270 : vector<8x1xf32> to vector<8x256xf32>
    %273 = vector.broadcast %271 : vector<1x256xf32> to vector<8x256xf32>
    %274 = arith.mulf %272, %273 : vector<8x256xf32>
    %275 = arith.addf %269, %274 : vector<8x256xf32>
    %276 = vector.extract_strided_slice %257 {offsets = [0, 3], sizes = [8, 1], strides = [1, 1]} : vector<8x4xf32> to vector<8x1xf32>
    %277 = vector.extract_strided_slice %255 {offsets = [3, 0], sizes = [1, 256], strides = [1, 1]} : vector<4x256xf32> to vector<1x256xf32>
    %278 = vector.broadcast %276 : vector<8x1xf32> to vector<8x256xf32>
    %279 = vector.broadcast %277 : vector<1x256xf32> to vector<8x256xf32>
    %280 = arith.mulf %278, %279 : vector<8x256xf32>
    %281 = arith.addf %275, %280 : vector<8x256xf32>
    %282 = vector.broadcast %3 : vector<8x1xf32> to vector<8x256xf32>
    %283 = arith.addf %281, %282 : vector<8x256xf32>
    %cst_15 = arith.constant 0.000000e+00 : f32
    %284 = vector.broadcast %cst_15 : f32 to vector<8x256xf32>
    %285 = arith.maximumf %283, %284 : vector<8x256xf32>
    %cst_16 = arith.constant 0.000000e+00 : f32
    %286 = vector.broadcast %cst_16 : f32 to vector<8x256xf32>
    %c17_i32_17 = arith.constant 17 : i32
    %287 = tpu.dynamic_rotate %285 by %c17_i32_17 dim 1 : vector<8x256xf32>, i32 -> vector<8x256xf32>
    %288 = vector.extract_strided_slice %0 {offsets = [0, 0, 0], sizes = [1, 1, 256], strides = [1, 1, 1]} : vector<9x1x256xf32> to vector<1x1x256xf32>
    %289 = vector.shape_cast %288 : vector<1x1x256xf32> to vector<1x256xf32>
    %290 = vector.broadcast %289 : vector<1x256xf32> to vector<8x256xf32>
    %291 = arith.mulf %287, %290 : vector<8x256xf32>
    %292 = vector.extract_strided_slice %2 {offsets = [0, 0, 0], sizes = [1, 8, 8], strides = [1, 1, 1]} : vector<9x8x8xf32> to vector<1x8x8xf32>
    %293 = vector.shape_cast %292 : vector<1x8x8xf32> to vector<8x8xf32>
    %294 = vector.extract_strided_slice %293 {offsets = [0, 0], sizes = [8, 1], strides = [1, 1]} : vector<8x8xf32> to vector<8x1xf32>
    %295 = vector.extract_strided_slice %291 {offsets = [0, 0], sizes = [1, 256], strides = [1, 1]} : vector<8x256xf32> to vector<1x256xf32>
    %296 = vector.broadcast %294 : vector<8x1xf32> to vector<8x256xf32>
    %297 = vector.broadcast %295 : vector<1x256xf32> to vector<8x256xf32>
    %298 = arith.mulf %296, %297 : vector<8x256xf32>
    %299 = arith.addf %286, %298 : vector<8x256xf32>
    %300 = vector.extract_strided_slice %293 {offsets = [0, 1], sizes = [8, 1], strides = [1, 1]} : vector<8x8xf32> to vector<8x1xf32>
    %301 = vector.extract_strided_slice %291 {offsets = [1, 0], sizes = [1, 256], strides = [1, 1]} : vector<8x256xf32> to vector<1x256xf32>
    %302 = vector.broadcast %300 : vector<8x1xf32> to vector<8x256xf32>
    %303 = vector.broadcast %301 : vector<1x256xf32> to vector<8x256xf32>
    %304 = arith.mulf %302, %303 : vector<8x256xf32>
    %305 = arith.addf %299, %304 : vector<8x256xf32>
    %306 = vector.extract_strided_slice %293 {offsets = [0, 2], sizes = [8, 1], strides = [1, 1]} : vector<8x8xf32> to vector<8x1xf32>
    %307 = vector.extract_strided_slice %291 {offsets = [2, 0], sizes = [1, 256], strides = [1, 1]} : vector<8x256xf32> to vector<1x256xf32>
    %308 = vector.broadcast %306 : vector<8x1xf32> to vector<8x256xf32>
    %309 = vector.broadcast %307 : vector<1x256xf32> to vector<8x256xf32>
    %310 = arith.mulf %308, %309 : vector<8x256xf32>
    %311 = arith.addf %305, %310 : vector<8x256xf32>
    %312 = vector.extract_strided_slice %293 {offsets = [0, 3], sizes = [8, 1], strides = [1, 1]} : vector<8x8xf32> to vector<8x1xf32>
    %313 = vector.extract_strided_slice %291 {offsets = [3, 0], sizes = [1, 256], strides = [1, 1]} : vector<8x256xf32> to vector<1x256xf32>
    %314 = vector.broadcast %312 : vector<8x1xf32> to vector<8x256xf32>
    %315 = vector.broadcast %313 : vector<1x256xf32> to vector<8x256xf32>
    %316 = arith.mulf %314, %315 : vector<8x256xf32>
    %317 = arith.addf %311, %316 : vector<8x256xf32>
    %318 = vector.extract_strided_slice %293 {offsets = [0, 4], sizes = [8, 1], strides = [1, 1]} : vector<8x8xf32> to vector<8x1xf32>
    %319 = vector.extract_strided_slice %291 {offsets = [4, 0], sizes = [1, 256], strides = [1, 1]} : vector<8x256xf32> to vector<1x256xf32>
    %320 = vector.broadcast %318 : vector<8x1xf32> to vector<8x256xf32>
    %321 = vector.broadcast %319 : vector<1x256xf32> to vector<8x256xf32>
    %322 = arith.mulf %320, %321 : vector<8x256xf32>
    %323 = arith.addf %317, %322 : vector<8x256xf32>
    %324 = vector.extract_strided_slice %293 {offsets = [0, 5], sizes = [8, 1], strides = [1, 1]} : vector<8x8xf32> to vector<8x1xf32>
    %325 = vector.extract_strided_slice %291 {offsets = [5, 0], sizes = [1, 256], strides = [1, 1]} : vector<8x256xf32> to vector<1x256xf32>
    %326 = vector.broadcast %324 : vector<8x1xf32> to vector<8x256xf32>
    %327 = vector.broadcast %325 : vector<1x256xf32> to vector<8x256xf32>
    %328 = arith.mulf %326, %327 : vector<8x256xf32>
    %329 = arith.addf %323, %328 : vector<8x256xf32>
    %330 = vector.extract_strided_slice %293 {offsets = [0, 6], sizes = [8, 1], strides = [1, 1]} : vector<8x8xf32> to vector<8x1xf32>
    %331 = vector.extract_strided_slice %291 {offsets = [6, 0], sizes = [1, 256], strides = [1, 1]} : vector<8x256xf32> to vector<1x256xf32>
    %332 = vector.broadcast %330 : vector<8x1xf32> to vector<8x256xf32>
    %333 = vector.broadcast %331 : vector<1x256xf32> to vector<8x256xf32>
    %334 = arith.mulf %332, %333 : vector<8x256xf32>
    %335 = arith.addf %329, %334 : vector<8x256xf32>
    %336 = vector.extract_strided_slice %293 {offsets = [0, 7], sizes = [8, 1], strides = [1, 1]} : vector<8x8xf32> to vector<8x1xf32>
    %337 = vector.extract_strided_slice %291 {offsets = [7, 0], sizes = [1, 256], strides = [1, 1]} : vector<8x256xf32> to vector<1x256xf32>
    %338 = vector.broadcast %336 : vector<8x1xf32> to vector<8x256xf32>
    %339 = vector.broadcast %337 : vector<1x256xf32> to vector<8x256xf32>
    %340 = arith.mulf %338, %339 : vector<8x256xf32>
    %341 = arith.addf %335, %340 : vector<8x256xf32>
    %c16_i32_18 = arith.constant 16 : i32
    %342 = tpu.dynamic_rotate %285 by %c16_i32_18 dim 1 : vector<8x256xf32>, i32 -> vector<8x256xf32>
    %343 = vector.extract_strided_slice %0 {offsets = [1, 0, 0], sizes = [1, 1, 256], strides = [1, 1, 1]} : vector<9x1x256xf32> to vector<1x1x256xf32>
    %344 = vector.shape_cast %343 : vector<1x1x256xf32> to vector<1x256xf32>
    %345 = vector.broadcast %344 : vector<1x256xf32> to vector<8x256xf32>
    %346 = arith.mulf %342, %345 : vector<8x256xf32>
    %347 = vector.extract_strided_slice %2 {offsets = [1, 0, 0], sizes = [1, 8, 8], strides = [1, 1, 1]} : vector<9x8x8xf32> to vector<1x8x8xf32>
    %348 = vector.shape_cast %347 : vector<1x8x8xf32> to vector<8x8xf32>
    %349 = vector.extract_strided_slice %348 {offsets = [0, 0], sizes = [8, 1], strides = [1, 1]} : vector<8x8xf32> to vector<8x1xf32>
    %350 = vector.extract_strided_slice %346 {offsets = [0, 0], sizes = [1, 256], strides = [1, 1]} : vector<8x256xf32> to vector<1x256xf32>
    %351 = vector.broadcast %349 : vector<8x1xf32> to vector<8x256xf32>
    %352 = vector.broadcast %350 : vector<1x256xf32> to vector<8x256xf32>
    %353 = arith.mulf %351, %352 : vector<8x256xf32>
    %354 = arith.addf %341, %353 : vector<8x256xf32>
    %355 = vector.extract_strided_slice %348 {offsets = [0, 1], sizes = [8, 1], strides = [1, 1]} : vector<8x8xf32> to vector<8x1xf32>
    %356 = vector.extract_strided_slice %346 {offsets = [1, 0], sizes = [1, 256], strides = [1, 1]} : vector<8x256xf32> to vector<1x256xf32>
    %357 = vector.broadcast %355 : vector<8x1xf32> to vector<8x256xf32>
    %358 = vector.broadcast %356 : vector<1x256xf32> to vector<8x256xf32>
    %359 = arith.mulf %357, %358 : vector<8x256xf32>
    %360 = arith.addf %354, %359 : vector<8x256xf32>
    %361 = vector.extract_strided_slice %348 {offsets = [0, 2], sizes = [8, 1], strides = [1, 1]} : vector<8x8xf32> to vector<8x1xf32>
    %362 = vector.extract_strided_slice %346 {offsets = [2, 0], sizes = [1, 256], strides = [1, 1]} : vector<8x256xf32> to vector<1x256xf32>
    %363 = vector.broadcast %361 : vector<8x1xf32> to vector<8x256xf32>
    %364 = vector.broadcast %362 : vector<1x256xf32> to vector<8x256xf32>
    %365 = arith.mulf %363, %364 : vector<8x256xf32>
    %366 = arith.addf %360, %365 : vector<8x256xf32>
    %367 = vector.extract_strided_slice %348 {offsets = [0, 3], sizes = [8, 1], strides = [1, 1]} : vector<8x8xf32> to vector<8x1xf32>
    %368 = vector.extract_strided_slice %346 {offsets = [3, 0], sizes = [1, 256], strides = [1, 1]} : vector<8x256xf32> to vector<1x256xf32>
    %369 = vector.broadcast %367 : vector<8x1xf32> to vector<8x256xf32>
    %370 = vector.broadcast %368 : vector<1x256xf32> to vector<8x256xf32>
    %371 = arith.mulf %369, %370 : vector<8x256xf32>
    %372 = arith.addf %366, %371 : vector<8x256xf32>
    %373 = vector.extract_strided_slice %348 {offsets = [0, 4], sizes = [8, 1], strides = [1, 1]} : vector<8x8xf32> to vector<8x1xf32>
    %374 = vector.extract_strided_slice %346 {offsets = [4, 0], sizes = [1, 256], strides = [1, 1]} : vector<8x256xf32> to vector<1x256xf32>
    %375 = vector.broadcast %373 : vector<8x1xf32> to vector<8x256xf32>
    %376 = vector.broadcast %374 : vector<1x256xf32> to vector<8x256xf32>
    %377 = arith.mulf %375, %376 : vector<8x256xf32>
    %378 = arith.addf %372, %377 : vector<8x256xf32>
    %379 = vector.extract_strided_slice %348 {offsets = [0, 5], sizes = [8, 1], strides = [1, 1]} : vector<8x8xf32> to vector<8x1xf32>
    %380 = vector.extract_strided_slice %346 {offsets = [5, 0], sizes = [1, 256], strides = [1, 1]} : vector<8x256xf32> to vector<1x256xf32>
    %381 = vector.broadcast %379 : vector<8x1xf32> to vector<8x256xf32>
    %382 = vector.broadcast %380 : vector<1x256xf32> to vector<8x256xf32>
    %383 = arith.mulf %381, %382 : vector<8x256xf32>
    %384 = arith.addf %378, %383 : vector<8x256xf32>
    %385 = vector.extract_strided_slice %348 {offsets = [0, 6], sizes = [8, 1], strides = [1, 1]} : vector<8x8xf32> to vector<8x1xf32>
    %386 = vector.extract_strided_slice %346 {offsets = [6, 0], sizes = [1, 256], strides = [1, 1]} : vector<8x256xf32> to vector<1x256xf32>
    %387 = vector.broadcast %385 : vector<8x1xf32> to vector<8x256xf32>
    %388 = vector.broadcast %386 : vector<1x256xf32> to vector<8x256xf32>
    %389 = arith.mulf %387, %388 : vector<8x256xf32>
    %390 = arith.addf %384, %389 : vector<8x256xf32>
    %391 = vector.extract_strided_slice %348 {offsets = [0, 7], sizes = [8, 1], strides = [1, 1]} : vector<8x8xf32> to vector<8x1xf32>
    %392 = vector.extract_strided_slice %346 {offsets = [7, 0], sizes = [1, 256], strides = [1, 1]} : vector<8x256xf32> to vector<1x256xf32>
    %393 = vector.broadcast %391 : vector<8x1xf32> to vector<8x256xf32>
    %394 = vector.broadcast %392 : vector<1x256xf32> to vector<8x256xf32>
    %395 = arith.mulf %393, %394 : vector<8x256xf32>
    %396 = arith.addf %390, %395 : vector<8x256xf32>
    %c15_i32_19 = arith.constant 15 : i32
    %397 = tpu.dynamic_rotate %285 by %c15_i32_19 dim 1 : vector<8x256xf32>, i32 -> vector<8x256xf32>
    %398 = vector.extract_strided_slice %0 {offsets = [2, 0, 0], sizes = [1, 1, 256], strides = [1, 1, 1]} : vector<9x1x256xf32> to vector<1x1x256xf32>
    %399 = vector.shape_cast %398 : vector<1x1x256xf32> to vector<1x256xf32>
    %400 = vector.broadcast %399 : vector<1x256xf32> to vector<8x256xf32>
    %401 = arith.mulf %397, %400 : vector<8x256xf32>
    %402 = vector.extract_strided_slice %2 {offsets = [2, 0, 0], sizes = [1, 8, 8], strides = [1, 1, 1]} : vector<9x8x8xf32> to vector<1x8x8xf32>
    %403 = vector.shape_cast %402 : vector<1x8x8xf32> to vector<8x8xf32>
    %404 = vector.extract_strided_slice %403 {offsets = [0, 0], sizes = [8, 1], strides = [1, 1]} : vector<8x8xf32> to vector<8x1xf32>
    %405 = vector.extract_strided_slice %401 {offsets = [0, 0], sizes = [1, 256], strides = [1, 1]} : vector<8x256xf32> to vector<1x256xf32>
    %406 = vector.broadcast %404 : vector<8x1xf32> to vector<8x256xf32>
    %407 = vector.broadcast %405 : vector<1x256xf32> to vector<8x256xf32>
    %408 = arith.mulf %406, %407 : vector<8x256xf32>
    %409 = arith.addf %396, %408 : vector<8x256xf32>
    %410 = vector.extract_strided_slice %403 {offsets = [0, 1], sizes = [8, 1], strides = [1, 1]} : vector<8x8xf32> to vector<8x1xf32>
    %411 = vector.extract_strided_slice %401 {offsets = [1, 0], sizes = [1, 256], strides = [1, 1]} : vector<8x256xf32> to vector<1x256xf32>
    %412 = vector.broadcast %410 : vector<8x1xf32> to vector<8x256xf32>
    %413 = vector.broadcast %411 : vector<1x256xf32> to vector<8x256xf32>
    %414 = arith.mulf %412, %413 : vector<8x256xf32>
    %415 = arith.addf %409, %414 : vector<8x256xf32>
    %416 = vector.extract_strided_slice %403 {offsets = [0, 2], sizes = [8, 1], strides = [1, 1]} : vector<8x8xf32> to vector<8x1xf32>
    %417 = vector.extract_strided_slice %401 {offsets = [2, 0], sizes = [1, 256], strides = [1, 1]} : vector<8x256xf32> to vector<1x256xf32>
    %418 = vector.broadcast %416 : vector<8x1xf32> to vector<8x256xf32>
    %419 = vector.broadcast %417 : vector<1x256xf32> to vector<8x256xf32>
    %420 = arith.mulf %418, %419 : vector<8x256xf32>
    %421 = arith.addf %415, %420 : vector<8x256xf32>
    %422 = vector.extract_strided_slice %403 {offsets = [0, 3], sizes = [8, 1], strides = [1, 1]} : vector<8x8xf32> to vector<8x1xf32>
    %423 = vector.extract_strided_slice %401 {offsets = [3, 0], sizes = [1, 256], strides = [1, 1]} : vector<8x256xf32> to vector<1x256xf32>
    %424 = vector.broadcast %422 : vector<8x1xf32> to vector<8x256xf32>
    %425 = vector.broadcast %423 : vector<1x256xf32> to vector<8x256xf32>
    %426 = arith.mulf %424, %425 : vector<8x256xf32>
    %427 = arith.addf %421, %426 : vector<8x256xf32>
    %428 = vector.extract_strided_slice %403 {offsets = [0, 4], sizes = [8, 1], strides = [1, 1]} : vector<8x8xf32> to vector<8x1xf32>
    %429 = vector.extract_strided_slice %401 {offsets = [4, 0], sizes = [1, 256], strides = [1, 1]} : vector<8x256xf32> to vector<1x256xf32>
    %430 = vector.broadcast %428 : vector<8x1xf32> to vector<8x256xf32>
    %431 = vector.broadcast %429 : vector<1x256xf32> to vector<8x256xf32>
    %432 = arith.mulf %430, %431 : vector<8x256xf32>
    %433 = arith.addf %427, %432 : vector<8x256xf32>
    %434 = vector.extract_strided_slice %403 {offsets = [0, 5], sizes = [8, 1], strides = [1, 1]} : vector<8x8xf32> to vector<8x1xf32>
    %435 = vector.extract_strided_slice %401 {offsets = [5, 0], sizes = [1, 256], strides = [1, 1]} : vector<8x256xf32> to vector<1x256xf32>
    %436 = vector.broadcast %434 : vector<8x1xf32> to vector<8x256xf32>
    %437 = vector.broadcast %435 : vector<1x256xf32> to vector<8x256xf32>
    %438 = arith.mulf %436, %437 : vector<8x256xf32>
    %439 = arith.addf %433, %438 : vector<8x256xf32>
    %440 = vector.extract_strided_slice %403 {offsets = [0, 6], sizes = [8, 1], strides = [1, 1]} : vector<8x8xf32> to vector<8x1xf32>
    %441 = vector.extract_strided_slice %401 {offsets = [6, 0], sizes = [1, 256], strides = [1, 1]} : vector<8x256xf32> to vector<1x256xf32>
    %442 = vector.broadcast %440 : vector<8x1xf32> to vector<8x256xf32>
    %443 = vector.broadcast %441 : vector<1x256xf32> to vector<8x256xf32>
    %444 = arith.mulf %442, %443 : vector<8x256xf32>
    %445 = arith.addf %439, %444 : vector<8x256xf32>
    %446 = vector.extract_strided_slice %403 {offsets = [0, 7], sizes = [8, 1], strides = [1, 1]} : vector<8x8xf32> to vector<8x1xf32>
    %447 = vector.extract_strided_slice %401 {offsets = [7, 0], sizes = [1, 256], strides = [1, 1]} : vector<8x256xf32> to vector<1x256xf32>
    %448 = vector.broadcast %446 : vector<8x1xf32> to vector<8x256xf32>
    %449 = vector.broadcast %447 : vector<1x256xf32> to vector<8x256xf32>
    %450 = arith.mulf %448, %449 : vector<8x256xf32>
    %451 = arith.addf %445, %450 : vector<8x256xf32>
    %c1_i32_20 = arith.constant 1 : i32
    %452 = tpu.dynamic_rotate %285 by %c1_i32_20 dim 1 : vector<8x256xf32>, i32 -> vector<8x256xf32>
    %453 = vector.extract_strided_slice %0 {offsets = [3, 0, 0], sizes = [1, 1, 256], strides = [1, 1, 1]} : vector<9x1x256xf32> to vector<1x1x256xf32>
    %454 = vector.shape_cast %453 : vector<1x1x256xf32> to vector<1x256xf32>
    %455 = vector.broadcast %454 : vector<1x256xf32> to vector<8x256xf32>
    %456 = arith.mulf %452, %455 : vector<8x256xf32>
    %457 = vector.extract_strided_slice %2 {offsets = [3, 0, 0], sizes = [1, 8, 8], strides = [1, 1, 1]} : vector<9x8x8xf32> to vector<1x8x8xf32>
    %458 = vector.shape_cast %457 : vector<1x8x8xf32> to vector<8x8xf32>
    %459 = vector.extract_strided_slice %458 {offsets = [0, 0], sizes = [8, 1], strides = [1, 1]} : vector<8x8xf32> to vector<8x1xf32>
    %460 = vector.extract_strided_slice %456 {offsets = [0, 0], sizes = [1, 256], strides = [1, 1]} : vector<8x256xf32> to vector<1x256xf32>
    %461 = vector.broadcast %459 : vector<8x1xf32> to vector<8x256xf32>
    %462 = vector.broadcast %460 : vector<1x256xf32> to vector<8x256xf32>
    %463 = arith.mulf %461, %462 : vector<8x256xf32>
    %464 = arith.addf %451, %463 : vector<8x256xf32>
    %465 = vector.extract_strided_slice %458 {offsets = [0, 1], sizes = [8, 1], strides = [1, 1]} : vector<8x8xf32> to vector<8x1xf32>
    %466 = vector.extract_strided_slice %456 {offsets = [1, 0], sizes = [1, 256], strides = [1, 1]} : vector<8x256xf32> to vector<1x256xf32>
    %467 = vector.broadcast %465 : vector<8x1xf32> to vector<8x256xf32>
    %468 = vector.broadcast %466 : vector<1x256xf32> to vector<8x256xf32>
    %469 = arith.mulf %467, %468 : vector<8x256xf32>
    %470 = arith.addf %464, %469 : vector<8x256xf32>
    %471 = vector.extract_strided_slice %458 {offsets = [0, 2], sizes = [8, 1], strides = [1, 1]} : vector<8x8xf32> to vector<8x1xf32>
    %472 = vector.extract_strided_slice %456 {offsets = [2, 0], sizes = [1, 256], strides = [1, 1]} : vector<8x256xf32> to vector<1x256xf32>
    %473 = vector.broadcast %471 : vector<8x1xf32> to vector<8x256xf32>
    %474 = vector.broadcast %472 : vector<1x256xf32> to vector<8x256xf32>
    %475 = arith.mulf %473, %474 : vector<8x256xf32>
    %476 = arith.addf %470, %475 : vector<8x256xf32>
    %477 = vector.extract_strided_slice %458 {offsets = [0, 3], sizes = [8, 1], strides = [1, 1]} : vector<8x8xf32> to vector<8x1xf32>
    %478 = vector.extract_strided_slice %456 {offsets = [3, 0], sizes = [1, 256], strides = [1, 1]} : vector<8x256xf32> to vector<1x256xf32>
    %479 = vector.broadcast %477 : vector<8x1xf32> to vector<8x256xf32>
    %480 = vector.broadcast %478 : vector<1x256xf32> to vector<8x256xf32>
    %481 = arith.mulf %479, %480 : vector<8x256xf32>
    %482 = arith.addf %476, %481 : vector<8x256xf32>
    %483 = vector.extract_strided_slice %458 {offsets = [0, 4], sizes = [8, 1], strides = [1, 1]} : vector<8x8xf32> to vector<8x1xf32>
    %484 = vector.extract_strided_slice %456 {offsets = [4, 0], sizes = [1, 256], strides = [1, 1]} : vector<8x256xf32> to vector<1x256xf32>
    %485 = vector.broadcast %483 : vector<8x1xf32> to vector<8x256xf32>
    %486 = vector.broadcast %484 : vector<1x256xf32> to vector<8x256xf32>
    %487 = arith.mulf %485, %486 : vector<8x256xf32>
    %488 = arith.addf %482, %487 : vector<8x256xf32>
    %489 = vector.extract_strided_slice %458 {offsets = [0, 5], sizes = [8, 1], strides = [1, 1]} : vector<8x8xf32> to vector<8x1xf32>
    %490 = vector.extract_strided_slice %456 {offsets = [5, 0], sizes = [1, 256], strides = [1, 1]} : vector<8x256xf32> to vector<1x256xf32>
    %491 = vector.broadcast %489 : vector<8x1xf32> to vector<8x256xf32>
    %492 = vector.broadcast %490 : vector<1x256xf32> to vector<8x256xf32>
    %493 = arith.mulf %491, %492 : vector<8x256xf32>
    %494 = arith.addf %488, %493 : vector<8x256xf32>
    %495 = vector.extract_strided_slice %458 {offsets = [0, 6], sizes = [8, 1], strides = [1, 1]} : vector<8x8xf32> to vector<8x1xf32>
    %496 = vector.extract_strided_slice %456 {offsets = [6, 0], sizes = [1, 256], strides = [1, 1]} : vector<8x256xf32> to vector<1x256xf32>
    %497 = vector.broadcast %495 : vector<8x1xf32> to vector<8x256xf32>
    %498 = vector.broadcast %496 : vector<1x256xf32> to vector<8x256xf32>
    %499 = arith.mulf %497, %498 : vector<8x256xf32>
    %500 = arith.addf %494, %499 : vector<8x256xf32>
    %501 = vector.extract_strided_slice %458 {offsets = [0, 7], sizes = [8, 1], strides = [1, 1]} : vector<8x8xf32> to vector<8x1xf32>
    %502 = vector.extract_strided_slice %456 {offsets = [7, 0], sizes = [1, 256], strides = [1, 1]} : vector<8x256xf32> to vector<1x256xf32>
    %503 = vector.broadcast %501 : vector<8x1xf32> to vector<8x256xf32>
    %504 = vector.broadcast %502 : vector<1x256xf32> to vector<8x256xf32>
    %505 = arith.mulf %503, %504 : vector<8x256xf32>
    %506 = arith.addf %500, %505 : vector<8x256xf32>
    %507 = vector.extract_strided_slice %2 {offsets = [4, 0, 0], sizes = [1, 8, 8], strides = [1, 1, 1]} : vector<9x8x8xf32> to vector<1x8x8xf32>
    %508 = vector.shape_cast %507 : vector<1x8x8xf32> to vector<8x8xf32>
    %509 = vector.extract_strided_slice %508 {offsets = [0, 0], sizes = [8, 1], strides = [1, 1]} : vector<8x8xf32> to vector<8x1xf32>
    %510 = vector.extract_strided_slice %285 {offsets = [0, 0], sizes = [1, 256], strides = [1, 1]} : vector<8x256xf32> to vector<1x256xf32>
    %511 = vector.broadcast %509 : vector<8x1xf32> to vector<8x256xf32>
    %512 = vector.broadcast %510 : vector<1x256xf32> to vector<8x256xf32>
    %513 = arith.mulf %511, %512 : vector<8x256xf32>
    %514 = arith.addf %506, %513 : vector<8x256xf32>
    %515 = vector.extract_strided_slice %508 {offsets = [0, 1], sizes = [8, 1], strides = [1, 1]} : vector<8x8xf32> to vector<8x1xf32>
    %516 = vector.extract_strided_slice %285 {offsets = [1, 0], sizes = [1, 256], strides = [1, 1]} : vector<8x256xf32> to vector<1x256xf32>
    %517 = vector.broadcast %515 : vector<8x1xf32> to vector<8x256xf32>
    %518 = vector.broadcast %516 : vector<1x256xf32> to vector<8x256xf32>
    %519 = arith.mulf %517, %518 : vector<8x256xf32>
    %520 = arith.addf %514, %519 : vector<8x256xf32>
    %521 = vector.extract_strided_slice %508 {offsets = [0, 2], sizes = [8, 1], strides = [1, 1]} : vector<8x8xf32> to vector<8x1xf32>
    %522 = vector.extract_strided_slice %285 {offsets = [2, 0], sizes = [1, 256], strides = [1, 1]} : vector<8x256xf32> to vector<1x256xf32>
    %523 = vector.broadcast %521 : vector<8x1xf32> to vector<8x256xf32>
    %524 = vector.broadcast %522 : vector<1x256xf32> to vector<8x256xf32>
    %525 = arith.mulf %523, %524 : vector<8x256xf32>
    %526 = arith.addf %520, %525 : vector<8x256xf32>
    %527 = vector.extract_strided_slice %508 {offsets = [0, 3], sizes = [8, 1], strides = [1, 1]} : vector<8x8xf32> to vector<8x1xf32>
    %528 = vector.extract_strided_slice %285 {offsets = [3, 0], sizes = [1, 256], strides = [1, 1]} : vector<8x256xf32> to vector<1x256xf32>
    %529 = vector.broadcast %527 : vector<8x1xf32> to vector<8x256xf32>
    %530 = vector.broadcast %528 : vector<1x256xf32> to vector<8x256xf32>
    %531 = arith.mulf %529, %530 : vector<8x256xf32>
    %532 = arith.addf %526, %531 : vector<8x256xf32>
    %533 = vector.extract_strided_slice %508 {offsets = [0, 4], sizes = [8, 1], strides = [1, 1]} : vector<8x8xf32> to vector<8x1xf32>
    %534 = vector.extract_strided_slice %285 {offsets = [4, 0], sizes = [1, 256], strides = [1, 1]} : vector<8x256xf32> to vector<1x256xf32>
    %535 = vector.broadcast %533 : vector<8x1xf32> to vector<8x256xf32>
    %536 = vector.broadcast %534 : vector<1x256xf32> to vector<8x256xf32>
    %537 = arith.mulf %535, %536 : vector<8x256xf32>
    %538 = arith.addf %532, %537 : vector<8x256xf32>
    %539 = vector.extract_strided_slice %508 {offsets = [0, 5], sizes = [8, 1], strides = [1, 1]} : vector<8x8xf32> to vector<8x1xf32>
    %540 = vector.extract_strided_slice %285 {offsets = [5, 0], sizes = [1, 256], strides = [1, 1]} : vector<8x256xf32> to vector<1x256xf32>
    %541 = vector.broadcast %539 : vector<8x1xf32> to vector<8x256xf32>
    %542 = vector.broadcast %540 : vector<1x256xf32> to vector<8x256xf32>
    %543 = arith.mulf %541, %542 : vector<8x256xf32>
    %544 = arith.addf %538, %543 : vector<8x256xf32>
    %545 = vector.extract_strided_slice %508 {offsets = [0, 6], sizes = [8, 1], strides = [1, 1]} : vector<8x8xf32> to vector<8x1xf32>
    %546 = vector.extract_strided_slice %285 {offsets = [6, 0], sizes = [1, 256], strides = [1, 1]} : vector<8x256xf32> to vector<1x256xf32>
    %547 = vector.broadcast %545 : vector<8x1xf32> to vector<8x256xf32>
    %548 = vector.broadcast %546 : vector<1x256xf32> to vector<8x256xf32>
    %549 = arith.mulf %547, %548 : vector<8x256xf32>
    %550 = arith.addf %544, %549 : vector<8x256xf32>
    %551 = vector.extract_strided_slice %508 {offsets = [0, 7], sizes = [8, 1], strides = [1, 1]} : vector<8x8xf32> to vector<8x1xf32>
    %552 = vector.extract_strided_slice %285 {offsets = [7, 0], sizes = [1, 256], strides = [1, 1]} : vector<8x256xf32> to vector<1x256xf32>
    %553 = vector.broadcast %551 : vector<8x1xf32> to vector<8x256xf32>
    %554 = vector.broadcast %552 : vector<1x256xf32> to vector<8x256xf32>
    %555 = arith.mulf %553, %554 : vector<8x256xf32>
    %556 = arith.addf %550, %555 : vector<8x256xf32>
    %c255_i32_21 = arith.constant 255 : i32
    %557 = tpu.dynamic_rotate %285 by %c255_i32_21 dim 1 : vector<8x256xf32>, i32 -> vector<8x256xf32>
    %558 = vector.extract_strided_slice %0 {offsets = [5, 0, 0], sizes = [1, 1, 256], strides = [1, 1, 1]} : vector<9x1x256xf32> to vector<1x1x256xf32>
    %559 = vector.shape_cast %558 : vector<1x1x256xf32> to vector<1x256xf32>
    %560 = vector.broadcast %559 : vector<1x256xf32> to vector<8x256xf32>
    %561 = arith.mulf %557, %560 : vector<8x256xf32>
    %562 = vector.extract_strided_slice %2 {offsets = [5, 0, 0], sizes = [1, 8, 8], strides = [1, 1, 1]} : vector<9x8x8xf32> to vector<1x8x8xf32>
    %563 = vector.shape_cast %562 : vector<1x8x8xf32> to vector<8x8xf32>
    %564 = vector.extract_strided_slice %563 {offsets = [0, 0], sizes = [8, 1], strides = [1, 1]} : vector<8x8xf32> to vector<8x1xf32>
    %565 = vector.extract_strided_slice %561 {offsets = [0, 0], sizes = [1, 256], strides = [1, 1]} : vector<8x256xf32> to vector<1x256xf32>
    %566 = vector.broadcast %564 : vector<8x1xf32> to vector<8x256xf32>
    %567 = vector.broadcast %565 : vector<1x256xf32> to vector<8x256xf32>
    %568 = arith.mulf %566, %567 : vector<8x256xf32>
    %569 = arith.addf %556, %568 : vector<8x256xf32>
    %570 = vector.extract_strided_slice %563 {offsets = [0, 1], sizes = [8, 1], strides = [1, 1]} : vector<8x8xf32> to vector<8x1xf32>
    %571 = vector.extract_strided_slice %561 {offsets = [1, 0], sizes = [1, 256], strides = [1, 1]} : vector<8x256xf32> to vector<1x256xf32>
    %572 = vector.broadcast %570 : vector<8x1xf32> to vector<8x256xf32>
    %573 = vector.broadcast %571 : vector<1x256xf32> to vector<8x256xf32>
    %574 = arith.mulf %572, %573 : vector<8x256xf32>
    %575 = arith.addf %569, %574 : vector<8x256xf32>
    %576 = vector.extract_strided_slice %563 {offsets = [0, 2], sizes = [8, 1], strides = [1, 1]} : vector<8x8xf32> to vector<8x1xf32>
    %577 = vector.extract_strided_slice %561 {offsets = [2, 0], sizes = [1, 256], strides = [1, 1]} : vector<8x256xf32> to vector<1x256xf32>
    %578 = vector.broadcast %576 : vector<8x1xf32> to vector<8x256xf32>
    %579 = vector.broadcast %577 : vector<1x256xf32> to vector<8x256xf32>
    %580 = arith.mulf %578, %579 : vector<8x256xf32>
    %581 = arith.addf %575, %580 : vector<8x256xf32>
    %582 = vector.extract_strided_slice %563 {offsets = [0, 3], sizes = [8, 1], strides = [1, 1]} : vector<8x8xf32> to vector<8x1xf32>
    %583 = vector.extract_strided_slice %561 {offsets = [3, 0], sizes = [1, 256], strides = [1, 1]} : vector<8x256xf32> to vector<1x256xf32>
    %584 = vector.broadcast %582 : vector<8x1xf32> to vector<8x256xf32>
    %585 = vector.broadcast %583 : vector<1x256xf32> to vector<8x256xf32>
    %586 = arith.mulf %584, %585 : vector<8x256xf32>
    %587 = arith.addf %581, %586 : vector<8x256xf32>
    %588 = vector.extract_strided_slice %563 {offsets = [0, 4], sizes = [8, 1], strides = [1, 1]} : vector<8x8xf32> to vector<8x1xf32>
    %589 = vector.extract_strided_slice %561 {offsets = [4, 0], sizes = [1, 256], strides = [1, 1]} : vector<8x256xf32> to vector<1x256xf32>
    %590 = vector.broadcast %588 : vector<8x1xf32> to vector<8x256xf32>
    %591 = vector.broadcast %589 : vector<1x256xf32> to vector<8x256xf32>
    %592 = arith.mulf %590, %591 : vector<8x256xf32>
    %593 = arith.addf %587, %592 : vector<8x256xf32>
    %594 = vector.extract_strided_slice %563 {offsets = [0, 5], sizes = [8, 1], strides = [1, 1]} : vector<8x8xf32> to vector<8x1xf32>
    %595 = vector.extract_strided_slice %561 {offsets = [5, 0], sizes = [1, 256], strides = [1, 1]} : vector<8x256xf32> to vector<1x256xf32>
    %596 = vector.broadcast %594 : vector<8x1xf32> to vector<8x256xf32>
    %597 = vector.broadcast %595 : vector<1x256xf32> to vector<8x256xf32>
    %598 = arith.mulf %596, %597 : vector<8x256xf32>
    %599 = arith.addf %593, %598 : vector<8x256xf32>
    %600 = vector.extract_strided_slice %563 {offsets = [0, 6], sizes = [8, 1], strides = [1, 1]} : vector<8x8xf32> to vector<8x1xf32>
    %601 = vector.extract_strided_slice %561 {offsets = [6, 0], sizes = [1, 256], strides = [1, 1]} : vector<8x256xf32> to vector<1x256xf32>
    %602 = vector.broadcast %600 : vector<8x1xf32> to vector<8x256xf32>
    %603 = vector.broadcast %601 : vector<1x256xf32> to vector<8x256xf32>
    %604 = arith.mulf %602, %603 : vector<8x256xf32>
    %605 = arith.addf %599, %604 : vector<8x256xf32>
    %606 = vector.extract_strided_slice %563 {offsets = [0, 7], sizes = [8, 1], strides = [1, 1]} : vector<8x8xf32> to vector<8x1xf32>
    %607 = vector.extract_strided_slice %561 {offsets = [7, 0], sizes = [1, 256], strides = [1, 1]} : vector<8x256xf32> to vector<1x256xf32>
    %608 = vector.broadcast %606 : vector<8x1xf32> to vector<8x256xf32>
    %609 = vector.broadcast %607 : vector<1x256xf32> to vector<8x256xf32>
    %610 = arith.mulf %608, %609 : vector<8x256xf32>
    %611 = arith.addf %605, %610 : vector<8x256xf32>
    %c241_i32_22 = arith.constant 241 : i32
    %612 = tpu.dynamic_rotate %285 by %c241_i32_22 dim 1 : vector<8x256xf32>, i32 -> vector<8x256xf32>
    %613 = vector.extract_strided_slice %0 {offsets = [6, 0, 0], sizes = [1, 1, 256], strides = [1, 1, 1]} : vector<9x1x256xf32> to vector<1x1x256xf32>
    %614 = vector.shape_cast %613 : vector<1x1x256xf32> to vector<1x256xf32>
    %615 = vector.broadcast %614 : vector<1x256xf32> to vector<8x256xf32>
    %616 = arith.mulf %612, %615 : vector<8x256xf32>
    %617 = vector.extract_strided_slice %2 {offsets = [6, 0, 0], sizes = [1, 8, 8], strides = [1, 1, 1]} : vector<9x8x8xf32> to vector<1x8x8xf32>
    %618 = vector.shape_cast %617 : vector<1x8x8xf32> to vector<8x8xf32>
    %619 = vector.extract_strided_slice %618 {offsets = [0, 0], sizes = [8, 1], strides = [1, 1]} : vector<8x8xf32> to vector<8x1xf32>
    %620 = vector.extract_strided_slice %616 {offsets = [0, 0], sizes = [1, 256], strides = [1, 1]} : vector<8x256xf32> to vector<1x256xf32>
    %621 = vector.broadcast %619 : vector<8x1xf32> to vector<8x256xf32>
    %622 = vector.broadcast %620 : vector<1x256xf32> to vector<8x256xf32>
    %623 = arith.mulf %621, %622 : vector<8x256xf32>
    %624 = arith.addf %611, %623 : vector<8x256xf32>
    %625 = vector.extract_strided_slice %618 {offsets = [0, 1], sizes = [8, 1], strides = [1, 1]} : vector<8x8xf32> to vector<8x1xf32>
    %626 = vector.extract_strided_slice %616 {offsets = [1, 0], sizes = [1, 256], strides = [1, 1]} : vector<8x256xf32> to vector<1x256xf32>
    %627 = vector.broadcast %625 : vector<8x1xf32> to vector<8x256xf32>
    %628 = vector.broadcast %626 : vector<1x256xf32> to vector<8x256xf32>
    %629 = arith.mulf %627, %628 : vector<8x256xf32>
    %630 = arith.addf %624, %629 : vector<8x256xf32>
    %631 = vector.extract_strided_slice %618 {offsets = [0, 2], sizes = [8, 1], strides = [1, 1]} : vector<8x8xf32> to vector<8x1xf32>
    %632 = vector.extract_strided_slice %616 {offsets = [2, 0], sizes = [1, 256], strides = [1, 1]} : vector<8x256xf32> to vector<1x256xf32>
    %633 = vector.broadcast %631 : vector<8x1xf32> to vector<8x256xf32>
    %634 = vector.broadcast %632 : vector<1x256xf32> to vector<8x256xf32>
    %635 = arith.mulf %633, %634 : vector<8x256xf32>
    %636 = arith.addf %630, %635 : vector<8x256xf32>
    %637 = vector.extract_strided_slice %618 {offsets = [0, 3], sizes = [8, 1], strides = [1, 1]} : vector<8x8xf32> to vector<8x1xf32>
    %638 = vector.extract_strided_slice %616 {offsets = [3, 0], sizes = [1, 256], strides = [1, 1]} : vector<8x256xf32> to vector<1x256xf32>
    %639 = vector.broadcast %637 : vector<8x1xf32> to vector<8x256xf32>
    %640 = vector.broadcast %638 : vector<1x256xf32> to vector<8x256xf32>
    %641 = arith.mulf %639, %640 : vector<8x256xf32>
    %642 = arith.addf %636, %641 : vector<8x256xf32>
    %643 = vector.extract_strided_slice %618 {offsets = [0, 4], sizes = [8, 1], strides = [1, 1]} : vector<8x8xf32> to vector<8x1xf32>
    %644 = vector.extract_strided_slice %616 {offsets = [4, 0], sizes = [1, 256], strides = [1, 1]} : vector<8x256xf32> to vector<1x256xf32>
    %645 = vector.broadcast %643 : vector<8x1xf32> to vector<8x256xf32>
    %646 = vector.broadcast %644 : vector<1x256xf32> to vector<8x256xf32>
    %647 = arith.mulf %645, %646 : vector<8x256xf32>
    %648 = arith.addf %642, %647 : vector<8x256xf32>
    %649 = vector.extract_strided_slice %618 {offsets = [0, 5], sizes = [8, 1], strides = [1, 1]} : vector<8x8xf32> to vector<8x1xf32>
    %650 = vector.extract_strided_slice %616 {offsets = [5, 0], sizes = [1, 256], strides = [1, 1]} : vector<8x256xf32> to vector<1x256xf32>
    %651 = vector.broadcast %649 : vector<8x1xf32> to vector<8x256xf32>
    %652 = vector.broadcast %650 : vector<1x256xf32> to vector<8x256xf32>
    %653 = arith.mulf %651, %652 : vector<8x256xf32>
    %654 = arith.addf %648, %653 : vector<8x256xf32>
    %655 = vector.extract_strided_slice %618 {offsets = [0, 6], sizes = [8, 1], strides = [1, 1]} : vector<8x8xf32> to vector<8x1xf32>
    %656 = vector.extract_strided_slice %616 {offsets = [6, 0], sizes = [1, 256], strides = [1, 1]} : vector<8x256xf32> to vector<1x256xf32>
    %657 = vector.broadcast %655 : vector<8x1xf32> to vector<8x256xf32>
    %658 = vector.broadcast %656 : vector<1x256xf32> to vector<8x256xf32>
    %659 = arith.mulf %657, %658 : vector<8x256xf32>
    %660 = arith.addf %654, %659 : vector<8x256xf32>
    %661 = vector.extract_strided_slice %618 {offsets = [0, 7], sizes = [8, 1], strides = [1, 1]} : vector<8x8xf32> to vector<8x1xf32>
    %662 = vector.extract_strided_slice %616 {offsets = [7, 0], sizes = [1, 256], strides = [1, 1]} : vector<8x256xf32> to vector<1x256xf32>
    %663 = vector.broadcast %661 : vector<8x1xf32> to vector<8x256xf32>
    %664 = vector.broadcast %662 : vector<1x256xf32> to vector<8x256xf32>
    %665 = arith.mulf %663, %664 : vector<8x256xf32>
    %666 = arith.addf %660, %665 : vector<8x256xf32>
    %c240_i32_23 = arith.constant 240 : i32
    %667 = tpu.dynamic_rotate %285 by %c240_i32_23 dim 1 : vector<8x256xf32>, i32 -> vector<8x256xf32>
    %668 = vector.extract_strided_slice %0 {offsets = [7, 0, 0], sizes = [1, 1, 256], strides = [1, 1, 1]} : vector<9x1x256xf32> to vector<1x1x256xf32>
    %669 = vector.shape_cast %668 : vector<1x1x256xf32> to vector<1x256xf32>
    %670 = vector.broadcast %669 : vector<1x256xf32> to vector<8x256xf32>
    %671 = arith.mulf %667, %670 : vector<8x256xf32>
    %672 = vector.extract_strided_slice %2 {offsets = [7, 0, 0], sizes = [1, 8, 8], strides = [1, 1, 1]} : vector<9x8x8xf32> to vector<1x8x8xf32>
    %673 = vector.shape_cast %672 : vector<1x8x8xf32> to vector<8x8xf32>
    %674 = vector.extract_strided_slice %673 {offsets = [0, 0], sizes = [8, 1], strides = [1, 1]} : vector<8x8xf32> to vector<8x1xf32>
    %675 = vector.extract_strided_slice %671 {offsets = [0, 0], sizes = [1, 256], strides = [1, 1]} : vector<8x256xf32> to vector<1x256xf32>
    %676 = vector.broadcast %674 : vector<8x1xf32> to vector<8x256xf32>
    %677 = vector.broadcast %675 : vector<1x256xf32> to vector<8x256xf32>
    %678 = arith.mulf %676, %677 : vector<8x256xf32>
    %679 = arith.addf %666, %678 : vector<8x256xf32>
    %680 = vector.extract_strided_slice %673 {offsets = [0, 1], sizes = [8, 1], strides = [1, 1]} : vector<8x8xf32> to vector<8x1xf32>
    %681 = vector.extract_strided_slice %671 {offsets = [1, 0], sizes = [1, 256], strides = [1, 1]} : vector<8x256xf32> to vector<1x256xf32>
    %682 = vector.broadcast %680 : vector<8x1xf32> to vector<8x256xf32>
    %683 = vector.broadcast %681 : vector<1x256xf32> to vector<8x256xf32>
    %684 = arith.mulf %682, %683 : vector<8x256xf32>
    %685 = arith.addf %679, %684 : vector<8x256xf32>
    %686 = vector.extract_strided_slice %673 {offsets = [0, 2], sizes = [8, 1], strides = [1, 1]} : vector<8x8xf32> to vector<8x1xf32>
    %687 = vector.extract_strided_slice %671 {offsets = [2, 0], sizes = [1, 256], strides = [1, 1]} : vector<8x256xf32> to vector<1x256xf32>
    %688 = vector.broadcast %686 : vector<8x1xf32> to vector<8x256xf32>
    %689 = vector.broadcast %687 : vector<1x256xf32> to vector<8x256xf32>
    %690 = arith.mulf %688, %689 : vector<8x256xf32>
    %691 = arith.addf %685, %690 : vector<8x256xf32>
    %692 = vector.extract_strided_slice %673 {offsets = [0, 3], sizes = [8, 1], strides = [1, 1]} : vector<8x8xf32> to vector<8x1xf32>
    %693 = vector.extract_strided_slice %671 {offsets = [3, 0], sizes = [1, 256], strides = [1, 1]} : vector<8x256xf32> to vector<1x256xf32>
    %694 = vector.broadcast %692 : vector<8x1xf32> to vector<8x256xf32>
    %695 = vector.broadcast %693 : vector<1x256xf32> to vector<8x256xf32>
    %696 = arith.mulf %694, %695 : vector<8x256xf32>
    %697 = arith.addf %691, %696 : vector<8x256xf32>
    %698 = vector.extract_strided_slice %673 {offsets = [0, 4], sizes = [8, 1], strides = [1, 1]} : vector<8x8xf32> to vector<8x1xf32>
    %699 = vector.extract_strided_slice %671 {offsets = [4, 0], sizes = [1, 256], strides = [1, 1]} : vector<8x256xf32> to vector<1x256xf32>
    %700 = vector.broadcast %698 : vector<8x1xf32> to vector<8x256xf32>
    %701 = vector.broadcast %699 : vector<1x256xf32> to vector<8x256xf32>
    %702 = arith.mulf %700, %701 : vector<8x256xf32>
    %703 = arith.addf %697, %702 : vector<8x256xf32>
    %704 = vector.extract_strided_slice %673 {offsets = [0, 5], sizes = [8, 1], strides = [1, 1]} : vector<8x8xf32> to vector<8x1xf32>
    %705 = vector.extract_strided_slice %671 {offsets = [5, 0], sizes = [1, 256], strides = [1, 1]} : vector<8x256xf32> to vector<1x256xf32>
    %706 = vector.broadcast %704 : vector<8x1xf32> to vector<8x256xf32>
    %707 = vector.broadcast %705 : vector<1x256xf32> to vector<8x256xf32>
    %708 = arith.mulf %706, %707 : vector<8x256xf32>
    %709 = arith.addf %703, %708 : vector<8x256xf32>
    %710 = vector.extract_strided_slice %673 {offsets = [0, 6], sizes = [8, 1], strides = [1, 1]} : vector<8x8xf32> to vector<8x1xf32>
    %711 = vector.extract_strided_slice %671 {offsets = [6, 0], sizes = [1, 256], strides = [1, 1]} : vector<8x256xf32> to vector<1x256xf32>
    %712 = vector.broadcast %710 : vector<8x1xf32> to vector<8x256xf32>
    %713 = vector.broadcast %711 : vector<1x256xf32> to vector<8x256xf32>
    %714 = arith.mulf %712, %713 : vector<8x256xf32>
    %715 = arith.addf %709, %714 : vector<8x256xf32>
    %716 = vector.extract_strided_slice %673 {offsets = [0, 7], sizes = [8, 1], strides = [1, 1]} : vector<8x8xf32> to vector<8x1xf32>
    %717 = vector.extract_strided_slice %671 {offsets = [7, 0], sizes = [1, 256], strides = [1, 1]} : vector<8x256xf32> to vector<1x256xf32>
    %718 = vector.broadcast %716 : vector<8x1xf32> to vector<8x256xf32>
    %719 = vector.broadcast %717 : vector<1x256xf32> to vector<8x256xf32>
    %720 = arith.mulf %718, %719 : vector<8x256xf32>
    %721 = arith.addf %715, %720 : vector<8x256xf32>
    %c239_i32_24 = arith.constant 239 : i32
    %722 = tpu.dynamic_rotate %285 by %c239_i32_24 dim 1 : vector<8x256xf32>, i32 -> vector<8x256xf32>
    %723 = vector.extract_strided_slice %0 {offsets = [8, 0, 0], sizes = [1, 1, 256], strides = [1, 1, 1]} : vector<9x1x256xf32> to vector<1x1x256xf32>
    %724 = vector.shape_cast %723 : vector<1x1x256xf32> to vector<1x256xf32>
    %725 = vector.broadcast %724 : vector<1x256xf32> to vector<8x256xf32>
    %726 = arith.mulf %722, %725 : vector<8x256xf32>
    %727 = vector.extract_strided_slice %2 {offsets = [8, 0, 0], sizes = [1, 8, 8], strides = [1, 1, 1]} : vector<9x8x8xf32> to vector<1x8x8xf32>
    %728 = vector.shape_cast %727 : vector<1x8x8xf32> to vector<8x8xf32>
    %729 = vector.extract_strided_slice %728 {offsets = [0, 0], sizes = [8, 1], strides = [1, 1]} : vector<8x8xf32> to vector<8x1xf32>
    %730 = vector.extract_strided_slice %726 {offsets = [0, 0], sizes = [1, 256], strides = [1, 1]} : vector<8x256xf32> to vector<1x256xf32>
    %731 = vector.broadcast %729 : vector<8x1xf32> to vector<8x256xf32>
    %732 = vector.broadcast %730 : vector<1x256xf32> to vector<8x256xf32>
    %733 = arith.mulf %731, %732 : vector<8x256xf32>
    %734 = arith.addf %721, %733 : vector<8x256xf32>
    %735 = vector.extract_strided_slice %728 {offsets = [0, 1], sizes = [8, 1], strides = [1, 1]} : vector<8x8xf32> to vector<8x1xf32>
    %736 = vector.extract_strided_slice %726 {offsets = [1, 0], sizes = [1, 256], strides = [1, 1]} : vector<8x256xf32> to vector<1x256xf32>
    %737 = vector.broadcast %735 : vector<8x1xf32> to vector<8x256xf32>
    %738 = vector.broadcast %736 : vector<1x256xf32> to vector<8x256xf32>
    %739 = arith.mulf %737, %738 : vector<8x256xf32>
    %740 = arith.addf %734, %739 : vector<8x256xf32>
    %741 = vector.extract_strided_slice %728 {offsets = [0, 2], sizes = [8, 1], strides = [1, 1]} : vector<8x8xf32> to vector<8x1xf32>
    %742 = vector.extract_strided_slice %726 {offsets = [2, 0], sizes = [1, 256], strides = [1, 1]} : vector<8x256xf32> to vector<1x256xf32>
    %743 = vector.broadcast %741 : vector<8x1xf32> to vector<8x256xf32>
    %744 = vector.broadcast %742 : vector<1x256xf32> to vector<8x256xf32>
    %745 = arith.mulf %743, %744 : vector<8x256xf32>
    %746 = arith.addf %740, %745 : vector<8x256xf32>
    %747 = vector.extract_strided_slice %728 {offsets = [0, 3], sizes = [8, 1], strides = [1, 1]} : vector<8x8xf32> to vector<8x1xf32>
    %748 = vector.extract_strided_slice %726 {offsets = [3, 0], sizes = [1, 256], strides = [1, 1]} : vector<8x256xf32> to vector<1x256xf32>
    %749 = vector.broadcast %747 : vector<8x1xf32> to vector<8x256xf32>
    %750 = vector.broadcast %748 : vector<1x256xf32> to vector<8x256xf32>
    %751 = arith.mulf %749, %750 : vector<8x256xf32>
    %752 = arith.addf %746, %751 : vector<8x256xf32>
    %753 = vector.extract_strided_slice %728 {offsets = [0, 4], sizes = [8, 1], strides = [1, 1]} : vector<8x8xf32> to vector<8x1xf32>
    %754 = vector.extract_strided_slice %726 {offsets = [4, 0], sizes = [1, 256], strides = [1, 1]} : vector<8x256xf32> to vector<1x256xf32>
    %755 = vector.broadcast %753 : vector<8x1xf32> to vector<8x256xf32>
    %756 = vector.broadcast %754 : vector<1x256xf32> to vector<8x256xf32>
    %757 = arith.mulf %755, %756 : vector<8x256xf32>
    %758 = arith.addf %752, %757 : vector<8x256xf32>
    %759 = vector.extract_strided_slice %728 {offsets = [0, 5], sizes = [8, 1], strides = [1, 1]} : vector<8x8xf32> to vector<8x1xf32>
    %760 = vector.extract_strided_slice %726 {offsets = [5, 0], sizes = [1, 256], strides = [1, 1]} : vector<8x256xf32> to vector<1x256xf32>
    %761 = vector.broadcast %759 : vector<8x1xf32> to vector<8x256xf32>
    %762 = vector.broadcast %760 : vector<1x256xf32> to vector<8x256xf32>
    %763 = arith.mulf %761, %762 : vector<8x256xf32>
    %764 = arith.addf %758, %763 : vector<8x256xf32>
    %765 = vector.extract_strided_slice %728 {offsets = [0, 6], sizes = [8, 1], strides = [1, 1]} : vector<8x8xf32> to vector<8x1xf32>
    %766 = vector.extract_strided_slice %726 {offsets = [6, 0], sizes = [1, 256], strides = [1, 1]} : vector<8x256xf32> to vector<1x256xf32>
    %767 = vector.broadcast %765 : vector<8x1xf32> to vector<8x256xf32>
    %768 = vector.broadcast %766 : vector<1x256xf32> to vector<8x256xf32>
    %769 = arith.mulf %767, %768 : vector<8x256xf32>
    %770 = arith.addf %764, %769 : vector<8x256xf32>
    %771 = vector.extract_strided_slice %728 {offsets = [0, 7], sizes = [8, 1], strides = [1, 1]} : vector<8x8xf32> to vector<8x1xf32>
    %772 = vector.extract_strided_slice %726 {offsets = [7, 0], sizes = [1, 256], strides = [1, 1]} : vector<8x256xf32> to vector<1x256xf32>
    %773 = vector.broadcast %771 : vector<8x1xf32> to vector<8x256xf32>
    %774 = vector.broadcast %772 : vector<1x256xf32> to vector<8x256xf32>
    %775 = arith.mulf %773, %774 : vector<8x256xf32>
    %776 = arith.addf %770, %775 : vector<8x256xf32>
    %777 = vector.broadcast %4 : vector<8x1xf32> to vector<8x256xf32>
    %778 = arith.addf %776, %777 : vector<8x256xf32>
    %cst_25 = arith.constant 0.000000e+00 : f32
    %779 = vector.broadcast %cst_25 : f32 to vector<8x256xf32>
    %780 = arith.maximumf %778, %779 : vector<8x256xf32>
    %c0_26 = arith.constant 0 : index
    %c0_27 = arith.constant 0 : index
    %c0_28 = arith.constant 0 : index
    %781 = vector.load %arg7[%c0_26, %c0_27, %c0_28] : memref<1x8x256xf32, #tpu.memory_space<vmem>>, vector<1x8x256xf32>
    %782 = vector.shape_cast %781 : vector<1x8x256xf32> to vector<8x256xf32>
    %783 = vector.shape_cast %780 : vector<8x256xf32> to vector<1x8x256xf32>
    tpu.vector_store %arg7[%c0_26, %c0_27, %c0_28], %783 {strides = array<i32>} : memref<1x8x256xf32, #tpu.memory_space<vmem>>, vector<1x8x256xf32>,
    return
  }
  func.func @transform_0(%arg0: i32) -> (i32, i32, i32) {
    %c0_i32 = arith.constant 0 : i32
    %c0_i32_0 = arith.constant 0 : i32
    %c0_i32_1 = arith.constant 0 : i32
    return %arg0, %c0_i32, %c0_i32_0 : i32, i32, i32
  }
  func.func @transform_1(%arg0: i32) -> (i32, i32, i32) {
    %c0_i32 = arith.constant 0 : i32
    %c0_i32_0 = arith.constant 0 : i32
    %c0_i32_1 = arith.constant 0 : i32
    %c0_i32_2 = arith.constant 0 : i32
    return %c0_i32, %c0_i32_0, %c0_i32_1 : i32, i32, i32
  }
  func.func @transform_2(%arg0: i32) -> (i32, i32) {
    %c0_i32 = arith.constant 0 : i32
    %c0_i32_0 = arith.constant 0 : i32
    %c0_i32_1 = arith.constant 0 : i32
    return %c0_i32, %c0_i32_0 : i32, i32
  }
  func.func @transform_3(%arg0: i32) -> (i32, i32, i32) {
    %c0_i32 = arith.constant 0 : i32
    %c0_i32_0 = arith.constant 0 : i32
    %c0_i32_1 = arith.constant 0 : i32
    %c0_i32_2 = arith.constant 0 : i32
    return %c0_i32, %c0_i32_0, %c0_i32_1 : i32, i32, i32
  }
  func.func @transform_4(%arg0: i32) -> (i32, i32) {
    %c0_i32 = arith.constant 0 : i32
    %c0_i32_0 = arith.constant 0 : i32
    %c0_i32_1 = arith.constant 0 : i32
    return %c0_i32, %c0_i32_0 : i32, i32
  }
  func.func @transform_5(%arg0: i32) -> (i32, i32, i32) {
    %c0_i32 = arith.constant 0 : i32
    %c0_i32_0 = arith.constant 0 : i32
    %c0_i32_1 = arith.constant 0 : i32
    %c0_i32_2 = arith.constant 0 : i32
    return %c0_i32, %c0_i32_0, %c0_i32_1 : i32, i32, i32
  }
  func.func @transform_6(%arg0: i32) -> (i32, i32, i32) {
    %c0_i32 = arith.constant 0 : i32
    %c0_i32_0 = arith.constant 0 : i32
    %c0_i32_1 = arith.constant 0 : i32
    return %arg0, %c0_i32, %c0_i32_0 : i32, i32, i32
  }
}

</mosaic_0001>

<llo_original>
// kernel: tpu_custom_call.1
$region0: #{tpu_custom_call.1}
  #allocation0 [shape = 'u32[]', space=smem, size = 0x4, offset = 0x4, fixed_abs, tag = 'smem constant byte address 0x4 - core index']
  #allocation1 [shape = 'u32[144,128]{1,0:T(1,128)}', space=vmem, size = 0x12000, scoped, tag = 'internal scratch']
  %s0 = inlined_call_operand.vmem [shape: f32[2,4,256], index: 0, kind: input, shape index: {}]
  %s1 = inlined_call_operand.vmem [shape: f32[9,8,4], index: 1, kind: input, shape index: {}]
  %s2 = inlined_call_operand.vmem [shape: f32[8,1], index: 2, kind: input, shape index: {}]
  %s3 = inlined_call_operand.vmem [shape: f32[9,8,8], index: 3, kind: input, shape index: {}]
  %s4 = inlined_call_operand.vmem [shape: f32[8,1], index: 4, kind: input, shape index: {}]
  %s5 = inlined_call_operand.vmem [shape: f32[9,1,256], index: 5, kind: input, shape index: {}]
  %s6 = inlined_call_operand.hbm [shape: f32[2,8,256], index: 6, kind: output, shape index: {}]
  %s7 = sld [smem:[#allocation0]]
  $region57: #{tpu_custom_call.1} parent=0
    _
  %s9 = ssub.s32 1, %s7
  %s10 = scalar_select 0, %s9, %s7
  $region1: #{tpu_custom_call.1} parent=0
    #allocation2 [shape = 'u8[16384]{0}', space=vmem, size = 0x4000, scoped, tag = 'output window, operand 0']
    #allocation3 [shape = 's32[2]{0}', space=sflag, size = 0x8, scoped, tag = 'scoped memory for tpu_custom_call.1']
    %11 = vsyncpa [#allocation3], 0
    %s12 = scalar_lea.sflag [#allocation3], 1
    %13 = vsyncpa %s12, 0
    loop: start=0, step=1, limit=4
    $region2: #{tpu_custom_call.1} parent=1 // loop_pre_header
      _
    $region3: #{tpu_custom_call.1} parent=1 // loop_header
      %s15 = sphi 0, %s19
      %p16 = scmp.ge.s32.totalorder %s15, 4
      %s25 = sphi 0, %s27
      %s28 = sphi 0, %s25
      %s29 = sphi 0, %s28
      %s45 = sphi 0, %s29
      %s49 = sphi 0, %s49
      %s51 = sphi 0, %s49
      %s52 = sphi 0, %s51
      %s66 = sphi 0, %s52
      %s70 = sphi 0, %s70
      %s72 = sphi 0, %s70
      %s73 = sphi 0, %s72
      %s87 = sphi 0, %s73
      %s91 = sphi 0, %s91
      %s93 = sphi 0, %s91
      %s94 = sphi 0, %s93
      %s108 = sphi 0, %s94
      %s112 = sphi 0, %s112
      %s114 = sphi 0, %s112
      %s115 = sphi 0, %s114
      %s129 = sphi 0, %s115
      %s133 = sphi 0, %s133
      %s135 = sphi 0, %s133
      %s136 = sphi 0, %s135
      %s150 = sphi 0, %s136
      %s156 = sphi 0, %s158
      %s159 = sphi 0, %s156
      %s160 = sphi 0, %s159
      %s176 = sphi 0, %s160
    $region4: #{tpu_custom_call.1} parent=1 // loop_header_branch
      %18 = sbr.rel (%p16) target = $region8
    $region5: #{tpu_custom_call.1} parent=1 // loop_body
      %s20 = ssub.s32 %s15, 1
      %s21 = ssub.s32 %s15, 2
      %s22 = sadd.s32 %s15, 1
      %s23 = ssub.s32 %s15, %s22
      %p24 = scmp.eq.s32.totalorder %s23, 0
      %s26 = sadd.s32 %s25, 1
      %s27 = scalar_select %p24, %s25, %s26
      %p30 = pneg %p24
      %p31 = scmp.eq.s32.totalorder %s15, 1
      %p32 = por %p30, %p31
      %p33 = scmp.ne.s32.totalorder %s25, %s28
      %p34 = scmp.eq.s32.totalorder %s15, 0
      %p35 = por %p33, %p34
      %p36 = scmp.ne.s32.totalorder %s25, %s28
      %p37 = scmp.eq.s32.totalorder %s20, 1
      %p38 = por %p36, %p37
      %p39 = scmp.ne.s32.totalorder %s28, %s29
      %p40 = scmp.eq.s32.totalorder %s20, 0
      %p41 = por %p39, %p40
      %p42 = scmp.ne.s32.totalorder %s28, %s29
      %p43 = scmp.eq.s32.totalorder %s21, 1
      %p44 = por %p42, %p43
      %p46 = scmp.ne.s32.totalorder %s29, %s45
      %p47 = scmp.eq.s32.totalorder %s21, 0
      %p48 = por %p46, %p47
      %s50 = sadd.s32 %s49, 1
      %p53 = scmp.eq.s32.totalorder %s15, 1
      %p54 = scmp.ne.s32.totalorder %s49, %s51
      %p55 = scmp.eq.s32.totalorder %s15, 0
      %p56 = por %p54, %p55
      %p57 = scmp.ne.s32.totalorder %s49, %s51
      %p58 = scmp.eq.s32.totalorder %s20, 1
      %p59 = por %p57, %p58
      %p60 = scmp.ne.s32.totalorder %s51, %s52
      %p61 = scmp.eq.s32.totalorder %s20, 0
      %p62 = por %p60, %p61
      %p63 = scmp.ne.s32.totalorder %s51, %s52
      %p64 = scmp.eq.s32.totalorder %s21, 1
      %p65 = por %p63, %p64
      %p67 = scmp.ne.s32.totalorder %s52, %s66
      %p68 = scmp.eq.s32.totalorder %s21, 0
      %p69 = por %p67, %p68
      %s71 = sadd.s32 %s70, 1
      %p74 = scmp.eq.s32.totalorder %s15, 1
      %p75 = scmp.ne.s32.totalorder %s70, %s72
      %p76 = scmp.eq.s32.totalorder %s15, 0
      %p77 = por %p75, %p76
      %p78 = scmp.ne.s32.totalorder %s70, %s72
      %p79 = scmp.eq.s32.totalorder %s20, 1
      %p80 = por %p78, %p79
      %p81 = scmp.ne.s32.totalorder %s72, %s73
      %p82 = scmp.eq.s32.totalorder %s20, 0
      %p83 = por %p81, %p82
      %p84 = scmp.ne.s32.totalorder %s72, %s73
      %p85 = scmp.eq.s32.totalorder %s21, 1
      %p86 = por %p84, %p85
      %p88 = scmp.ne.s32.totalorder %s73, %s87
      %p89 = scmp.eq.s32.totalorder %s21, 0
      %p90 = por %p88, %p89
      %s92 = sadd.s32 %s91, 1
      %p95 = scmp.eq.s32.totalorder %s15, 1
      %p96 = scmp.ne.s32.totalorder %s91, %s93
      %p97 = scmp.eq.s32.totalorder %s15, 0
      %p98 = por %p96, %p97
      %p99 = scmp.ne.s32.totalorder %s91, %s93
      %p100 = scmp.eq.s32.totalorder %s20, 1
      %p101 = por %p99, %p100
      %p102 = scmp.ne.s32.totalorder %s93, %s94
      %p103 = scmp.eq.s32.totalorder %s20, 0
      %p104 = por %p102, %p103
      %p105 = scmp.ne.s32.totalorder %s93, %s94
      %p106 = scmp.eq.s32.totalorder %s21, 1
      %p107 = por %p105, %p106
      %p109 = scmp.ne.s32.totalorder %s94, %s108
      %p110 = scmp.eq.s32.totalorder %s21, 0
      %p111 = por %p109, %p110
      %s113 = sadd.s32 %s112, 1
      %p116 = scmp.eq.s32.totalorder %s15, 1
      %p117 = scmp.ne.s32.totalorder %s112, %s114
      %p118 = scmp.eq.s32.totalorder %s15, 0
      %p119 = por %p117, %p118
      %p120 = scmp.ne.s32.totalorder %s112, %s114
      %p121 = scmp.eq.s32.totalorder %s20, 1
      %p122 = por %p120, %p121
      %p123 = scmp.ne.s32.totalorder %s114, %s115
      %p124 = scmp.eq.s32.totalorder %s20, 0
      %p125 = por %p123, %p124
      %p126 = scmp.ne.s32.totalorder %s114, %s115
      %p127 = scmp.eq.s32.totalorder %s21, 1
      %p128 = por %p126, %p127
      %p130 = scmp.ne.s32.totalorder %s115, %s129
      %p131 = scmp.eq.s32.totalorder %s21, 0
      %p132 = por %p130, %p131
      %s134 = sadd.s32 %s133, 1
      %p137 = scmp.eq.s32.totalorder %s15, 1
      %p138 = scmp.ne.s32.totalorder %s133, %s135
      %p139 = scmp.eq.s32.totalorder %s15, 0
      %p140 = por %p138, %p139
      %p141 = scmp.ne.s32.totalorder %s133, %s135
      %p142 = scmp.eq.s32.totalorder %s20, 1
      %p143 = por %p141, %p142
      %p144 = scmp.ne.s32.totalorder %s135, %s136
      %p145 = scmp.eq.s32.totalorder %s20, 0
      %p146 = por %p144, %p145
      %p147 = scmp.ne.s32.totalorder %s135, %s136
      %p148 = scmp.eq.s32.totalorder %s21, 1
      %p149 = por %p147, %p148
      %p151 = scmp.ne.s32.totalorder %s136, %s150
      %p152 = scmp.eq.s32.totalorder %s21, 0
      %p153 = por %p151, %p152
      %s154 = ssub.s32 %s15, %s22
      %p155 = scmp.eq.s32.totalorder %s154, 0
      %s157 = sadd.s32 %s156, 1
      %s158 = scalar_select %p155, %s156, %s157
      %p161 = pneg %p155
      %p162 = scmp.eq.s32.totalorder %s15, 1
      %p163 = por %p161, %p162
      %p164 = scmp.ne.s32.totalorder %s156, %s159
      %p165 = scmp.eq.s32.totalorder %s15, 0
      %p166 = por %p164, %p165
      %p167 = scmp.ne.s32.totalorder %s156, %s159
      %p168 = scmp.eq.s32.totalorder %s20, 1
      %p169 = por %p167, %p168
      %p170 = scmp.ne.s32.totalorder %s159, %s160
      %p171 = scmp.eq.s32.totalorder %s20, 0
      %p172 = por %p170, %p171
      %p173 = scmp.ne.s32.totalorder %s159, %s160
      %p174 = scmp.eq.s32.totalorder %s21, 1
      %p175 = por %p173, %p174
      %p177 = scmp.ne.s32.totalorder %s160, %s176
      %p178 = scmp.eq.s32.totalorder %s21, 0
      %p179 = por %p177, %p178
      %p180 = scmp.le.s32.totalorder 1, %s15
      %p181 = scmp.lt.s32.totalorder %s15, 3
      %p182 = pnand %p180, %p181
      %p183 = pneg %p182
      // Predicated region
      $region9: #{tpu_custom_call.1} parent=5 // pred_check
        _
      $region10: #{tpu_custom_call.1} parent=5 // pred_check_branch
        %185 = sbr.rel (%p182) target = $region12
      $region11: #{tpu_custom_call.1} parent=5 // pred_region
        %s186 = ssub.s32 %s15, 1
        // Predicated region
        $region13: #{tpu_custom_call.1} parent=11 // pred_check
          %p187 = pneg %p62
        $region14: #{tpu_custom_call.1} parent=11 // pred_check_branch
          %189 = sbr.rel (%p187) target = $region16
        $region15: #{tpu_custom_call.1} parent=11 // pred_region
          _
        $region16: #{tpu_custom_call.1} parent=11 // pred_fallthru
          _
        // Predicated region
        $region17: #{tpu_custom_call.1} parent=11 // pred_check
          %p190 = pneg %p83
        $region18: #{tpu_custom_call.1} parent=11 // pred_check_branch
          %192 = sbr.rel (%p190) target = $region20
        $region19: #{tpu_custom_call.1} parent=11 // pred_region
          _
        $region20: #{tpu_custom_call.1} parent=11 // pred_fallthru
          _
        // Predicated region
        $region21: #{tpu_custom_call.1} parent=11 // pred_check
          %p193 = pneg %p104
        $region22: #{tpu_custom_call.1} parent=11 // pred_check_branch
          %195 = sbr.rel (%p193) target = $region24
        $region23: #{tpu_custom_call.1} parent=11 // pred_region
          _
        $region24: #{tpu_custom_call.1} parent=11 // pred_fallthru
          _
        // Predicated region
        $region25: #{tpu_custom_call.1} parent=11 // pred_check
          %p196 = pneg %p125
        $region26: #{tpu_custom_call.1} parent=11 // pred_check_branch
          %198 = sbr.rel (%p196) target = $region28
        $region27: #{tpu_custom_call.1} parent=11 // pred_region
          _
        $region28: #{tpu_custom_call.1} parent=11 // pred_fallthru
          _
        // Predicated region
        $region29: #{tpu_custom_call.1} parent=11 // pred_check
          %p199 = pneg %p146
        $region30: #{tpu_custom_call.1} parent=11 // pred_check_branch
          %201 = sbr.rel (%p199) target = $region32
        $region31: #{tpu_custom_call.1} parent=11 // pred_region
          _
        $region32: #{tpu_custom_call.1} parent=11 // pred_fallthru
          _
      $region12: #{tpu_custom_call.1} parent=5 // pred_fallthru
        _
      %p202 = scmp.lt.s32.totalorder %s15, 2
      // Predicated region
      $region33: #{tpu_custom_call.1} parent=5 // pred_check
        %p203 = pneg %p202
      $region34: #{tpu_custom_call.1} parent=5 // pred_check_branch
        %205 = sbr.rel (%p203) target = $region36
      $region35: #{tpu_custom_call.1} parent=5 // pred_region
        // Predicated region
        $region37: #{tpu_custom_call.1} parent=35 // pred_check
          %p206 = pneg %p35
        $region38: #{tpu_custom_call.1} parent=35 // pred_check_branch
          %208 = sbr.rel (%p206) target = $region40
        $region39: #{tpu_custom_call.1} parent=35 // pred_region
          %p209 = scmp.lt.s32.totalorder %s15, 1
          %s210 = scalar_select %p209, %s15, 1
          %s211 = smul.addr %s210, 2
          %s212 = smul.addr %s211, 4
          %s213 = scalar_lea.vmem %s0, %s212
        $region40: #{tpu_custom_call.1} parent=35 // pred_fallthru
          _
      $region36: #{tpu_custom_call.1} parent=5 // pred_fallthru
        _
      %p214 = scmp.le.s32.totalorder 1, %s15
      %p215 = scmp.lt.s32.totalorder %s15, 3
      %p216 = pnand %p214, %p215
      %p217 = pneg %p216
      // Predicated region
      $region41: #{tpu_custom_call.1} parent=5 // pred_check
        _
      $region42: #{tpu_custom_call.1} parent=5 // pred_check_branch
        %219 = sbr.rel (%p216) target = $region44
      $region43: #{tpu_custom_call.1} parent=5 // pred_region
        %s220 = ssub.s32 %s15, 1
        %p221 = scmp.lt.s32.totalorder %s20, 1
        %s222 = scalar_select %p221, %s20, 1
        %s223 = smul.addr %s222, 2
        %s224 = smul.addr %s223, 4
        %s225 = scalar_lea.vmem %s0, %s224
        %p226 = pneg %p41
        %p227 = pneg %p38
        %p228 = pneg %p62
        %p229 = pneg %p59
        %p230 = pneg %p83
        %p231 = pneg %p80
        %p232 = pneg %p104
        %p233 = pneg %p101
        %p234 = pneg %p125
        %p235 = pneg %p122
        %p236 = pneg %p146
        %p237 = pneg %p143
        %p238 = pneg %p172
        %p239 = pneg %p169
        %s240 = sand.u32 %s159, 1
        %s241 = scalar_lea.sflag [#allocation3], %s240
        %s242 = sand.u32 %s159, 1
        %s243 = smul.addr %s242, 16
        %s244 = scalar_lea.vmem [#allocation2], %s243
        %p245 = scmp.lt.s32.totalorder %s20, 1
        %s246 = scalar_select %p245, %s20, 1
        %s247 = smul.addr %s246, 2
        %s248 = smul.addr %s247, 4
        %s249 = scalar_lea.vmem %s0, %s248
        %v250 = vld [vmem:[%s5] sm:$0x3]
        %v251 = vld [vmem:[%s5 + $0x2] sm:$0x3]
        %v252 = vld [vmem:[%s5 + $0x4] sm:$0x3]
        %v253 = vld [vmem:[%s5 + $0x6] sm:$0x3]
        %v254 = vld [vmem:[%s5 + $0xa] sm:$0x3]
        %v255 = vld [vmem:[%s5 + $0xc] sm:$0x3]
        %v256 = vld [vmem:[%s5 + $0xe] sm:$0x3]
        %v257 = vld [vmem:[%s5 + $0x10] sm:$0x3]
        %v258 = vld [vmem:[%s1] sm:$0xff]
        %v259 = vld [vmem:[%s1 + $0x8] sm:$0xff]
        %v260 = vld [vmem:[%s1 + $0x10] sm:$0xff]
        %v261 = vld [vmem:[%s1 + $0x18] sm:$0xff]
        %v262 = vld [vmem:[%s1 + $0x20] sm:$0xff]
        %v263 = vld [vmem:[%s1 + $0x28] sm:$0xff]
        %v264 = vld [vmem:[%s1 + $0x30] sm:$0xff]
        %v265 = vld [vmem:[%s1 + $0x38] sm:$0xff]
        %v266 = vld [vmem:[%s1 + $0x40] sm:$0xff]
        %v267 = vld [vmem:[%s3] sm:$0xff]
        %v268 = vld [vmem:[%s3 + $0x8] sm:$0xff]
        %v269 = vld [vmem:[%s3 + $0x10] sm:$0xff]
        %v270 = vld [vmem:[%s3 + $0x18] sm:$0xff]
        %v271 = vld [vmem:[%s3 + $0x20] sm:$0xff]
        %v272 = vld [vmem:[%s3 + $0x28] sm:$0xff]
        %v273 = vld [vmem:[%s3 + $0x30] sm:$0xff]
        %v274 = vld [vmem:[%s3 + $0x38] sm:$0xff]
        %v275 = vld [vmem:[%s3 + $0x40] sm:$0xff]
        %v276 = vld [vmem:[%s2] sm:$0xff]
        %v277 = vld [vmem:[%s4] sm:$0xff]
        %v278 = vld [vmem:[%s249] sm:$0xff]
        %v280 = vcombine.high %v278, %v278
        %282 = vrot.lane.b32.xlu0 %v278, 17
        %v283 = vpop.permute.xlu0 %282
        %284 = vrot.lane.b32.xlu0 %v280, 17
        %v285 = vpop.permute.xlu0 %284
        %v286 = vlaneseq
        %v287 = vand.u32 %v286, 127
        %vm288 = vcmp.lt.s32.totalorder %v287, 17
        %v289 = vsel %vm288, %v283, %v285
        %v290 = vsel %vm288, %v285, %v283
        %v292 = vlaneseq
        %v293 = vshrl.u32 %v292, 7
        %v294 = vsub.s32 0, %v293
        %v295 = vrot.slane %v250, %v294
        %v296 = vlaneseq
        %v297 = vshrl.u32 %v296, 7
        %v298 = vsub.s32 1, %v297
        %v299 = vrot.slane %v250, %v298
        %v302 = vmul.f32 %v290, %v295
        %v303 = vmul.f32 %v289, %v299
        %305 = vset.pattern.permute.xlu0 0
        %306 = vperm.xlu0 %305, %v258
        %v307 = vpop.permute.xlu0 %306
        %v309 = vlaneseq
        %v310 = vshrl.u32 %v309, 7
        %v311 = vsub.s32 0, %v310
        %v312 = vrot.slane %v302, %v311
        %v313 = vlaneseq
        %v314 = vshrl.u32 %v313, 7
        %v315 = vsub.s32 0, %v314
        %v316 = vrot.slane %v303, %v315
        %v317 = vmul.f32 %v307, %v312
        %v318 = vmul.f32 %v307, %v316
        %v319 = vadd.f32 %v317, 0.0
        %v320 = vadd.f32 %v318, 0.0
        %321 = vset.pattern.permute.xlu0 1
        %322 = vperm.xlu0 %321, %v258
        %v323 = vpop.permute.xlu0 %322
        %v325 = vlaneseq
        %v326 = vshrl.u32 %v325, 7
        %v327 = vsub.s32 1, %v326
        %v328 = vrot.slane %v302, %v327
        %v329 = vlaneseq
        %v330 = vshrl.u32 %v329, 7
        %v331 = vsub.s32 1, %v330
        %v332 = vrot.slane %v303, %v331
        %v333 = vmul.f32 %v323, %v328
        %v334 = vmul.f32 %v323, %v332
        %v335 = vadd.f32 %v319, %v333
        %v336 = vadd.f32 %v320, %v334
        %337 = vset.pattern.permute.xlu0 2
        %338 = vperm.xlu0 %337, %v258
        %v339 = vpop.permute.xlu0 %338
        %v341 = vlaneseq
        %v342 = vshrl.u32 %v341, 7
        %v343 = vsub.s32 2, %v342
        %v344 = vrot.slane %v302, %v343
        %v345 = vlaneseq
        %v346 = vshrl.u32 %v345, 7
        %v347 = vsub.s32 2, %v346
        %v348 = vrot.slane %v303, %v347
        %v349 = vmul.f32 %v339, %v344
        %v350 = vmul.f32 %v339, %v348
        %v351 = vadd.f32 %v335, %v349
        %v352 = vadd.f32 %v336, %v350
        %353 = vset.pattern.permute.xlu0 3
        %354 = vperm.xlu0 %353, %v258
        %v355 = vpop.permute.xlu0 %354
        %v357 = vlaneseq
        %v358 = vshrl.u32 %v357, 7
        %v359 = vsub.s32 3, %v358
        %v360 = vrot.slane %v302, %v359
        %v361 = vlaneseq
        %v362 = vshrl.u32 %v361, 7
        %v363 = vsub.s32 3, %v362
        %v364 = vrot.slane %v303, %v363
        %v365 = vmul.f32 %v355, %v360
        %v366 = vmul.f32 %v355, %v364
        %v367 = vadd.f32 %v351, %v365
        %v368 = vadd.f32 %v352, %v366
        %369 = vrot.lane.b32.xlu0 %v278, 16
        %v370 = vpop.permute.xlu0 %369
        %371 = vrot.lane.b32.xlu0 %v280, 16
        %v372 = vpop.permute.xlu0 %371
        %vm373 = vcmp.lt.s32.totalorder %v287, 16
        %v374 = vsel %vm373, %v370, %v372
        %v375 = vsel %vm373, %v372, %v370
        %v377 = vlaneseq
        %v378 = vshrl.u32 %v377, 7
        %v379 = vsub.s32 0, %v378
        %v380 = vrot.slane %v251, %v379
        %v381 = vlaneseq
        %v382 = vshrl.u32 %v381, 7
        %v383 = vsub.s32 1, %v382
        %v384 = vrot.slane %v251, %v383
        %v387 = vmul.f32 %v375, %v380
        %v388 = vmul.f32 %v374, %v384
        %390 = vset.pattern.permute.xlu0 0
        %391 = vperm.xlu0 %390, %v259
        %v392 = vpop.permute.xlu0 %391
        %v394 = vlaneseq
        %v395 = vshrl.u32 %v394, 7
        %v396 = vsub.s32 0, %v395
        %v397 = vrot.slane %v387, %v396
        %v398 = vlaneseq
        %v399 = vshrl.u32 %v398, 7
        %v400 = vsub.s32 0, %v399
        %v401 = vrot.slane %v388, %v400
        %v402 = vmul.f32 %v392, %v397
        %v403 = vmul.f32 %v392, %v401
        %v404 = vadd.f32 %v367, %v402
        %v405 = vadd.f32 %v368, %v403
        %406 = vset.pattern.permute.xlu0 1
        %407 = vperm.xlu0 %406, %v259
        %v408 = vpop.permute.xlu0 %407
        %v410 = vlaneseq
        %v411 = vshrl.u32 %v410, 7
        %v412 = vsub.s32 1, %v411
        %v413 = vrot.slane %v387, %v412
        %v414 = vlaneseq
        %v415 = vshrl.u32 %v414, 7
        %v416 = vsub.s32 1, %v415
        %v417 = vrot.slane %v388, %v416
        %v418 = vmul.f32 %v408, %v413
        %v419 = vmul.f32 %v408, %v417
        %v420 = vadd.f32 %v404, %v418
        %v421 = vadd.f32 %v405, %v419
        %422 = vset.pattern.permute.xlu0 2
        %423 = vperm.xlu0 %422, %v259
        %v424 = vpop.permute.xlu0 %423
        %v426 = vlaneseq
        %v427 = vshrl.u32 %v426, 7
        %v428 = vsub.s32 2, %v427
        %v429 = vrot.slane %v387, %v428
        %v430 = vlaneseq
        %v431 = vshrl.u32 %v430, 7
        %v432 = vsub.s32 2, %v431
        %v433 = vrot.slane %v388, %v432
        %v434 = vmul.f32 %v424, %v429
        %v435 = vmul.f32 %v424, %v433
        %v436 = vadd.f32 %v420, %v434
        %v437 = vadd.f32 %v421, %v435
        %438 = vset.pattern.permute.xlu0 3
        %439 = vperm.xlu0 %438, %v259
        %v440 = vpop.permute.xlu0 %439
        %v442 = vlaneseq
        %v443 = vshrl.u32 %v442, 7
        %v444 = vsub.s32 3, %v443
        %v445 = vrot.slane %v387, %v444
        %v446 = vlaneseq
        %v447 = vshrl.u32 %v446, 7
        %v448 = vsub.s32 3, %v447
        %v449 = vrot.slane %v388, %v448
        %v450 = vmul.f32 %v440, %v445
        %v451 = vmul.f32 %v440, %v449
        %v452 = vadd.f32 %v436, %v450
        %v453 = vadd.f32 %v437, %v451
        %454 = vrot.lane.b32.xlu0 %v278, 15
        %v455 = vpop.permute.xlu0 %454
        %456 = vrot.lane.b32.xlu0 %v280, 15
        %v457 = vpop.permute.xlu0 %456
        %vm458 = vcmp.lt.s32.totalorder %v287, 15
        %v459 = vsel %vm458, %v455, %v457
        %v460 = vsel %vm458, %v457, %v455
        %v462 = vlaneseq
        %v463 = vshrl.u32 %v462, 7
        %v464 = vsub.s32 0, %v463
        %v465 = vrot.slane %v252, %v464
        %v466 = vlaneseq
        %v467 = vshrl.u32 %v466, 7
        %v468 = vsub.s32 1, %v467
        %v469 = vrot.slane %v252, %v468
        %v472 = vmul.f32 %v460, %v465
        %v473 = vmul.f32 %v459, %v469
        %475 = vset.pattern.permute.xlu0 0
        %476 = vperm.xlu0 %475, %v260
        %v477 = vpop.permute.xlu0 %476
        %v479 = vlaneseq
        %v480 = vshrl.u32 %v479, 7
        %v481 = vsub.s32 0, %v480
        %v482 = vrot.slane %v472, %v481
        %v483 = vlaneseq
        %v484 = vshrl.u32 %v483, 7
        %v485 = vsub.s32 0, %v484
        %v486 = vrot.slane %v473, %v485
        %v487 = vmul.f32 %v477, %v482
        %v488 = vmul.f32 %v477, %v486
        %v489 = vadd.f32 %v452, %v487
        %v490 = vadd.f32 %v453, %v488
        %491 = vset.pattern.permute.xlu0 1
        %492 = vperm.xlu0 %491, %v260
        %v493 = vpop.permute.xlu0 %492
        %v495 = vlaneseq
        %v496 = vshrl.u32 %v495, 7
        %v497 = vsub.s32 1, %v496
        %v498 = vrot.slane %v472, %v497
        %v499 = vlaneseq
        %v500 = vshrl.u32 %v499, 7
        %v501 = vsub.s32 1, %v500
        %v502 = vrot.slane %v473, %v501
        %v503 = vmul.f32 %v493, %v498
        %v504 = vmul.f32 %v493, %v502
        %v505 = vadd.f32 %v489, %v503
        %v506 = vadd.f32 %v490, %v504
        %507 = vset.pattern.permute.xlu0 2
        %508 = vperm.xlu0 %507, %v260
        %v509 = vpop.permute.xlu0 %508
        %v511 = vlaneseq
        %v512 = vshrl.u32 %v511, 7
        %v513 = vsub.s32 2, %v512
        %v514 = vrot.slane %v472, %v513
        %v515 = vlaneseq
        %v516 = vshrl.u32 %v515, 7
        %v517 = vsub.s32 2, %v516
        %v518 = vrot.slane %v473, %v517
        %v519 = vmul.f32 %v509, %v514
        %v520 = vmul.f32 %v509, %v518
        %v521 = vadd.f32 %v505, %v519
        %v522 = vadd.f32 %v506, %v520
        %523 = vset.pattern.permute.xlu0 3
        %524 = vperm.xlu0 %523, %v260
        %v525 = vpop.permute.xlu0 %524
        %v527 = vlaneseq
        %v528 = vshrl.u32 %v527, 7
        %v529 = vsub.s32 3, %v528
        %v530 = vrot.slane %v472, %v529
        %v531 = vlaneseq
        %v532 = vshrl.u32 %v531, 7
        %v533 = vsub.s32 3, %v532
        %v534 = vrot.slane %v473, %v533
        %v535 = vmul.f32 %v525, %v530
        %v536 = vmul.f32 %v525, %v534
        %v537 = vadd.f32 %v521, %v535
        %v538 = vadd.f32 %v522, %v536
        %539 = vrot.lane.b32.xlu0 %v278, 1
        %v540 = vpop.permute.xlu0 %539
        %541 = vrot.lane.b32.xlu0 %v280, 1
        %v542 = vpop.permute.xlu0 %541
        %vm543 = vcmp.lt.s32.totalorder %v287, 1
        %v544 = vsel %vm543, %v540, %v542
        %v545 = vsel %vm543, %v542, %v540
        %v547 = vlaneseq
        %v548 = vshrl.u32 %v547, 7
        %v549 = vsub.s32 0, %v548
        %v550 = vrot.slane %v253, %v549
        %v551 = vlaneseq
        %v552 = vshrl.u32 %v551, 7
        %v553 = vsub.s32 1, %v552
        %v554 = vrot.slane %v253, %v553
        %v557 = vmul.f32 %v545, %v550
        %v558 = vmul.f32 %v544, %v554
        %560 = vset.pattern.permute.xlu0 0
        %561 = vperm.xlu0 %560, %v261
        %v562 = vpop.permute.xlu0 %561
        %v564 = vlaneseq
        %v565 = vshrl.u32 %v564, 7
        %v566 = vsub.s32 0, %v565
        %v567 = vrot.slane %v557, %v566
        %v568 = vlaneseq
        %v569 = vshrl.u32 %v568, 7
        %v570 = vsub.s32 0, %v569
        %v571 = vrot.slane %v558, %v570
        %v572 = vmul.f32 %v562, %v567
        %v573 = vmul.f32 %v562, %v571
        %v574 = vadd.f32 %v537, %v572
        %v575 = vadd.f32 %v538, %v573
        %576 = vset.pattern.permute.xlu0 1
        %577 = vperm.xlu0 %576, %v261
        %v578 = vpop.permute.xlu0 %577
        %v580 = vlaneseq
        %v581 = vshrl.u32 %v580, 7
        %v582 = vsub.s32 1, %v581
        %v583 = vrot.slane %v557, %v582
        %v584 = vlaneseq
        %v585 = vshrl.u32 %v584, 7
        %v586 = vsub.s32 1, %v585
        %v587 = vrot.slane %v558, %v586
        %v588 = vmul.f32 %v578, %v583
        %v589 = vmul.f32 %v578, %v587
        %v590 = vadd.f32 %v574, %v588
        %v591 = vadd.f32 %v575, %v589
        %592 = vset.pattern.permute.xlu0 2
        %593 = vperm.xlu0 %592, %v261
        %v594 = vpop.permute.xlu0 %593
        %v596 = vlaneseq
        %v597 = vshrl.u32 %v596, 7
        %v598 = vsub.s32 2, %v597
        %v599 = vrot.slane %v557, %v598
        %v600 = vlaneseq
        %v601 = vshrl.u32 %v600, 7
        %v602 = vsub.s32 2, %v601
        %v603 = vrot.slane %v558, %v602
        %v604 = vmul.f32 %v594, %v599
        %v605 = vmul.f32 %v594, %v603
        %v606 = vadd.f32 %v590, %v604
        %v607 = vadd.f32 %v591, %v605
        %608 = vset.pattern.permute.xlu0 3
        %609 = vperm.xlu0 %608, %v261
        %v610 = vpop.permute.xlu0 %609
        %v612 = vlaneseq
        %v613 = vshrl.u32 %v612, 7
        %v614 = vsub.s32 3, %v613
        %v615 = vrot.slane %v557, %v614
        %v616 = vlaneseq
        %v617 = vshrl.u32 %v616, 7
        %v618 = vsub.s32 3, %v617
        %v619 = vrot.slane %v558, %v618
        %v620 = vmul.f32 %v610, %v615
        %v621 = vmul.f32 %v610, %v619
        %v622 = vadd.f32 %v606, %v620
        %v623 = vadd.f32 %v607, %v621
        %625 = vset.pattern.permute.xlu0 0
        %626 = vperm.xlu0 %625, %v262
        %v627 = vpop.permute.xlu0 %626
        %v629 = vlaneseq
        %v630 = vshrl.u32 %v629, 7
        %v631 = vsub.s32 0, %v630
        %v632 = vrot.slane %v278, %v631
        %v633 = vlaneseq
        %v634 = vshrl.u32 %v633, 7
        %v635 = vsub.s32 4, %v634
        %v636 = vrot.slane %v278, %v635
        %v639 = vlaneseq
        %v640 = vshrl.u32 %v639, 7
        %v641 = vsub.s32 0, %v640
        %v642 = vrot.slane %v632, %v641
        %v643 = vlaneseq
        %v644 = vshrl.u32 %v643, 7
        %v645 = vsub.s32 0, %v644
        %v646 = vrot.slane %v636, %v645
        %v647 = vmul.f32 %v627, %v642
        %v648 = vmul.f32 %v627, %v646
        %v649 = vadd.f32 %v622, %v647
        %v650 = vadd.f32 %v623, %v648
        %651 = vset.pattern.permute.xlu0 1
        %652 = vperm.xlu0 %651, %v262
        %v653 = vpop.permute.xlu0 %652
        %v655 = vlaneseq
        %v656 = vshrl.u32 %v655, 7
        %v657 = vsub.s32 1, %v656
        %v658 = vrot.slane %v278, %v657
        %v659 = vlaneseq
        %v660 = vshrl.u32 %v659, 7
        %v661 = vsub.s32 5, %v660
        %v662 = vrot.slane %v278, %v661
        %v665 = vlaneseq
        %v666 = vshrl.u32 %v665, 7
        %v667 = vsub.s32 1, %v666
        %v668 = vrot.slane %v658, %v667
        %v669 = vlaneseq
        %v670 = vshrl.u32 %v669, 7
        %v671 = vsub.s32 1, %v670
        %v672 = vrot.slane %v662, %v671
        %v673 = vmul.f32 %v653, %v668
        %v674 = vmul.f32 %v653, %v672
        %v675 = vadd.f32 %v649, %v673
        %v676 = vadd.f32 %v650, %v674
        %677 = vset.pattern.permute.xlu0 2
        %678 = vperm.xlu0 %677, %v262
        %v679 = vpop.permute.xlu0 %678
        %v681 = vlaneseq
        %v682 = vshrl.u32 %v681, 7
        %v683 = vsub.s32 2, %v682
        %v684 = vrot.slane %v278, %v683
        %v685 = vlaneseq
        %v686 = vshrl.u32 %v685, 7
        %v687 = vsub.s32 6, %v686
        %v688 = vrot.slane %v278, %v687
        %v691 = vlaneseq
        %v692 = vshrl.u32 %v691, 7
        %v693 = vsub.s32 2, %v692
        %v694 = vrot.slane %v684, %v693
        %v695 = vlaneseq
        %v696 = vshrl.u32 %v695, 7
        %v697 = vsub.s32 2, %v696
        %v698 = vrot.slane %v688, %v697
        %v699 = vmul.f32 %v679, %v694
        %v700 = vmul.f32 %v679, %v698
        %v701 = vadd.f32 %v675, %v699
        %v702 = vadd.f32 %v676, %v700
        %703 = vset.pattern.permute.xlu0 3
        %704 = vperm.xlu0 %703, %v262
        %v705 = vpop.permute.xlu0 %704
        %v707 = vlaneseq
        %v708 = vshrl.u32 %v707, 7
        %v709 = vsub.s32 3, %v708
        %v710 = vrot.slane %v278, %v709
        %v711 = vlaneseq
        %v712 = vshrl.u32 %v711, 7
        %v713 = vsub.s32 7, %v712
        %v714 = vrot.slane %v278, %v713
        %v717 = vlaneseq
        %v718 = vshrl.u32 %v717, 7
        %v719 = vsub.s32 3, %v718
        %v720 = vrot.slane %v710, %v719
        %v721 = vlaneseq
        %v722 = vshrl.u32 %v721, 7
        %v723 = vsub.s32 3, %v722
        %v724 = vrot.slane %v714, %v723
        %v725 = vmul.f32 %v705, %v720
        %v726 = vmul.f32 %v705, %v724
        %v727 = vadd.f32 %v701, %v725
        %v728 = vadd.f32 %v702, %v726
        %729 = vrot.lane.b32.xlu0 %v278, 127
        %v730 = vpop.permute.xlu0 %729
        %731 = vrot.lane.b32.xlu0 %v280, 127
        %v732 = vpop.permute.xlu0 %731
        %vm733 = vcmp.lt.s32.totalorder %v287, 127
        %v734 = vsel %vm733, %v730, %v732
        %v735 = vsel %vm733, %v732, %v730
        %v737 = vlaneseq
        %v738 = vshrl.u32 %v737, 7
        %v739 = vsub.s32 0, %v738
        %v740 = vrot.slane %v254, %v739
        %v741 = vlaneseq
        %v742 = vshrl.u32 %v741, 7
        %v743 = vsub.s32 1, %v742
        %v744 = vrot.slane %v254, %v743
        %v747 = vmul.f32 %v734, %v740
        %v748 = vmul.f32 %v735, %v744
        %750 = vset.pattern.permute.xlu0 0
        %751 = vperm.xlu0 %750, %v263
        %v752 = vpop.permute.xlu0 %751
        %v754 = vlaneseq
        %v755 = vshrl.u32 %v754, 7
        %v756 = vsub.s32 0, %v755
        %v757 = vrot.slane %v747, %v756
        %v758 = vlaneseq
        %v759 = vshrl.u32 %v758, 7
        %v760 = vsub.s32 0, %v759
        %v761 = vrot.slane %v748, %v760
        %v762 = vmul.f32 %v752, %v757
        %v763 = vmul.f32 %v752, %v761
        %v764 = vadd.f32 %v727, %v762
        %v765 = vadd.f32 %v728, %v763
        %766 = vset.pattern.permute.xlu0 1
        %767 = vperm.xlu0 %766, %v263
        %v768 = vpop.permute.xlu0 %767
        %v770 = vlaneseq
        %v771 = vshrl.u32 %v770, 7
        %v772 = vsub.s32 1, %v771
        %v773 = vrot.slane %v747, %v772
        %v774 = vlaneseq
        %v775 = vshrl.u32 %v774, 7
        %v776 = vsub.s32 1, %v775
        %v777 = vrot.slane %v748, %v776
        %v778 = vmul.f32 %v768, %v773
        %v779 = vmul.f32 %v768, %v777
        %v780 = vadd.f32 %v764, %v778
        %v781 = vadd.f32 %v765, %v779
        %782 = vset.pattern.permute.xlu0 2
        %783 = vperm.xlu0 %782, %v263
        %v784 = vpop.permute.xlu0 %783
        %v786 = vlaneseq
        %v787 = vshrl.u32 %v786, 7
        %v788 = vsub.s32 2, %v787
        %v789 = vrot.slane %v747, %v788
        %v790 = vlaneseq
        %v791 = vshrl.u32 %v790, 7
        %v792 = vsub.s32 2, %v791
        %v793 = vrot.slane %v748, %v792
        %v794 = vmul.f32 %v784, %v789
        %v795 = vmul.f32 %v784, %v793
        %v796 = vadd.f32 %v780, %v794
        %v797 = vadd.f32 %v781, %v795
        %798 = vset.pattern.permute.xlu0 3
        %799 = vperm.xlu0 %798, %v263
        %v800 = vpop.permute.xlu0 %799
        %v802 = vlaneseq
        %v803 = vshrl.u32 %v802, 7
        %v804 = vsub.s32 3, %v803
        %v805 = vrot.slane %v747, %v804
        %v806 = vlaneseq
        %v807 = vshrl.u32 %v806, 7
        %v808 = vsub.s32 3, %v807
        %v809 = vrot.slane %v748, %v808
        %v810 = vmul.f32 %v800, %v805
        %v811 = vmul.f32 %v800, %v809
        %v812 = vadd.f32 %v796, %v810
        %v813 = vadd.f32 %v797, %v811
        %814 = vrot.lane.b32.xlu0 %v278, 113
        %v815 = vpop.permute.xlu0 %814
        %816 = vrot.lane.b32.xlu0 %v280, 113
        %v817 = vpop.permute.xlu0 %816
        %vm818 = vcmp.lt.s32.totalorder %v287, 113
        %v819 = vsel %vm818, %v815, %v817
        %v820 = vsel %vm818, %v817, %v815
        %v822 = vlaneseq
        %v823 = vshrl.u32 %v822, 7
        %v824 = vsub.s32 0, %v823
        %v825 = vrot.slane %v255, %v824
        %v826 = vlaneseq
        %v827 = vshrl.u32 %v826, 7
        %v828 = vsub.s32 1, %v827
        %v829 = vrot.slane %v255, %v828
        %v832 = vmul.f32 %v819, %v825
        %v833 = vmul.f32 %v820, %v829
        %835 = vset.pattern.permute.xlu0 0
        %836 = vperm.xlu0 %835, %v264
        %v837 = vpop.permute.xlu0 %836
        %v839 = vlaneseq
        %v840 = vshrl.u32 %v839, 7
        %v841 = vsub.s32 0, %v840
        %v842 = vrot.slane %v832, %v841
        %v843 = vlaneseq
        %v844 = vshrl.u32 %v843, 7
        %v845 = vsub.s32 0, %v844
        %v846 = vrot.slane %v833, %v845
        %v847 = vmul.f32 %v837, %v842
        %v848 = vmul.f32 %v837, %v846
        %v849 = vadd.f32 %v812, %v847
        %v850 = vadd.f32 %v813, %v848
        %851 = vset.pattern.permute.xlu0 1
        %852 = vperm.xlu0 %851, %v264
        %v853 = vpop.permute.xlu0 %852
        %v855 = vlaneseq
        %v856 = vshrl.u32 %v855, 7
        %v857 = vsub.s32 1, %v856
        %v858 = vrot.slane %v832, %v857
        %v859 = vlaneseq
        %v860 = vshrl.u32 %v859, 7
        %v861 = vsub.s32 1, %v860
        %v862 = vrot.slane %v833, %v861
        %v863 = vmul.f32 %v853, %v858
        %v864 = vmul.f32 %v853, %v862
        %v865 = vadd.f32 %v849, %v863
        %v866 = vadd.f32 %v850, %v864
        %867 = vset.pattern.permute.xlu0 2
        %868 = vperm.xlu0 %867, %v264
        %v869 = vpop.permute.xlu0 %868
        %v871 = vlaneseq
        %v872 = vshrl.u32 %v871, 7
        %v873 = vsub.s32 2, %v872
        %v874 = vrot.slane %v832, %v873
        %v875 = vlaneseq
        %v876 = vshrl.u32 %v875, 7
        %v877 = vsub.s32 2, %v876
        %v878 = vrot.slane %v833, %v877
        %v879 = vmul.f32 %v869, %v874
        %v880 = vmul.f32 %v869, %v878
        %v881 = vadd.f32 %v865, %v879
        %v882 = vadd.f32 %v866, %v880
        %883 = vset.pattern.permute.xlu0 3
        %884 = vperm.xlu0 %883, %v264
        %v885 = vpop.permute.xlu0 %884
        %v887 = vlaneseq
        %v888 = vshrl.u32 %v887, 7
        %v889 = vsub.s32 3, %v888
        %v890 = vrot.slane %v832, %v889
        %v891 = vlaneseq
        %v892 = vshrl.u32 %v891, 7
        %v893 = vsub.s32 3, %v892
        %v894 = vrot.slane %v833, %v893
        %v895 = vmul.f32 %v885, %v890
        %v896 = vmul.f32 %v885, %v894
        %v897 = vadd.f32 %v881, %v895
        %v898 = vadd.f32 %v882, %v896
        %899 = vrot.lane.b32.xlu0 %v278, 112
        %v900 = vpop.permute.xlu0 %899
        %901 = vrot.lane.b32.xlu0 %v280, 112
        %v902 = vpop.permute.xlu0 %901
        %vm903 = vcmp.lt.s32.totalorder %v287, 112
        %v904 = vsel %vm903, %v900, %v902
        %v905 = vsel %vm903, %v902, %v900
        %v907 = vlaneseq
        %v908 = vshrl.u32 %v907, 7
        %v909 = vsub.s32 0, %v908
        %v910 = vrot.slane %v256, %v909
        %v911 = vlaneseq
        %v912 = vshrl.u32 %v911, 7
        %v913 = vsub.s32 1, %v912
        %v914 = vrot.slane %v256, %v913
        %v917 = vmul.f32 %v904, %v910
        %v918 = vmul.f32 %v905, %v914
        %920 = vset.pattern.permute.xlu0 0
        %921 = vperm.xlu0 %920, %v265
        %v922 = vpop.permute.xlu0 %921
        %v924 = vlaneseq
        %v925 = vshrl.u32 %v924, 7
        %v926 = vsub.s32 0, %v925
        %v927 = vrot.slane %v917, %v926
        %v928 = vlaneseq
        %v929 = vshrl.u32 %v928, 7
        %v930 = vsub.s32 0, %v929
        %v931 = vrot.slane %v918, %v930
        %v932 = vmul.f32 %v922, %v927
        %v933 = vmul.f32 %v922, %v931
        %v934 = vadd.f32 %v897, %v932
        %v935 = vadd.f32 %v898, %v933
        %936 = vset.pattern.permute.xlu0 1
        %937 = vperm.xlu0 %936, %v265
        %v938 = vpop.permute.xlu0 %937
        %v940 = vlaneseq
        %v941 = vshrl.u32 %v940, 7
        %v942 = vsub.s32 1, %v941
        %v943 = vrot.slane %v917, %v942
        %v944 = vlaneseq
        %v945 = vshrl.u32 %v944, 7
        %v946 = vsub.s32 1, %v945
        %v947 = vrot.slane %v918, %v946
        %v948 = vmul.f32 %v938, %v943
        %v949 = vmul.f32 %v938, %v947
        %v950 = vadd.f32 %v934, %v948
        %v951 = vadd.f32 %v935, %v949
        %952 = vset.pattern.permute.xlu0 2
        %953 = vperm.xlu0 %952, %v265
        %v954 = vpop.permute.xlu0 %953
        %v956 = vlaneseq
        %v957 = vshrl.u32 %v956, 7
        %v958 = vsub.s32 2, %v957
        %v959 = vrot.slane %v917, %v958
        %v960 = vlaneseq
        %v961 = vshrl.u32 %v960, 7
        %v962 = vsub.s32 2, %v961
        %v963 = vrot.slane %v918, %v962
        %v964 = vmul.f32 %v954, %v959
        %v965 = vmul.f32 %v954, %v963
        %v966 = vadd.f32 %v950, %v964
        %v967 = vadd.f32 %v951, %v965
        %968 = vset.pattern.permute.xlu0 3
        %969 = vperm.xlu0 %968, %v265
        %v970 = vpop.permute.xlu0 %969
        %v972 = vlaneseq
        %v973 = vshrl.u32 %v972, 7
        %v974 = vsub.s32 3, %v973
        %v975 = vrot.slane %v917, %v974
        %v976 = vlaneseq
        %v977 = vshrl.u32 %v976, 7
        %v978 = vsub.s32 3, %v977
        %v979 = vrot.slane %v918, %v978
        %v980 = vmul.f32 %v970, %v975
        %v981 = vmul.f32 %v970, %v979
        %v982 = vadd.f32 %v966, %v980
        %v983 = vadd.f32 %v967, %v981
        %984 = vrot.lane.b32.xlu0 %v278, 111
        %v985 = vpop.permute.xlu0 %984
        %986 = vrot.lane.b32.xlu0 %v280, 111
        %v987 = vpop.permute.xlu0 %986
        %vm988 = vcmp.lt.s32.totalorder %v287, 111
        %v989 = vsel %vm988, %v985, %v987
        %v990 = vsel %vm988, %v987, %v985
        %v992 = vlaneseq
        %v993 = vshrl.u32 %v992, 7
        %v994 = vsub.s32 0, %v993
        %v995 = vrot.slane %v257, %v994
        %v996 = vlaneseq
        %v997 = vshrl.u32 %v996, 7
        %v998 = vsub.s32 1, %v997
        %v999 = vrot.slane %v257, %v998
        %v1002 = vmul.f32 %v989, %v995
        %v1003 = vmul.f32 %v990, %v999
        %1005 = vset.pattern.permute.xlu0 0
        %1006 = vperm.xlu0 %1005, %v266
        %v1007 = vpop.permute.xlu0 %1006
        %v1009 = vlaneseq
        %v1010 = vshrl.u32 %v1009, 7
        %v1011 = vsub.s32 0, %v1010
        %v1012 = vrot.slane %v1002, %v1011
        %v1013 = vlaneseq
        %v1014 = vshrl.u32 %v1013, 7
        %v1015 = vsub.s32 0, %v1014
        %v1016 = vrot.slane %v1003, %v1015
        %v1017 = vmul.f32 %v1007, %v1012
        %v1018 = vmul.f32 %v1007, %v1016
        %v1019 = vadd.f32 %v982, %v1017
        %v1020 = vadd.f32 %v983, %v1018
        %1021 = vset.pattern.permute.xlu0 1
        %1022 = vperm.xlu0 %1021, %v266
        %v1023 = vpop.permute.xlu0 %1022
        %v1025 = vlaneseq
        %v1026 = vshrl.u32 %v1025, 7
        %v1027 = vsub.s32 1, %v1026
        %v1028 = vrot.slane %v1002, %v1027
        %v1029 = vlaneseq
        %v1030 = vshrl.u32 %v1029, 7
        %v1031 = vsub.s32 1, %v1030
        %v1032 = vrot.slane %v1003, %v1031
        %v1033 = vmul.f32 %v1023, %v1028
        %v1034 = vmul.f32 %v1023, %v1032
        %v1035 = vadd.f32 %v1019, %v1033
        %v1036 = vadd.f32 %v1020, %v1034
        %1037 = vset.pattern.permute.xlu0 2
        %1038 = vperm.xlu0 %1037, %v266
        %v1039 = vpop.permute.xlu0 %1038
        %v1041 = vlaneseq
        %v1042 = vshrl.u32 %v1041, 7
        %v1043 = vsub.s32 2, %v1042
        %v1044 = vrot.slane %v1002, %v1043
        %v1045 = vlaneseq
        %v1046 = vshrl.u32 %v1045, 7
        %v1047 = vsub.s32 2, %v1046
        %v1048 = vrot.slane %v1003, %v1047
        %v1049 = vmul.f32 %v1039, %v1044
        %v1050 = vmul.f32 %v1039, %v1048
        %v1051 = vadd.f32 %v1035, %v1049
        %v1052 = vadd.f32 %v1036, %v1050
        %1053 = vset.pattern.permute.xlu0 3
        %1054 = vperm.xlu0 %1053, %v266
        %v1055 = vpop.permute.xlu0 %1054
        %v1057 = vlaneseq
        %v1058 = vshrl.u32 %v1057, 7
        %v1059 = vsub.s32 3, %v1058
        %v1060 = vrot.slane %v1002, %v1059
        %v1061 = vlaneseq
        %v1062 = vshrl.u32 %v1061, 7
        %v1063 = vsub.s32 3, %v1062
        %v1064 = vrot.slane %v1003, %v1063
        %v1065 = vmul.f32 %v1055, %v1060
        %v1066 = vmul.f32 %v1055, %v1064
        %v1067 = vadd.f32 %v1051, %v1065
        %v1068 = vadd.f32 %v1052, %v1066
        %1070 = vset.pattern.permute.xlu0 0
        %1071 = vperm.xlu0 %1070, %v276
        %v1072 = vpop.permute.xlu0 %1071
        %v1074 = vadd.f32 %v1067, %v1072
        %v1075 = vadd.f32 %v1068, %v1072
        %v1076 = vmax.f32 %v1074, 0.0
        %v1077 = vmax.f32 %v1075, 0.0
        %1078 = vrot.lane.b32.xlu0 %v1076, 17
        %v1079 = vpop.permute.xlu0 %1078
        %1080 = vrot.lane.b32.xlu0 %v1077, 17
        %v1081 = vpop.permute.xlu0 %1080
        %v1082 = vsel %vm288, %v1079, %v1081
        %v1083 = vsel %vm288, %v1081, %v1079
        %v1084 = vmul.f32 %v1083, %v295
        %v1085 = vmul.f32 %v1082, %v299
        %1087 = vset.pattern.permute.xlu0 0
        %1088 = vperm.xlu0 %1087, %v267
        %v1089 = vpop.permute.xlu0 %1088
        %v1091 = vlaneseq
        %v1092 = vshrl.u32 %v1091, 7
        %v1093 = vsub.s32 0, %v1092
        %v1094 = vrot.slane %v1084, %v1093
        %v1095 = vlaneseq
        %v1096 = vshrl.u32 %v1095, 7
        %v1097 = vsub.s32 0, %v1096
        %v1098 = vrot.slane %v1085, %v1097
        %v1099 = vmul.f32 %v1089, %v1094
        %v1100 = vmul.f32 %v1089, %v1098
        %v1101 = vadd.f32 %v1099, 0.0
        %v1102 = vadd.f32 %v1100, 0.0
        %1103 = vset.pattern.permute.xlu0 1
        %1104 = vperm.xlu0 %1103, %v267
        %v1105 = vpop.permute.xlu0 %1104
        %v1107 = vlaneseq
        %v1108 = vshrl.u32 %v1107, 7
        %v1109 = vsub.s32 1, %v1108
        %v1110 = vrot.slane %v1084, %v1109
        %v1111 = vlaneseq
        %v1112 = vshrl.u32 %v1111, 7
        %v1113 = vsub.s32 1, %v1112
        %v1114 = vrot.slane %v1085, %v1113
        %v1115 = vmul.f32 %v1105, %v1110
        %v1116 = vmul.f32 %v1105, %v1114
        %v1117 = vadd.f32 %v1101, %v1115
        %v1118 = vadd.f32 %v1102, %v1116
        %1119 = vset.pattern.permute.xlu0 2
        %1120 = vperm.xlu0 %1119, %v267
        %v1121 = vpop.permute.xlu0 %1120
        %v1123 = vlaneseq
        %v1124 = vshrl.u32 %v1123, 7
        %v1125 = vsub.s32 2, %v1124
        %v1126 = vrot.slane %v1084, %v1125
        %v1127 = vlaneseq
        %v1128 = vshrl.u32 %v1127, 7
        %v1129 = vsub.s32 2, %v1128
        %v1130 = vrot.slane %v1085, %v1129
        %v1131 = vmul.f32 %v1121, %v1126
        %v1132 = vmul.f32 %v1121, %v1130
        %v1133 = vadd.f32 %v1117, %v1131
        %v1134 = vadd.f32 %v1118, %v1132
        %1135 = vset.pattern.permute.xlu0 3
        %1136 = vperm.xlu0 %1135, %v267
        %v1137 = vpop.permute.xlu0 %1136
        %v1139 = vlaneseq
        %v1140 = vshrl.u32 %v1139, 7
        %v1141 = vsub.s32 3, %v1140
        %v1142 = vrot.slane %v1084, %v1141
        %v1143 = vlaneseq
        %v1144 = vshrl.u32 %v1143, 7
        %v1145 = vsub.s32 3, %v1144
        %v1146 = vrot.slane %v1085, %v1145
        %v1147 = vmul.f32 %v1137, %v1142
        %v1148 = vmul.f32 %v1137, %v1146
        %v1149 = vadd.f32 %v1133, %v1147
        %v1150 = vadd.f32 %v1134, %v1148
        %1151 = vset.pattern.permute.xlu0 4
        %1152 = vperm.xlu0 %1151, %v267
        %v1153 = vpop.permute.xlu0 %1152
        %v1155 = vlaneseq
        %v1156 = vshrl.u32 %v1155, 7
        %v1157 = vsub.s32 4, %v1156
        %v1158 = vrot.slane %v1084, %v1157
        %v1159 = vlaneseq
        %v1160 = vshrl.u32 %v1159, 7
        %v1161 = vsub.s32 4, %v1160
        %v1162 = vrot.slane %v1085, %v1161
        %v1163 = vmul.f32 %v1153, %v1158
        %v1164 = vmul.f32 %v1153, %v1162
        %v1165 = vadd.f32 %v1149, %v1163
        %v1166 = vadd.f32 %v1150, %v1164
        %1167 = vset.pattern.permute.xlu0 5
        %1168 = vperm.xlu0 %1167, %v267
        %v1169 = vpop.permute.xlu0 %1168
        %v1171 = vlaneseq
        %v1172 = vshrl.u32 %v1171, 7
        %v1173 = vsub.s32 5, %v1172
        %v1174 = vrot.slane %v1084, %v1173
        %v1175 = vlaneseq
        %v1176 = vshrl.u32 %v1175, 7
        %v1177 = vsub.s32 5, %v1176
        %v1178 = vrot.slane %v1085, %v1177
        %v1179 = vmul.f32 %v1169, %v1174
        %v1180 = vmul.f32 %v1169, %v1178
        %v1181 = vadd.f32 %v1165, %v1179
        %v1182 = vadd.f32 %v1166, %v1180
        %1183 = vset.pattern.permute.xlu0 6
        %1184 = vperm.xlu0 %1183, %v267
        %v1185 = vpop.permute.xlu0 %1184
        %v1187 = vlaneseq
        %v1188 = vshrl.u32 %v1187, 7
        %v1189 = vsub.s32 6, %v1188
        %v1190 = vrot.slane %v1084, %v1189
        %v1191 = vlaneseq
        %v1192 = vshrl.u32 %v1191, 7
        %v1193 = vsub.s32 6, %v1192
        %v1194 = vrot.slane %v1085, %v1193
        %v1195 = vmul.f32 %v1185, %v1190
        %v1196 = vmul.f32 %v1185, %v1194
        %v1197 = vadd.f32 %v1181, %v1195
        %v1198 = vadd.f32 %v1182, %v1196
        %1199 = vset.pattern.permute.xlu0 7
        %1200 = vperm.xlu0 %1199, %v267
        %v1201 = vpop.permute.xlu0 %1200
        %v1203 = vlaneseq
        %v1204 = vshrl.u32 %v1203, 7
        %v1205 = vsub.s32 7, %v1204
        %v1206 = vrot.slane %v1084, %v1205
        %v1207 = vlaneseq
        %v1208 = vshrl.u32 %v1207, 7
        %v1209 = vsub.s32 7, %v1208
        %v1210 = vrot.slane %v1085, %v1209
        %v1211 = vmul.f32 %v1201, %v1206
        %v1212 = vmul.f32 %v1201, %v1210
        %v1213 = vadd.f32 %v1197, %v1211
        %v1214 = vadd.f32 %v1198, %v1212
        %1215 = vrot.lane.b32.xlu0 %v1076, 16
        %v1216 = vpop.permute.xlu0 %1215
        %1217 = vrot.lane.b32.xlu0 %v1077, 16
        %v1218 = vpop.permute.xlu0 %1217
        %v1219 = vsel %vm373, %v1216, %v1218
        %v1220 = vsel %vm373, %v1218, %v1216
        %v1221 = vmul.f32 %v1220, %v380
        %v1222 = vmul.f32 %v1219, %v384
        %1224 = vset.pattern.permute.xlu0 0
        %1225 = vperm.xlu0 %1224, %v268
        %v1226 = vpop.permute.xlu0 %1225
        %v1228 = vlaneseq
        %v1229 = vshrl.u32 %v1228, 7
        %v1230 = vsub.s32 0, %v1229
        %v1231 = vrot.slane %v1221, %v1230
        %v1232 = vlaneseq
        %v1233 = vshrl.u32 %v1232, 7
        %v1234 = vsub.s32 0, %v1233
        %v1235 = vrot.slane %v1222, %v1234
        %v1236 = vmul.f32 %v1226, %v1231
        %v1237 = vmul.f32 %v1226, %v1235
        %v1238 = vadd.f32 %v1213, %v1236
        %v1239 = vadd.f32 %v1214, %v1237
        %1240 = vset.pattern.permute.xlu0 1
        %1241 = vperm.xlu0 %1240, %v268
        %v1242 = vpop.permute.xlu0 %1241
        %v1244 = vlaneseq
        %v1245 = vshrl.u32 %v1244, 7
        %v1246 = vsub.s32 1, %v1245
        %v1247 = vrot.slane %v1221, %v1246
        %v1248 = vlaneseq
        %v1249 = vshrl.u32 %v1248, 7
        %v1250 = vsub.s32 1, %v1249
        %v1251 = vrot.slane %v1222, %v1250
        %v1252 = vmul.f32 %v1242, %v1247
        %v1253 = vmul.f32 %v1242, %v1251
        %v1254 = vadd.f32 %v1238, %v1252
        %v1255 = vadd.f32 %v1239, %v1253
        %1256 = vset.pattern.permute.xlu0 2
        %1257 = vperm.xlu0 %1256, %v268
        %v1258 = vpop.permute.xlu0 %1257
        %v1260 = vlaneseq
        %v1261 = vshrl.u32 %v1260, 7
        %v1262 = vsub.s32 2, %v1261
        %v1263 = vrot.slane %v1221, %v1262
        %v1264 = vlaneseq
        %v1265 = vshrl.u32 %v1264, 7
        %v1266 = vsub.s32 2, %v1265
        %v1267 = vrot.slane %v1222, %v1266
        %v1268 = vmul.f32 %v1258, %v1263
        %v1269 = vmul.f32 %v1258, %v1267
        %v1270 = vadd.f32 %v1254, %v1268
        %v1271 = vadd.f32 %v1255, %v1269
        %1272 = vset.pattern.permute.xlu0 3
        %1273 = vperm.xlu0 %1272, %v268
        %v1274 = vpop.permute.xlu0 %1273
        %v1276 = vlaneseq
        %v1277 = vshrl.u32 %v1276, 7
        %v1278 = vsub.s32 3, %v1277
        %v1279 = vrot.slane %v1221, %v1278
        %v1280 = vlaneseq
        %v1281 = vshrl.u32 %v1280, 7
        %v1282 = vsub.s32 3, %v1281
        %v1283 = vrot.slane %v1222, %v1282
        %v1284 = vmul.f32 %v1274, %v1279
        %v1285 = vmul.f32 %v1274, %v1283
        %v1286 = vadd.f32 %v1270, %v1284
        %v1287 = vadd.f32 %v1271, %v1285
        %1288 = vset.pattern.permute.xlu0 4
        %1289 = vperm.xlu0 %1288, %v268
        %v1290 = vpop.permute.xlu0 %1289
        %v1292 = vlaneseq
        %v1293 = vshrl.u32 %v1292, 7
        %v1294 = vsub.s32 4, %v1293
        %v1295 = vrot.slane %v1221, %v1294
        %v1296 = vlaneseq
        %v1297 = vshrl.u32 %v1296, 7
        %v1298 = vsub.s32 4, %v1297
        %v1299 = vrot.slane %v1222, %v1298
        %v1300 = vmul.f32 %v1290, %v1295
        %v1301 = vmul.f32 %v1290, %v1299
        %v1302 = vadd.f32 %v1286, %v1300
        %v1303 = vadd.f32 %v1287, %v1301
        %1304 = vset.pattern.permute.xlu0 5
        %1305 = vperm.xlu0 %1304, %v268
        %v1306 = vpop.permute.xlu0 %1305
        %v1308 = vlaneseq
        %v1309 = vshrl.u32 %v1308, 7
        %v1310 = vsub.s32 5, %v1309
        %v1311 = vrot.slane %v1221, %v1310
        %v1312 = vlaneseq
        %v1313 = vshrl.u32 %v1312, 7
        %v1314 = vsub.s32 5, %v1313
        %v1315 = vrot.slane %v1222, %v1314
        %v1316 = vmul.f32 %v1306, %v1311
        %v1317 = vmul.f32 %v1306, %v1315
        %v1318 = vadd.f32 %v1302, %v1316
        %v1319 = vadd.f32 %v1303, %v1317
        %1320 = vset.pattern.permute.xlu0 6
        %1321 = vperm.xlu0 %1320, %v268
        %v1322 = vpop.permute.xlu0 %1321
        %v1324 = vlaneseq
        %v1325 = vshrl.u32 %v1324, 7
        %v1326 = vsub.s32 6, %v1325
        %v1327 = vrot.slane %v1221, %v1326
        %v1328 = vlaneseq
        %v1329 = vshrl.u32 %v1328, 7
        %v1330 = vsub.s32 6, %v1329
        %v1331 = vrot.slane %v1222, %v1330
        %v1332 = vmul.f32 %v1322, %v1327
        %v1333 = vmul.f32 %v1322, %v1331
        %v1334 = vadd.f32 %v1318, %v1332
        %v1335 = vadd.f32 %v1319, %v1333
        %1336 = vset.pattern.permute.xlu0 7
        %1337 = vperm.xlu0 %1336, %v268
        %v1338 = vpop.permute.xlu0 %1337
        %v1340 = vlaneseq
        %v1341 = vshrl.u32 %v1340, 7
        %v1342 = vsub.s32 7, %v1341
        %v1343 = vrot.slane %v1221, %v1342
        %v1344 = vlaneseq
        %v1345 = vshrl.u32 %v1344, 7
        %v1346 = vsub.s32 7, %v1345
        %v1347 = vrot.slane %v1222, %v1346
        %v1348 = vmul.f32 %v1338, %v1343
        %v1349 = vmul.f32 %v1338, %v1347
        %v1350 = vadd.f32 %v1334, %v1348
        %v1351 = vadd.f32 %v1335, %v1349
        %1352 = vrot.lane.b32.xlu0 %v1076, 15
        %v1353 = vpop.permute.xlu0 %1352
        %1354 = vrot.lane.b32.xlu0 %v1077, 15
        %v1355 = vpop.permute.xlu0 %1354
        %v1356 = vsel %vm458, %v1353, %v1355
        %v1357 = vsel %vm458, %v1355, %v1353
        %v1358 = vmul.f32 %v1357, %v465
        %v1359 = vmul.f32 %v1356, %v469
        %1361 = vset.pattern.permute.xlu0 0
        %1362 = vperm.xlu0 %1361, %v269
        %v1363 = vpop.permute.xlu0 %1362
        %v1365 = vlaneseq
        %v1366 = vshrl.u32 %v1365, 7
        %v1367 = vsub.s32 0, %v1366
        %v1368 = vrot.slane %v1358, %v1367
        %v1369 = vlaneseq
        %v1370 = vshrl.u32 %v1369, 7
        %v1371 = vsub.s32 0, %v1370
        %v1372 = vrot.slane %v1359, %v1371
        %v1373 = vmul.f32 %v1363, %v1368
        %v1374 = vmul.f32 %v1363, %v1372
        %v1375 = vadd.f32 %v1350, %v1373
        %v1376 = vadd.f32 %v1351, %v1374
        %1377 = vset.pattern.permute.xlu0 1
        %1378 = vperm.xlu0 %1377, %v269
        %v1379 = vpop.permute.xlu0 %1378
        %v1381 = vlaneseq
        %v1382 = vshrl.u32 %v1381, 7
        %v1383 = vsub.s32 1, %v1382
        %v1384 = vrot.slane %v1358, %v1383
        %v1385 = vlaneseq
        %v1386 = vshrl.u32 %v1385, 7
        %v1387 = vsub.s32 1, %v1386
        %v1388 = vrot.slane %v1359, %v1387
        %v1389 = vmul.f32 %v1379, %v1384
        %v1390 = vmul.f32 %v1379, %v1388
        %v1391 = vadd.f32 %v1375, %v1389
        %v1392 = vadd.f32 %v1376, %v1390
        %1393 = vset.pattern.permute.xlu0 2
        %1394 = vperm.xlu0 %1393, %v269
        %v1395 = vpop.permute.xlu0 %1394
        %v1397 = vlaneseq
        %v1398 = vshrl.u32 %v1397, 7
        %v1399 = vsub.s32 2, %v1398
        %v1400 = vrot.slane %v1358, %v1399
        %v1401 = vlaneseq
        %v1402 = vshrl.u32 %v1401, 7
        %v1403 = vsub.s32 2, %v1402
        %v1404 = vrot.slane %v1359, %v1403
        %v1405 = vmul.f32 %v1395, %v1400
        %v1406 = vmul.f32 %v1395, %v1404
        %v1407 = vadd.f32 %v1391, %v1405
        %v1408 = vadd.f32 %v1392, %v1406
        %1409 = vset.pattern.permute.xlu0 3
        %1410 = vperm.xlu0 %1409, %v269
        %v1411 = vpop.permute.xlu0 %1410
        %v1413 = vlaneseq
        %v1414 = vshrl.u32 %v1413, 7
        %v1415 = vsub.s32 3, %v1414
        %v1416 = vrot.slane %v1358, %v1415
        %v1417 = vlaneseq
        %v1418 = vshrl.u32 %v1417, 7
        %v1419 = vsub.s32 3, %v1418
        %v1420 = vrot.slane %v1359, %v1419
        %v1421 = vmul.f32 %v1411, %v1416
        %v1422 = vmul.f32 %v1411, %v1420
        %v1423 = vadd.f32 %v1407, %v1421
        %v1424 = vadd.f32 %v1408, %v1422
        %1425 = vset.pattern.permute.xlu0 4
        %1426 = vperm.xlu0 %1425, %v269
        %v1427 = vpop.permute.xlu0 %1426
        %v1429 = vlaneseq
        %v1430 = vshrl.u32 %v1429, 7
        %v1431 = vsub.s32 4, %v1430
        %v1432 = vrot.slane %v1358, %v1431
        %v1433 = vlaneseq
        %v1434 = vshrl.u32 %v1433, 7
        %v1435 = vsub.s32 4, %v1434
        %v1436 = vrot.slane %v1359, %v1435
        %v1437 = vmul.f32 %v1427, %v1432
        %v1438 = vmul.f32 %v1427, %v1436
        %v1439 = vadd.f32 %v1423, %v1437
        %v1440 = vadd.f32 %v1424, %v1438
        %1441 = vset.pattern.permute.xlu0 5
        %1442 = vperm.xlu0 %1441, %v269
        %v1443 = vpop.permute.xlu0 %1442
        %v1445 = vlaneseq
        %v1446 = vshrl.u32 %v1445, 7
        %v1447 = vsub.s32 5, %v1446
        %v1448 = vrot.slane %v1358, %v1447
        %v1449 = vlaneseq
        %v1450 = vshrl.u32 %v1449, 7
        %v1451 = vsub.s32 5, %v1450
        %v1452 = vrot.slane %v1359, %v1451
        %v1453 = vmul.f32 %v1443, %v1448
        %v1454 = vmul.f32 %v1443, %v1452
        %v1455 = vadd.f32 %v1439, %v1453
        %v1456 = vadd.f32 %v1440, %v1454
        %1457 = vset.pattern.permute.xlu0 6
        %1458 = vperm.xlu0 %1457, %v269
        %v1459 = vpop.permute.xlu0 %1458
        %v1461 = vlaneseq
        %v1462 = vshrl.u32 %v1461, 7
        %v1463 = vsub.s32 6, %v1462
        %v1464 = vrot.slane %v1358, %v1463
        %v1465 = vlaneseq
        %v1466 = vshrl.u32 %v1465, 7
        %v1467 = vsub.s32 6, %v1466
        %v1468 = vrot.slane %v1359, %v1467
        %v1469 = vmul.f32 %v1459, %v1464
        %v1470 = vmul.f32 %v1459, %v1468
        %v1471 = vadd.f32 %v1455, %v1469
        %v1472 = vadd.f32 %v1456, %v1470
        %1473 = vset.pattern.permute.xlu0 7
        %1474 = vperm.xlu0 %1473, %v269
        %v1475 = vpop.permute.xlu0 %1474
        %v1477 = vlaneseq
        %v1478 = vshrl.u32 %v1477, 7
        %v1479 = vsub.s32 7, %v1478
        %v1480 = vrot.slane %v1358, %v1479
        %v1481 = vlaneseq
        %v1482 = vshrl.u32 %v1481, 7
        %v1483 = vsub.s32 7, %v1482
        %v1484 = vrot.slane %v1359, %v1483
        %v1485 = vmul.f32 %v1475, %v1480
        %v1486 = vmul.f32 %v1475, %v1484
        %v1487 = vadd.f32 %v1471, %v1485
        %v1488 = vadd.f32 %v1472, %v1486
        %1489 = vrot.lane.b32.xlu0 %v1076, 1
        %v1490 = vpop.permute.xlu0 %1489
        %1491 = vrot.lane.b32.xlu0 %v1077, 1
        %v1492 = vpop.permute.xlu0 %1491
        %v1493 = vsel %vm543, %v1490, %v1492
        %v1494 = vsel %vm543, %v1492, %v1490
        %v1495 = vmul.f32 %v1494, %v550
        %v1496 = vmul.f32 %v1493, %v554
        %1498 = vset.pattern.permute.xlu0 0
        %1499 = vperm.xlu0 %1498, %v270
        %v1500 = vpop.permute.xlu0 %1499
        %v1502 = vlaneseq
        %v1503 = vshrl.u32 %v1502, 7
        %v1504 = vsub.s32 0, %v1503
        %v1505 = vrot.slane %v1495, %v1504
        %v1506 = vlaneseq
        %v1507 = vshrl.u32 %v1506, 7
        %v1508 = vsub.s32 0, %v1507
        %v1509 = vrot.slane %v1496, %v1508
        %v1510 = vmul.f32 %v1500, %v1505
        %v1511 = vmul.f32 %v1500, %v1509
        %v1512 = vadd.f32 %v1487, %v1510
        %v1513 = vadd.f32 %v1488, %v1511
        %1514 = vset.pattern.permute.xlu0 1
        %1515 = vperm.xlu0 %1514, %v270
        %v1516 = vpop.permute.xlu0 %1515
        %v1518 = vlaneseq
        %v1519 = vshrl.u32 %v1518, 7
        %v1520 = vsub.s32 1, %v1519
        %v1521 = vrot.slane %v1495, %v1520
        %v1522 = vlaneseq
        %v1523 = vshrl.u32 %v1522, 7
        %v1524 = vsub.s32 1, %v1523
        %v1525 = vrot.slane %v1496, %v1524
        %v1526 = vmul.f32 %v1516, %v1521
        %v1527 = vmul.f32 %v1516, %v1525
        %v1528 = vadd.f32 %v1512, %v1526
        %v1529 = vadd.f32 %v1513, %v1527
        %1530 = vset.pattern.permute.xlu0 2
        %1531 = vperm.xlu0 %1530, %v270
        %v1532 = vpop.permute.xlu0 %1531
        %v1534 = vlaneseq
        %v1535 = vshrl.u32 %v1534, 7
        %v1536 = vsub.s32 2, %v1535
        %v1537 = vrot.slane %v1495, %v1536
        %v1538 = vlaneseq
        %v1539 = vshrl.u32 %v1538, 7
        %v1540 = vsub.s32 2, %v1539
        %v1541 = vrot.slane %v1496, %v1540
        %v1542 = vmul.f32 %v1532, %v1537
        %v1543 = vmul.f32 %v1532, %v1541
        %v1544 = vadd.f32 %v1528, %v1542
        %v1545 = vadd.f32 %v1529, %v1543
        %1546 = vset.pattern.permute.xlu0 3
        %1547 = vperm.xlu0 %1546, %v270
        %v1548 = vpop.permute.xlu0 %1547
        %v1550 = vlaneseq
        %v1551 = vshrl.u32 %v1550, 7
        %v1552 = vsub.s32 3, %v1551
        %v1553 = vrot.slane %v1495, %v1552
        %v1554 = vlaneseq
        %v1555 = vshrl.u32 %v1554, 7
        %v1556 = vsub.s32 3, %v1555
        %v1557 = vrot.slane %v1496, %v1556
        %v1558 = vmul.f32 %v1548, %v1553
        %v1559 = vmul.f32 %v1548, %v1557
        %v1560 = vadd.f32 %v1544, %v1558
        %v1561 = vadd.f32 %v1545, %v1559
        %1562 = vset.pattern.permute.xlu0 4
        %1563 = vperm.xlu0 %1562, %v270
        %v1564 = vpop.permute.xlu0 %1563
        %v1566 = vlaneseq
        %v1567 = vshrl.u32 %v1566, 7
        %v1568 = vsub.s32 4, %v1567
        %v1569 = vrot.slane %v1495, %v1568
        %v1570 = vlaneseq
        %v1571 = vshrl.u32 %v1570, 7
        %v1572 = vsub.s32 4, %v1571
        %v1573 = vrot.slane %v1496, %v1572
        %v1574 = vmul.f32 %v1564, %v1569
        %v1575 = vmul.f32 %v1564, %v1573
        %v1576 = vadd.f32 %v1560, %v1574
        %v1577 = vadd.f32 %v1561, %v1575
        %1578 = vset.pattern.permute.xlu0 5
        %1579 = vperm.xlu0 %1578, %v270
        %v1580 = vpop.permute.xlu0 %1579
        %v1582 = vlaneseq
        %v1583 = vshrl.u32 %v1582, 7
        %v1584 = vsub.s32 5, %v1583
        %v1585 = vrot.slane %v1495, %v1584
        %v1586 = vlaneseq
        %v1587 = vshrl.u32 %v1586, 7
        %v1588 = vsub.s32 5, %v1587
        %v1589 = vrot.slane %v1496, %v1588
        %v1590 = vmul.f32 %v1580, %v1585
        %v1591 = vmul.f32 %v1580, %v1589
        %v1592 = vadd.f32 %v1576, %v1590
        %v1593 = vadd.f32 %v1577, %v1591
        %1594 = vset.pattern.permute.xlu0 6
        %1595 = vperm.xlu0 %1594, %v270
        %v1596 = vpop.permute.xlu0 %1595
        %v1598 = vlaneseq
        %v1599 = vshrl.u32 %v1598, 7
        %v1600 = vsub.s32 6, %v1599
        %v1601 = vrot.slane %v1495, %v1600
        %v1602 = vlaneseq
        %v1603 = vshrl.u32 %v1602, 7
        %v1604 = vsub.s32 6, %v1603
        %v1605 = vrot.slane %v1496, %v1604
        %v1606 = vmul.f32 %v1596, %v1601
        %v1607 = vmul.f32 %v1596, %v1605
        %v1608 = vadd.f32 %v1592, %v1606
        %v1609 = vadd.f32 %v1593, %v1607
        %1610 = vset.pattern.permute.xlu0 7
        %1611 = vperm.xlu0 %1610, %v270
        %v1612 = vpop.permute.xlu0 %1611
        %v1614 = vlaneseq
        %v1615 = vshrl.u32 %v1614, 7
        %v1616 = vsub.s32 7, %v1615
        %v1617 = vrot.slane %v1495, %v1616
        %v1618 = vlaneseq
        %v1619 = vshrl.u32 %v1618, 7
        %v1620 = vsub.s32 7, %v1619
        %v1621 = vrot.slane %v1496, %v1620
        %v1622 = vmul.f32 %v1612, %v1617
        %v1623 = vmul.f32 %v1612, %v1621
        %v1624 = vadd.f32 %v1608, %v1622
        %v1625 = vadd.f32 %v1609, %v1623
        %1627 = vset.pattern.permute.xlu0 0
        %1628 = vperm.xlu0 %1627, %v271
        %v1629 = vpop.permute.xlu0 %1628
        %v1631 = vlaneseq
        %v1632 = vshrl.u32 %v1631, 7
        %v1633 = vsub.s32 0, %v1632
        %v1634 = vrot.slane %v1076, %v1633
        %v1635 = vlaneseq
        %v1636 = vshrl.u32 %v1635, 7
        %v1637 = vsub.s32 0, %v1636
        %v1638 = vrot.slane %v1077, %v1637
        %v1639 = vmul.f32 %v1629, %v1634
        %v1640 = vmul.f32 %v1629, %v1638
        %v1641 = vadd.f32 %v1624, %v1639
        %v1642 = vadd.f32 %v1625, %v1640
        %1643 = vset.pattern.permute.xlu0 1
        %1644 = vperm.xlu0 %1643, %v271
        %v1645 = vpop.permute.xlu0 %1644
        %v1647 = vlaneseq
        %v1648 = vshrl.u32 %v1647, 7
        %v1649 = vsub.s32 1, %v1648
        %v1650 = vrot.slane %v1076, %v1649
        %v1651 = vlaneseq
        %v1652 = vshrl.u32 %v1651, 7
        %v1653 = vsub.s32 1, %v1652
        %v1654 = vrot.slane %v1077, %v1653
        %v1655 = vmul.f32 %v1645, %v1650
        %v1656 = vmul.f32 %v1645, %v1654
        %v1657 = vadd.f32 %v1641, %v1655
        %v1658 = vadd.f32 %v1642, %v1656
        %1659 = vset.pattern.permute.xlu0 2
        %1660 = vperm.xlu0 %1659, %v271
        %v1661 = vpop.permute.xlu0 %1660
        %v1663 = vlaneseq
        %v1664 = vshrl.u32 %v1663, 7
        %v1665 = vsub.s32 2, %v1664
        %v1666 = vrot.slane %v1076, %v1665
        %v1667 = vlaneseq
        %v1668 = vshrl.u32 %v1667, 7
        %v1669 = vsub.s32 2, %v1668
        %v1670 = vrot.slane %v1077, %v1669
        %v1671 = vmul.f32 %v1661, %v1666
        %v1672 = vmul.f32 %v1661, %v1670
        %v1673 = vadd.f32 %v1657, %v1671
        %v1674 = vadd.f32 %v1658, %v1672
        %1675 = vset.pattern.permute.xlu0 3
        %1676 = vperm.xlu0 %1675, %v271
        %v1677 = vpop.permute.xlu0 %1676
        %v1679 = vlaneseq
        %v1680 = vshrl.u32 %v1679, 7
        %v1681 = vsub.s32 3, %v1680
        %v1682 = vrot.slane %v1076, %v1681
        %v1683 = vlaneseq
        %v1684 = vshrl.u32 %v1683, 7
        %v1685 = vsub.s32 3, %v1684
        %v1686 = vrot.slane %v1077, %v1685
        %v1687 = vmul.f32 %v1677, %v1682
        %v1688 = vmul.f32 %v1677, %v1686
        %v1689 = vadd.f32 %v1673, %v1687
        %v1690 = vadd.f32 %v1674, %v1688
        %1691 = vset.pattern.permute.xlu0 4
        %1692 = vperm.xlu0 %1691, %v271
        %v1693 = vpop.permute.xlu0 %1692
        %v1695 = vlaneseq
        %v1696 = vshrl.u32 %v1695, 7
        %v1697 = vsub.s32 4, %v1696
        %v1698 = vrot.slane %v1076, %v1697
        %v1699 = vlaneseq
        %v1700 = vshrl.u32 %v1699, 7
        %v1701 = vsub.s32 4, %v1700
        %v1702 = vrot.slane %v1077, %v1701
        %v1703 = vmul.f32 %v1693, %v1698
        %v1704 = vmul.f32 %v1693, %v1702
        %v1705 = vadd.f32 %v1689, %v1703
        %v1706 = vadd.f32 %v1690, %v1704
        %1707 = vset.pattern.permute.xlu0 5
        %1708 = vperm.xlu0 %1707, %v271
        %v1709 = vpop.permute.xlu0 %1708
        %v1711 = vlaneseq
        %v1712 = vshrl.u32 %v1711, 7
        %v1713 = vsub.s32 5, %v1712
        %v1714 = vrot.slane %v1076, %v1713
        %v1715 = vlaneseq
        %v1716 = vshrl.u32 %v1715, 7
        %v1717 = vsub.s32 5, %v1716
        %v1718 = vrot.slane %v1077, %v1717
        %v1719 = vmul.f32 %v1709, %v1714
        %v1720 = vmul.f32 %v1709, %v1718
        %v1721 = vadd.f32 %v1705, %v1719
        %v1722 = vadd.f32 %v1706, %v1720
        %1723 = vset.pattern.permute.xlu0 6
        %1724 = vperm.xlu0 %1723, %v271
        %v1725 = vpop.permute.xlu0 %1724
        %v1727 = vlaneseq
        %v1728 = vshrl.u32 %v1727, 7
        %v1729 = vsub.s32 6, %v1728
        %v1730 = vrot.slane %v1076, %v1729
        %v1731 = vlaneseq
        %v1732 = vshrl.u32 %v1731, 7
        %v1733 = vsub.s32 6, %v1732
        %v1734 = vrot.slane %v1077, %v1733
        %v1735 = vmul.f32 %v1725, %v1730
        %v1736 = vmul.f32 %v1725, %v1734
        %v1737 = vadd.f32 %v1721, %v1735
        %v1738 = vadd.f32 %v1722, %v1736
        %1739 = vset.pattern.permute.xlu0 7
        %1740 = vperm.xlu0 %1739, %v271
        %v1741 = vpop.permute.xlu0 %1740
        %v1743 = vlaneseq
        %v1744 = vshrl.u32 %v1743, 7
        %v1745 = vsub.s32 7, %v1744
        %v1746 = vrot.slane %v1076, %v1745
        %v1747 = vlaneseq
        %v1748 = vshrl.u32 %v1747, 7
        %v1749 = vsub.s32 7, %v1748
        %v1750 = vrot.slane %v1077, %v1749
        %v1751 = vmul.f32 %v1741, %v1746
        %v1752 = vmul.f32 %v1741, %v1750
        %v1753 = vadd.f32 %v1737, %v1751
        %v1754 = vadd.f32 %v1738, %v1752
        %1755 = vrot.lane.b32.xlu0 %v1076, 127
        %v1756 = vpop.permute.xlu0 %1755
        %1757 = vrot.lane.b32.xlu0 %v1077, 127
        %v1758 = vpop.permute.xlu0 %1757
        %v1759 = vsel %vm733, %v1756, %v1758
        %v1760 = vsel %vm733, %v1758, %v1756
        %v1761 = vmul.f32 %v1759, %v740
        %v1762 = vmul.f32 %v1760, %v744
        %1764 = vset.pattern.permute.xlu0 0
        %1765 = vperm.xlu0 %1764, %v272
        %v1766 = vpop.permute.xlu0 %1765
        %v1768 = vlaneseq
        %v1769 = vshrl.u32 %v1768, 7
        %v1770 = vsub.s32 0, %v1769
        %v1771 = vrot.slane %v1761, %v1770
        %v1772 = vlaneseq
        %v1773 = vshrl.u32 %v1772, 7
        %v1774 = vsub.s32 0, %v1773
        %v1775 = vrot.slane %v1762, %v1774
        %v1776 = vmul.f32 %v1766, %v1771
        %v1777 = vmul.f32 %v1766, %v1775
        %v1778 = vadd.f32 %v1753, %v1776
        %v1779 = vadd.f32 %v1754, %v1777
        %1780 = vset.pattern.permute.xlu0 1
        %1781 = vperm.xlu0 %1780, %v272
        %v1782 = vpop.permute.xlu0 %1781
        %v1784 = vlaneseq
        %v1785 = vshrl.u32 %v1784, 7
        %v1786 = vsub.s32 1, %v1785
        %v1787 = vrot.slane %v1761, %v1786
        %v1788 = vlaneseq
        %v1789 = vshrl.u32 %v1788, 7
        %v1790 = vsub.s32 1, %v1789
        %v1791 = vrot.slane %v1762, %v1790
        %v1792 = vmul.f32 %v1782, %v1787
        %v1793 = vmul.f32 %v1782, %v1791
        %v1794 = vadd.f32 %v1778, %v1792
        %v1795 = vadd.f32 %v1779, %v1793
        %1796 = vset.pattern.permute.xlu0 2
        %1797 = vperm.xlu0 %1796, %v272
        %v1798 = vpop.permute.xlu0 %1797
        %v1800 = vlaneseq
        %v1801 = vshrl.u32 %v1800, 7
        %v1802 = vsub.s32 2, %v1801
        %v1803 = vrot.slane %v1761, %v1802
        %v1804 = vlaneseq
        %v1805 = vshrl.u32 %v1804, 7
        %v1806 = vsub.s32 2, %v1805
        %v1807 = vrot.slane %v1762, %v1806
        %v1808 = vmul.f32 %v1798, %v1803
        %v1809 = vmul.f32 %v1798, %v1807
        %v1810 = vadd.f32 %v1794, %v1808
        %v1811 = vadd.f32 %v1795, %v1809
        %1812 = vset.pattern.permute.xlu0 3
        %1813 = vperm.xlu0 %1812, %v272
        %v1814 = vpop.permute.xlu0 %1813
        %v1816 = vlaneseq
        %v1817 = vshrl.u32 %v1816, 7
        %v1818 = vsub.s32 3, %v1817
        %v1819 = vrot.slane %v1761, %v1818
        %v1820 = vlaneseq
        %v1821 = vshrl.u32 %v1820, 7
        %v1822 = vsub.s32 3, %v1821
        %v1823 = vrot.slane %v1762, %v1822
        %v1824 = vmul.f32 %v1814, %v1819
        %v1825 = vmul.f32 %v1814, %v1823
        %v1826 = vadd.f32 %v1810, %v1824
        %v1827 = vadd.f32 %v1811, %v1825
        %1828 = vset.pattern.permute.xlu0 4
        %1829 = vperm.xlu0 %1828, %v272
        %v1830 = vpop.permute.xlu0 %1829
        %v1832 = vlaneseq
        %v1833 = vshrl.u32 %v1832, 7
        %v1834 = vsub.s32 4, %v1833
        %v1835 = vrot.slane %v1761, %v1834
        %v1836 = vlaneseq
        %v1837 = vshrl.u32 %v1836, 7
        %v1838 = vsub.s32 4, %v1837
        %v1839 = vrot.slane %v1762, %v1838
        %v1840 = vmul.f32 %v1830, %v1835
        %v1841 = vmul.f32 %v1830, %v1839
        %v1842 = vadd.f32 %v1826, %v1840
        %v1843 = vadd.f32 %v1827, %v1841
        %1844 = vset.pattern.permute.xlu0 5
        %1845 = vperm.xlu0 %1844, %v272
        %v1846 = vpop.permute.xlu0 %1845
        %v1848 = vlaneseq
        %v1849 = vshrl.u32 %v1848, 7
        %v1850 = vsub.s32 5, %v1849
        %v1851 = vrot.slane %v1761, %v1850
        %v1852 = vlaneseq
        %v1853 = vshrl.u32 %v1852, 7
        %v1854 = vsub.s32 5, %v1853
        %v1855 = vrot.slane %v1762, %v1854
        %v1856 = vmul.f32 %v1846, %v1851
        %v1857 = vmul.f32 %v1846, %v1855
        %v1858 = vadd.f32 %v1842, %v1856
        %v1859 = vadd.f32 %v1843, %v1857
        %1860 = vset.pattern.permute.xlu0 6
        %1861 = vperm.xlu0 %1860, %v272
        %v1862 = vpop.permute.xlu0 %1861
        %v1864 = vlaneseq
        %v1865 = vshrl.u32 %v1864, 7
        %v1866 = vsub.s32 6, %v1865
        %v1867 = vrot.slane %v1761, %v1866
        %v1868 = vlaneseq
        %v1869 = vshrl.u32 %v1868, 7
        %v1870 = vsub.s32 6, %v1869
        %v1871 = vrot.slane %v1762, %v1870
        %v1872 = vmul.f32 %v1862, %v1867
        %v1873 = vmul.f32 %v1862, %v1871
        %v1874 = vadd.f32 %v1858, %v1872
        %v1875 = vadd.f32 %v1859, %v1873
        %1876 = vset.pattern.permute.xlu0 7
        %1877 = vperm.xlu0 %1876, %v272
        %v1878 = vpop.permute.xlu0 %1877
        %v1880 = vlaneseq
        %v1881 = vshrl.u32 %v1880, 7
        %v1882 = vsub.s32 7, %v1881
        %v1883 = vrot.slane %v1761, %v1882
        %v1884 = vlaneseq
        %v1885 = vshrl.u32 %v1884, 7
        %v1886 = vsub.s32 7, %v1885
        %v1887 = vrot.slane %v1762, %v1886
        %v1888 = vmul.f32 %v1878, %v1883
        %v1889 = vmul.f32 %v1878, %v1887
        %v1890 = vadd.f32 %v1874, %v1888
        %v1891 = vadd.f32 %v1875, %v1889
        %1892 = vrot.lane.b32.xlu0 %v1076, 113
        %v1893 = vpop.permute.xlu0 %1892
        %1894 = vrot.lane.b32.xlu0 %v1077, 113
        %v1895 = vpop.permute.xlu0 %1894
        %v1896 = vsel %vm818, %v1893, %v1895
        %v1897 = vsel %vm818, %v1895, %v1893
        %v1898 = vmul.f32 %v1896, %v825
        %v1899 = vmul.f32 %v1897, %v829
        %1901 = vset.pattern.permute.xlu0 0
        %1902 = vperm.xlu0 %1901, %v273
        %v1903 = vpop.permute.xlu0 %1902
        %v1905 = vlaneseq
        %v1906 = vshrl.u32 %v1905, 7
        %v1907 = vsub.s32 0, %v1906
        %v1908 = vrot.slane %v1898, %v1907
        %v1909 = vlaneseq
        %v1910 = vshrl.u32 %v1909, 7
        %v1911 = vsub.s32 0, %v1910
        %v1912 = vrot.slane %v1899, %v1911
        %v1913 = vmul.f32 %v1903, %v1908
        %v1914 = vmul.f32 %v1903, %v1912
        %v1915 = vadd.f32 %v1890, %v1913
        %v1916 = vadd.f32 %v1891, %v1914
        %1917 = vset.pattern.permute.xlu0 1
        %1918 = vperm.xlu0 %1917, %v273
        %v1919 = vpop.permute.xlu0 %1918
        %v1921 = vlaneseq
        %v1922 = vshrl.u32 %v1921, 7
        %v1923 = vsub.s32 1, %v1922
        %v1924 = vrot.slane %v1898, %v1923
        %v1925 = vlaneseq
        %v1926 = vshrl.u32 %v1925, 7
        %v1927 = vsub.s32 1, %v1926
        %v1928 = vrot.slane %v1899, %v1927
        %v1929 = vmul.f32 %v1919, %v1924
        %v1930 = vmul.f32 %v1919, %v1928
        %v1931 = vadd.f32 %v1915, %v1929
        %v1932 = vadd.f32 %v1916, %v1930
        %1933 = vset.pattern.permute.xlu0 2
        %1934 = vperm.xlu0 %1933, %v273
        %v1935 = vpop.permute.xlu0 %1934
        %v1937 = vlaneseq
        %v1938 = vshrl.u32 %v1937, 7
        %v1939 = vsub.s32 2, %v1938
        %v1940 = vrot.slane %v1898, %v1939
        %v1941 = vlaneseq
        %v1942 = vshrl.u32 %v1941, 7
        %v1943 = vsub.s32 2, %v1942
        %v1944 = vrot.slane %v1899, %v1943
        %v1945 = vmul.f32 %v1935, %v1940
        %v1946 = vmul.f32 %v1935, %v1944
        %v1947 = vadd.f32 %v1931, %v1945
        %v1948 = vadd.f32 %v1932, %v1946
        %1949 = vset.pattern.permute.xlu0 3
        %1950 = vperm.xlu0 %1949, %v273
        %v1951 = vpop.permute.xlu0 %1950
        %v1953 = vlaneseq
        %v1954 = vshrl.u32 %v1953, 7
        %v1955 = vsub.s32 3, %v1954
        %v1956 = vrot.slane %v1898, %v1955
        %v1957 = vlaneseq
        %v1958 = vshrl.u32 %v1957, 7
        %v1959 = vsub.s32 3, %v1958
        %v1960 = vrot.slane %v1899, %v1959
        %v1961 = vmul.f32 %v1951, %v1956
        %v1962 = vmul.f32 %v1951, %v1960
        %v1963 = vadd.f32 %v1947, %v1961
        %v1964 = vadd.f32 %v1948, %v1962
        %1965 = vset.pattern.permute.xlu0 4
        %1966 = vperm.xlu0 %1965, %v273
        %v1967 = vpop.permute.xlu0 %1966
        %v1969 = vlaneseq
        %v1970 = vshrl.u32 %v1969, 7
        %v1971 = vsub.s32 4, %v1970
        %v1972 = vrot.slane %v1898, %v1971
        %v1973 = vlaneseq
        %v1974 = vshrl.u32 %v1973, 7
        %v1975 = vsub.s32 4, %v1974
        %v1976 = vrot.slane %v1899, %v1975
        %v1977 = vmul.f32 %v1967, %v1972
        %v1978 = vmul.f32 %v1967, %v1976
        %v1979 = vadd.f32 %v1963, %v1977
        %v1980 = vadd.f32 %v1964, %v1978
        %1981 = vset.pattern.permute.xlu0 5
        %1982 = vperm.xlu0 %1981, %v273
        %v1983 = vpop.permute.xlu0 %1982
        %v1985 = vlaneseq
        %v1986 = vshrl.u32 %v1985, 7
        %v1987 = vsub.s32 5, %v1986
        %v1988 = vrot.slane %v1898, %v1987
        %v1989 = vlaneseq
        %v1990 = vshrl.u32 %v1989, 7
        %v1991 = vsub.s32 5, %v1990
        %v1992 = vrot.slane %v1899, %v1991
        %v1993 = vmul.f32 %v1983, %v1988
        %v1994 = vmul.f32 %v1983, %v1992
        %v1995 = vadd.f32 %v1979, %v1993
        %v1996 = vadd.f32 %v1980, %v1994
        %1997 = vset.pattern.permute.xlu0 6
        %1998 = vperm.xlu0 %1997, %v273
        %v1999 = vpop.permute.xlu0 %1998
        %v2001 = vlaneseq
        %v2002 = vshrl.u32 %v2001, 7
        %v2003 = vsub.s32 6, %v2002
        %v2004 = vrot.slane %v1898, %v2003
        %v2005 = vlaneseq
        %v2006 = vshrl.u32 %v2005, 7
        %v2007 = vsub.s32 6, %v2006
        %v2008 = vrot.slane %v1899, %v2007
        %v2009 = vmul.f32 %v1999, %v2004
        %v2010 = vmul.f32 %v1999, %v2008
        %v2011 = vadd.f32 %v1995, %v2009
        %v2012 = vadd.f32 %v1996, %v2010
        %2013 = vset.pattern.permute.xlu0 7
        %2014 = vperm.xlu0 %2013, %v273
        %v2015 = vpop.permute.xlu0 %2014
        %v2017 = vlaneseq
        %v2018 = vshrl.u32 %v2017, 7
        %v2019 = vsub.s32 7, %v2018
        %v2020 = vrot.slane %v1898, %v2019
        %v2021 = vlaneseq
        %v2022 = vshrl.u32 %v2021, 7
        %v2023 = vsub.s32 7, %v2022
        %v2024 = vrot.slane %v1899, %v2023
        %v2025 = vmul.f32 %v2015, %v2020
        %v2026 = vmul.f32 %v2015, %v2024
        %v2027 = vadd.f32 %v2011, %v2025
        %v2028 = vadd.f32 %v2012, %v2026
        %2029 = vrot.lane.b32.xlu0 %v1076, 112
        %v2030 = vpop.permute.xlu0 %2029
        %2031 = vrot.lane.b32.xlu0 %v1077, 112
        %v2032 = vpop.permute.xlu0 %2031
        %v2033 = vsel %vm903, %v2030, %v2032
        %v2034 = vsel %vm903, %v2032, %v2030
        %v2035 = vmul.f32 %v2033, %v910
        %v2036 = vmul.f32 %v2034, %v914
        %2038 = vset.pattern.permute.xlu0 0
        %2039 = vperm.xlu0 %2038, %v274
        %v2040 = vpop.permute.xlu0 %2039
        %v2042 = vlaneseq
        %v2043 = vshrl.u32 %v2042, 7
        %v2044 = vsub.s32 0, %v2043
        %v2045 = vrot.slane %v2035, %v2044
        %v2046 = vlaneseq
        %v2047 = vshrl.u32 %v2046, 7
        %v2048 = vsub.s32 0, %v2047
        %v2049 = vrot.slane %v2036, %v2048
        %v2050 = vmul.f32 %v2040, %v2045
        %v2051 = vmul.f32 %v2040, %v2049
        %v2052 = vadd.f32 %v2027, %v2050
        %v2053 = vadd.f32 %v2028, %v2051
        %2054 = vset.pattern.permute.xlu0 1
        %2055 = vperm.xlu0 %2054, %v274
        %v2056 = vpop.permute.xlu0 %2055
        %v2058 = vlaneseq
        %v2059 = vshrl.u32 %v2058, 7
        %v2060 = vsub.s32 1, %v2059
        %v2061 = vrot.slane %v2035, %v2060
        %v2062 = vlaneseq
        %v2063 = vshrl.u32 %v2062, 7
        %v2064 = vsub.s32 1, %v2063
        %v2065 = vrot.slane %v2036, %v2064
        %v2066 = vmul.f32 %v2056, %v2061
        %v2067 = vmul.f32 %v2056, %v2065
        %v2068 = vadd.f32 %v2052, %v2066
        %v2069 = vadd.f32 %v2053, %v2067
        %2070 = vset.pattern.permute.xlu0 2
        %2071 = vperm.xlu0 %2070, %v274
        %v2072 = vpop.permute.xlu0 %2071
        %v2074 = vlaneseq
        %v2075 = vshrl.u32 %v2074, 7
        %v2076 = vsub.s32 2, %v2075
        %v2077 = vrot.slane %v2035, %v2076
        %v2078 = vlaneseq
        %v2079 = vshrl.u32 %v2078, 7
        %v2080 = vsub.s32 2, %v2079
        %v2081 = vrot.slane %v2036, %v2080
        %v2082 = vmul.f32 %v2072, %v2077
        %v2083 = vmul.f32 %v2072, %v2081
        %v2084 = vadd.f32 %v2068, %v2082
        %v2085 = vadd.f32 %v2069, %v2083
        %2086 = vset.pattern.permute.xlu0 3
        %2087 = vperm.xlu0 %2086, %v274
        %v2088 = vpop.permute.xlu0 %2087
        %v2090 = vlaneseq
        %v2091 = vshrl.u32 %v2090, 7
        %v2092 = vsub.s32 3, %v2091
        %v2093 = vrot.slane %v2035, %v2092
        %v2094 = vlaneseq
        %v2095 = vshrl.u32 %v2094, 7
        %v2096 = vsub.s32 3, %v2095
        %v2097 = vrot.slane %v2036, %v2096
        %v2098 = vmul.f32 %v2088, %v2093
        %v2099 = vmul.f32 %v2088, %v2097
        %v2100 = vadd.f32 %v2084, %v2098
        %v2101 = vadd.f32 %v2085, %v2099
        %2102 = vset.pattern.permute.xlu0 4
        %2103 = vperm.xlu0 %2102, %v274
        %v2104 = vpop.permute.xlu0 %2103
        %v2106 = vlaneseq
        %v2107 = vshrl.u32 %v2106, 7
        %v2108 = vsub.s32 4, %v2107
        %v2109 = vrot.slane %v2035, %v2108
        %v2110 = vlaneseq
        %v2111 = vshrl.u32 %v2110, 7
        %v2112 = vsub.s32 4, %v2111
        %v2113 = vrot.slane %v2036, %v2112
        %v2114 = vmul.f32 %v2104, %v2109
        %v2115 = vmul.f32 %v2104, %v2113
        %v2116 = vadd.f32 %v2100, %v2114
        %v2117 = vadd.f32 %v2101, %v2115
        %2118 = vset.pattern.permute.xlu0 5
        %2119 = vperm.xlu0 %2118, %v274
        %v2120 = vpop.permute.xlu0 %2119
        %v2122 = vlaneseq
        %v2123 = vshrl.u32 %v2122, 7
        %v2124 = vsub.s32 5, %v2123
        %v2125 = vrot.slane %v2035, %v2124
        %v2126 = vlaneseq
        %v2127 = vshrl.u32 %v2126, 7
        %v2128 = vsub.s32 5, %v2127
        %v2129 = vrot.slane %v2036, %v2128
        %v2130 = vmul.f32 %v2120, %v2125
        %v2131 = vmul.f32 %v2120, %v2129
        %v2132 = vadd.f32 %v2116, %v2130
        %v2133 = vadd.f32 %v2117, %v2131
        %2134 = vset.pattern.permute.xlu0 6
        %2135 = vperm.xlu0 %2134, %v274
        %v2136 = vpop.permute.xlu0 %2135
        %v2138 = vlaneseq
        %v2139 = vshrl.u32 %v2138, 7
        %v2140 = vsub.s32 6, %v2139
        %v2141 = vrot.slane %v2035, %v2140
        %v2142 = vlaneseq
        %v2143 = vshrl.u32 %v2142, 7
        %v2144 = vsub.s32 6, %v2143
        %v2145 = vrot.slane %v2036, %v2144
        %v2146 = vmul.f32 %v2136, %v2141
        %v2147 = vmul.f32 %v2136, %v2145
        %v2148 = vadd.f32 %v2132, %v2146
        %v2149 = vadd.f32 %v2133, %v2147
        %2150 = vset.pattern.permute.xlu0 7
        %2151 = vperm.xlu0 %2150, %v274
        %v2152 = vpop.permute.xlu0 %2151
        %v2154 = vlaneseq
        %v2155 = vshrl.u32 %v2154, 7
        %v2156 = vsub.s32 7, %v2155
        %v2157 = vrot.slane %v2035, %v2156
        %v2158 = vlaneseq
        %v2159 = vshrl.u32 %v2158, 7
        %v2160 = vsub.s32 7, %v2159
        %v2161 = vrot.slane %v2036, %v2160
        %v2162 = vmul.f32 %v2152, %v2157
        %v2163 = vmul.f32 %v2152, %v2161
        %v2164 = vadd.f32 %v2148, %v2162
        %v2165 = vadd.f32 %v2149, %v2163
        %2166 = vrot.lane.b32.xlu0 %v1076, 111
        %v2167 = vpop.permute.xlu0 %2166
        %2168 = vrot.lane.b32.xlu0 %v1077, 111
        %v2169 = vpop.permute.xlu0 %2168
        %v2170 = vsel %vm988, %v2167, %v2169
        %v2171 = vsel %vm988, %v2169, %v2167
        %v2172 = vmul.f32 %v2170, %v995
        %v2173 = vmul.f32 %v2171, %v999
        %2175 = vset.pattern.permute.xlu0 0
        %2176 = vperm.xlu0 %2175, %v275
        %v2177 = vpop.permute.xlu0 %2176
        %v2179 = vlaneseq
        %v2180 = vshrl.u32 %v2179, 7
        %v2181 = vsub.s32 0, %v2180
        %v2182 = vrot.slane %v2172, %v2181
        %v2183 = vlaneseq
        %v2184 = vshrl.u32 %v2183, 7
        %v2185 = vsub.s32 0, %v2184
        %v2186 = vrot.slane %v2173, %v2185
        %v2187 = vmul.f32 %v2177, %v2182
        %v2188 = vmul.f32 %v2177, %v2186
        %v2189 = vadd.f32 %v2164, %v2187
        %v2190 = vadd.f32 %v2165, %v2188
        %2191 = vset.pattern.permute.xlu0 1
        %2192 = vperm.xlu0 %2191, %v275
        %v2193 = vpop.permute.xlu0 %2192
        %v2195 = vlaneseq
        %v2196 = vshrl.u32 %v2195, 7
        %v2197 = vsub.s32 1, %v2196
        %v2198 = vrot.slane %v2172, %v2197
        %v2199 = vlaneseq
        %v2200 = vshrl.u32 %v2199, 7
        %v2201 = vsub.s32 1, %v2200
        %v2202 = vrot.slane %v2173, %v2201
        %v2203 = vmul.f32 %v2193, %v2198
        %v2204 = vmul.f32 %v2193, %v2202
        %v2205 = vadd.f32 %v2189, %v2203
        %v2206 = vadd.f32 %v2190, %v2204
        %2207 = vset.pattern.permute.xlu0 2
        %2208 = vperm.xlu0 %2207, %v275
        %v2209 = vpop.permute.xlu0 %2208
        %v2211 = vlaneseq
        %v2212 = vshrl.u32 %v2211, 7
        %v2213 = vsub.s32 2, %v2212
        %v2214 = vrot.slane %v2172, %v2213
        %v2215 = vlaneseq
        %v2216 = vshrl.u32 %v2215, 7
        %v2217 = vsub.s32 2, %v2216
        %v2218 = vrot.slane %v2173, %v2217
        %v2219 = vmul.f32 %v2209, %v2214
        %v2220 = vmul.f32 %v2209, %v2218
        %v2221 = vadd.f32 %v2205, %v2219
        %v2222 = vadd.f32 %v2206, %v2220
        %2223 = vset.pattern.permute.xlu0 3
        %2224 = vperm.xlu0 %2223, %v275
        %v2225 = vpop.permute.xlu0 %2224
        %v2227 = vlaneseq
        %v2228 = vshrl.u32 %v2227, 7
        %v2229 = vsub.s32 3, %v2228
        %v2230 = vrot.slane %v2172, %v2229
        %v2231 = vlaneseq
        %v2232 = vshrl.u32 %v2231, 7
        %v2233 = vsub.s32 3, %v2232
        %v2234 = vrot.slane %v2173, %v2233
        %v2235 = vmul.f32 %v2225, %v2230
        %v2236 = vmul.f32 %v2225, %v2234
        %v2237 = vadd.f32 %v2221, %v2235
        %v2238 = vadd.f32 %v2222, %v2236
        %2239 = vset.pattern.permute.xlu0 4
        %2240 = vperm.xlu0 %2239, %v275
        %v2241 = vpop.permute.xlu0 %2240
        %v2243 = vlaneseq
        %v2244 = vshrl.u32 %v2243, 7
        %v2245 = vsub.s32 4, %v2244
        %v2246 = vrot.slane %v2172, %v2245
        %v2247 = vlaneseq
        %v2248 = vshrl.u32 %v2247, 7
        %v2249 = vsub.s32 4, %v2248
        %v2250 = vrot.slane %v2173, %v2249
        %v2251 = vmul.f32 %v2241, %v2246
        %v2252 = vmul.f32 %v2241, %v2250
        %v2253 = vadd.f32 %v2237, %v2251
        %v2254 = vadd.f32 %v2238, %v2252
        %2255 = vset.pattern.permute.xlu0 5
        %2256 = vperm.xlu0 %2255, %v275
        %v2257 = vpop.permute.xlu0 %2256
        %v2259 = vlaneseq
        %v2260 = vshrl.u32 %v2259, 7
        %v2261 = vsub.s32 5, %v2260
        %v2262 = vrot.slane %v2172, %v2261
        %v2263 = vlaneseq
        %v2264 = vshrl.u32 %v2263, 7
        %v2265 = vsub.s32 5, %v2264
        %v2266 = vrot.slane %v2173, %v2265
        %v2267 = vmul.f32 %v2257, %v2262
        %v2268 = vmul.f32 %v2257, %v2266
        %v2269 = vadd.f32 %v2253, %v2267
        %v2270 = vadd.f32 %v2254, %v2268
        %2271 = vset.pattern.permute.xlu0 6
        %2272 = vperm.xlu0 %2271, %v275
        %v2273 = vpop.permute.xlu0 %2272
        %v2275 = vlaneseq
        %v2276 = vshrl.u32 %v2275, 7
        %v2277 = vsub.s32 6, %v2276
        %v2278 = vrot.slane %v2172, %v2277
        %v2279 = vlaneseq
        %v2280 = vshrl.u32 %v2279, 7
        %v2281 = vsub.s32 6, %v2280
        %v2282 = vrot.slane %v2173, %v2281
        %v2283 = vmul.f32 %v2273, %v2278
        %v2284 = vmul.f32 %v2273, %v2282
        %v2285 = vadd.f32 %v2269, %v2283
        %v2286 = vadd.f32 %v2270, %v2284
        %2287 = vset.pattern.permute.xlu0 7
        %2288 = vperm.xlu0 %2287, %v275
        %v2289 = vpop.permute.xlu0 %2288
        %v2291 = vlaneseq
        %v2292 = vshrl.u32 %v2291, 7
        %v2293 = vsub.s32 7, %v2292
        %v2294 = vrot.slane %v2172, %v2293
        %v2295 = vlaneseq
        %v2296 = vshrl.u32 %v2295, 7
        %v2297 = vsub.s32 7, %v2296
        %v2298 = vrot.slane %v2173, %v2297
        %v2299 = vmul.f32 %v2289, %v2294
        %v2300 = vmul.f32 %v2289, %v2298
        %v2301 = vadd.f32 %v2285, %v2299
        %v2302 = vadd.f32 %v2286, %v2300
        %2304 = vset.pattern.permute.xlu0 0
        %2305 = vperm.xlu0 %2304, %v277
        %v2306 = vpop.permute.xlu0 %2305
        %v2308 = vadd.f32 %v2301, %v2306
        %v2309 = vadd.f32 %v2302, %v2306
        %v2310 = vmax.f32 %v2308, 0.0
        %v2311 = vmax.f32 %v2309, 0.0
        %2312 = vst [vmem:[%s244] sm:$0xff] %v2310
        %2313 = vst [vmem:[%s244 + $0x8] sm:$0xff] %v2311
        %s2314 = sand.u32 %s159, 1
        %s2315 = scalar_lea.sflag [#allocation3], %s2314
        %s2316 = sand.u32 %s159, 1
        %s2317 = smul.addr %s2316, 16
        %s2318 = scalar_lea.vmem [#allocation2], %s2317
        // Predicated region
        $region45: #{tpu_custom_call.1} parent=43 // pred_check
          %p2319 = pneg %p169
        $region46: #{tpu_custom_call.1} parent=43 // pred_check_branch
          %2321 = sbr.rel (%p2319) target = $region48
        $region47: #{tpu_custom_call.1} parent=43 // pred_region
          %s2323 = ssub.s32 256, 256
          %2324 = vsyncadd %s2315, %s2323
          %s2325 = smul.addr %s20, 2
          %s2326 = smul.addr %s2325, 128
          %s2327 = scalar_lea.hbm %s6, %s2326
          %s2329 = sshll.u32 %s2318, 4
          %s2330 = int_to_ptr.vmem [resolvable:$true] %s2329
          %2332 = dma.vmem_to_hbm [thread:$0]  %s2330, 256, %s2327, %s2315
        $region48: #{tpu_custom_call.1} parent=43 // pred_fallthru
          _
      $region44: #{tpu_custom_call.1} parent=5 // pred_fallthru
        _
      %p2333 = scmp.le.s32.totalorder 2, %s15
      // Predicated region
      $region49: #{tpu_custom_call.1} parent=5 // pred_check
        %p2334 = pneg %p2333
      $region50: #{tpu_custom_call.1} parent=5 // pred_check_branch
        %2336 = sbr.rel (%p2334) target = $region52
      $region51: #{tpu_custom_call.1} parent=5 // pred_region
        %s2337 = ssub.s32 %s15, 2
        // Predicated region
        $region53: #{tpu_custom_call.1} parent=51 // pred_check
          %p2338 = pneg %p175
        $region54: #{tpu_custom_call.1} parent=51 // pred_check_branch
          %2340 = sbr.rel (%p2338) target = $region56
        $region55: #{tpu_custom_call.1} parent=51 // pred_region
          %s2341 = sand.u32 %s160, 1
          %s2342 = scalar_lea.sflag [#allocation3], %s2341
          %s2343 = sand.u32 %s160, 1
          %s2344 = smul.addr %s2343, 16
          %s2345 = scalar_lea.vmem [#allocation2], %s2344
          %2346 = dma.done %s2342, 256
        $region56: #{tpu_custom_call.1} parent=51 // pred_fallthru
          _
      $region52: #{tpu_custom_call.1} parent=5 // pred_fallthru
        _
    $region6: #{tpu_custom_call.1} parent=1 // loop_footer
      %s19 = sadd.s32 1, %s15
    $region7: #{tpu_custom_call.1} parent=1 // loop_footer_branch
      %14 = sbr.rel target = $region3
    $region8: #{tpu_custom_call.1} parent=1 // loop_exit
      _
    %2347 = vsyncpa [#allocation3], 1
    %s2348 = scalar_lea.sflag [#allocation3], 1
    %2349 = vsyncpa %s2348, 1

</llo_original>
